<compile_context>
chip_gen: v7x
topology: tpu7x:2x2x1
jax: 0.10.0
libtpu: 0.0.40
codegen_flags: <defaults>
</compile_context>

<pallas_src>
import functools

import jax
import jax.numpy as jnp
from jax.experimental import pallas as pl
from jax.experimental.pallas import tpu as pltpu


def _round_up(n, m):
    return ((n + m - 1) // m) * m


def _encoder_kernel(x_ref, w_ref, b_ref, o_ref, *, H, W, Cin, tile_b):
    """One batch tile per grid step.

    x_ref: (2, 2, tile_b, H//2+1, W//2+1, Cin) bf16  phase-split padded input
           x_ref[p, q, b, a, c, :] == x_padded[b, 2a+p, 2c+q, :]
    w_ref: (9, Cin, Cpad) bf16   conv taps (dy,dx major), Cout zero-padded
    b_ref: (1, Cpad)      f32    bias, zero-padded
    o_ref: (tile_b*(H//2)*(W//2), Cpad) f32  pooled output rows (b, hh, ww)
    """
    Hh, Wh = H // 2, W // 2
    Mq = tile_b * Hh * Wh                     # rows per pooling quadrant

    x = x_ref[...]                            # (2,2,tile_b,Hh+1,Wh+1,Cin) bf16

    # Conv = sum over 9 taps of a (4*Mq, Cin) @ (Cin, Cpad) MXU matmul with
    # f32 accumulation.  LHS rows are ordered (quadrant, b, hh, ww): the four
    # 2x2-pool quadrants are stacked along the leading axis so the max-pool
    # epilogue is a plain elementwise max of four row slabs (no strided ops).
    acc = None
    for dy in range(3):
        for dx in range(3):
            pieces = []
            for i in range(2):                # pool quadrant row phase
                for j in range(2):            # pool quadrant col phase
                    s, t = i + dy, j + dx     # padded row/col = 2*hh+s, 2*ww+t
                    pieces.append(
                        x[s % 2, t % 2, :,
                          s // 2:s // 2 + Hh,
                          t // 2:t // 2 + Wh, :])
            lhs = jnp.stack(pieces, axis=0).reshape(4 * Mq, Cin)
            part = jnp.dot(lhs, w_ref[dy * 3 + dx],
                           preferred_element_type=jnp.float32)
            acc = part if acc is None else acc + part

    # bias + ReLU (pre-pool), f32 on the VPU.  Zero-padded Cout lanes stay 0.
    acc = jnp.maximum(acc + b_ref[...], 0.0)

    # 2x2 / stride-2 max pool == elementwise max of the four quadrant slabs.
    pooled = jnp.maximum(
        jnp.maximum(acc[0 * Mq:1 * Mq], acc[1 * Mq:2 * Mq]),
        jnp.maximum(acc[2 * Mq:3 * Mq], acc[3 * Mq:4 * Mq]))
    o_ref[...] = pooled.astype(o_ref.dtype)


def _per_batch_vmem_bytes(H, W, Cin, Cpad):
    """Generous, layout-padded per-batch VMEM footprint estimate."""
    Hh, Wh = H // 2, W // 2
    x_blk = 2 * 2 * (Hh + 1) * _round_up(Wh + 1, 16) * _round_up(Cin, 128) * 2
    lhs = 4 * _round_up(Hh * Wh, 16) * _round_up(Cin, 128) * 2
    acc = 4 * Hh * Wh * Cpad * 4
    out_blk = Hh * Wh * Cpad * 4
    # x / out blocks are double-buffered by the pipeline.
    return 2 * (x_blk + out_blk) + lhs + acc


def _pick_tile_batch(B, per_batch_bytes, budget_bytes=12 << 20):
    """>= 2 grid steps when B >= 2 (v7x has 2 TCs), largest tile under budget."""
    cap = B if B < 2 else max(1, B // 2)
    fit = max(1, int(budget_bytes // max(per_batch_bytes, 1)))
    return max(1, min(cap, fit))


@jax.jit
def modality_encoder(x_nchw, weight, bias):
    """Forward pass of ModalityEncoder.

    x_nchw: (B, Cin, H, W) f32; weight: (Cout, Cin, 3, 3) f32; bias: (Cout,) f32
    returns: (B, Cout, H//2, W//2) f32
    """
    B, Cin, H, W = x_nchw.shape
    Cout = weight.shape[0]
    assert H % 2 == 0 and W % 2 == 0, "spatial dims must be even for 2x2 pool"
    Hh, Wh = H // 2, W // 2
    # Lane padding: 128 is native everywhere; round big Cout to 256 multiples
    # for the 2x256^2 MXUs on v6e/v7x.
    Cpad = 128 if Cout <= 128 else _round_up(Cout, 256)

    per_batch = _per_batch_vmem_bytes(H, W, Cin, Cpad)
    tb = _pick_tile_batch(B, per_batch)
    Bp = _round_up(B, tb)
    grid = (Bp // tb,)
    if (tb * Hh * Wh) % 8 != 0 and grid[0] > 1:
        # keep the output block sublane-aligned or make it the full array
        tb, Bp, grid = B, B, (1,)

    # ---- wrapper prep: compact (~1.27x input bytes) bf16 phase tensor ----
    x = jnp.transpose(x_nchw, (0, 2, 3, 1))                    # NHWC
    x = jnp.pad(x, ((0, Bp - B), (1, 1), (1, 1), (0, 0)))      # conv pad=1 + batch pad
    # xph[p, q, b, a, c, :] = x_padded[b, 2a+p, 2c+q, :]
    xph = x.reshape(Bp, Hh + 1, 2, Wh + 1, 2, Cin)
    xph = jnp.transpose(xph, (2, 4, 0, 1, 3, 5)).astype(jnp.bfloat16)

    # weight OIHW -> (dy, dx, cin, cout) -> (9, Cin, Cpad) bf16; bias f32
    w = jnp.transpose(weight, (2, 3, 1, 0)).reshape(9, Cin, Cout)
    w = jnp.pad(w, ((0, 0), (0, 0), (0, Cpad - Cout))).astype(jnp.bfloat16)
    b = jnp.pad(bias, (0, Cpad - Cout)).reshape(1, Cpad).astype(jnp.float32)

    # VMEM limit (generous estimate incl. double buffers) and advisory cost.
    w_bytes = 2 * 9 * _round_up(Cin, 16) * Cpad * 2 + 2 * 8 * Cpad * 4
    needed = tb * per_batch + w_bytes
    vmem_limit = int(min(max(2 * needed + (4 << 20), 32 << 20), 64 << 20))
    cost = pl.CostEstimate(
        flops=2 * Bp * H * W * 9 * Cin * Cpad,
        transcendentals=0,
        bytes_accessed=xph.size * 2 + w.size * 2 + b.size * 4
        + Bp * Hh * Wh * Cpad * 4)

    kernel = functools.partial(_encoder_kernel, H=H, W=W, Cin=Cin, tile_b=tb)

    out = pl.pallas_call(
        kernel,
        out_shape=jax.ShapeDtypeStruct((Bp * Hh * Wh, Cpad), jnp.float32),
        grid_spec=pltpu.PrefetchScalarGridSpec(
            num_scalar_prefetch=0,
            grid=grid,
            in_specs=[
                pl.BlockSpec((2, 2, tb, Hh + 1, Wh + 1, Cin),
                             lambda i: (0, 0, i, 0, 0, 0)),
                # TODO(synk): single-buffer this constant-index block on v7x
                # when K*Cpad is production-sized (default double-buffers it).
                pl.BlockSpec((9, Cin, Cpad), lambda i: (0, 0, 0)),
                pl.BlockSpec((1, Cpad), lambda i: (0, 0)),
            ],
            out_specs=pl.BlockSpec((tb * Hh * Wh, Cpad), lambda i: (i, 0)),
        ),
        compiler_params=pltpu.CompilerParams(
            dimension_semantics=("parallel",),
            vmem_limit_bytes=vmem_limit),
        cost_estimate=cost,
    )(xph, w, b)

    # strip batch/channel padding, back to NCHW (module contract).
    out = out.reshape(Bp, Hh, Wh, Cpad)[:B, :, :, :Cout]
    return jnp.transpose(out, (0, 3, 1, 2))


def _reference_forward(x, w, b):
    """Pure-JAX reference matching the PyTorch module."""
    y = jax.lax.conv_general_dilated(
        x, w, window_strides=(1, 1), padding=((1, 1), (1, 1)),
        dimension_numbers=("NCHW", "OIHW", "NCHW"),
        precision=jax.lax.Precision.HIGHEST)
    y = y + b[None, :, None, None]
    y = jnp.maximum(y, 0.0)
    y = jax.lax.reduce_window(y, -jnp.inf, jax.lax.max,
                              window_dimensions=(1, 1, 2, 2),
                              window_strides=(1, 1, 2, 2),
                              padding="VALID")
    return y


if __name__ == "__main__":
    B, Cin, Cout, H, W = 2, 4, 8, 16, 16

    key = jax.random.PRNGKey(0)
    kx, kw, kb = jax.random.split(key, 3)

    x = jax.random.normal(kx, (B, Cin, H, W), dtype=jnp.float32)
    fan_in = Cin * 3 * 3
    weight = jax.random.uniform(kw, (Cout, Cin, 3, 3), dtype=jnp.float32,
                                minval=-1.0, maxval=1.0) / jnp.sqrt(fan_in)
    bias = jax.random.uniform(kb, (Cout,), dtype=jnp.float32,
                              minval=-1.0, maxval=1.0) / jnp.sqrt(fan_in)

    out = jax.block_until_ready(modality_encoder(x, weight, bias))

    # Reference uses the same bf16-rounded conv inputs (the kernel feeds the
    # MXU bf16 with f32 accumulation); bias/ReLU/pool are f32 on both sides.
    x_r = x.astype(jnp.bfloat16).astype(jnp.float32)
    w_r = weight.astype(jnp.bfloat16).astype(jnp.float32)
    ref = jax.block_until_ready(_reference_forward(x_r, w_r, bias))

    assert out.shape == (B, Cout, H // 2, W // 2), out.shape
    err = float(jnp.max(jnp.abs(out - ref)))
    assert jnp.allclose(out, ref, atol=2e-3, rtol=2e-3), err

    print("KERNEL_OK")
</pallas_src>

<mosaic_0001>
module attributes {stable_mosaic.version = 11 : i64} {
  func.func @_encoder_kernel(%arg0: i32, %arg1: memref<2x2x1x9x9x4xbf16, #tpu.memory_space<vmem>>, %arg2: memref<9x4x128xbf16, #tpu.memory_space<vmem>>, %arg3: memref<1x128xf32, #tpu.memory_space<vmem>>, %arg4: memref<64x128xf32, #tpu.memory_space<vmem>>) attributes {dimension_semantics = [#tpu.dimension_semantics<parallel>], iteration_bounds = array<i64: 2>, scalar_prefetch = 0 : i64, scratch_operands = 0 : i64, tpu.core_type = #tpu.core_type<tc>, window_params = [{transform_indices = @transform_0, window_bounds = array<i64: 2, 2, 1, 9, 9, 4>}, {pipeline_mode = #tpu.pipeline_mode<synchronous>, transform_indices = @transform_1, window_bounds = array<i64: 9, 4, 128>}, {pipeline_mode = #tpu.pipeline_mode<synchronous>, transform_indices = @transform_2, window_bounds = array<i64: 1, 128>}, {transform_indices = @transform_3, window_bounds = array<i64: 64, 128>}]} {
    %c0 = arith.constant 0 : index
    %c0_0 = arith.constant 0 : index
    %c0_1 = arith.constant 0 : index
    %c0_2 = arith.constant 0 : index
    %c0_3 = arith.constant 0 : index
    %c0_4 = arith.constant 0 : index
    %0 = vector.load %arg1[%c0, %c0_0, %c0_1, %c0_2, %c0_3, %c0_4] : memref<2x2x1x9x9x4xbf16, #tpu.memory_space<vmem>>, vector<2x2x1x9x9x4xbf16>
    %1 = vector.extract_strided_slice %0 {offsets = [0, 0, 0, 0, 0, 0], sizes = [1, 1, 1, 8, 8, 4], strides = [1, 1, 1, 1, 1, 1]} : vector<2x2x1x9x9x4xbf16> to vector<1x1x1x8x8x4xbf16>
    %2 = vector.shape_cast %1 : vector<1x1x1x8x8x4xbf16> to vector<1x8x8x4xbf16>
    %3 = vector.extract_strided_slice %0 {offsets = [0, 1, 0, 0, 0, 0], sizes = [1, 1, 1, 8, 8, 4], strides = [1, 1, 1, 1, 1, 1]} : vector<2x2x1x9x9x4xbf16> to vector<1x1x1x8x8x4xbf16>
    %4 = vector.shape_cast %3 : vector<1x1x1x8x8x4xbf16> to vector<1x8x8x4xbf16>
    %5 = vector.extract_strided_slice %0 {offsets = [1, 0, 0, 0, 0, 0], sizes = [1, 1, 1, 8, 8, 4], strides = [1, 1, 1, 1, 1, 1]} : vector<2x2x1x9x9x4xbf16> to vector<1x1x1x8x8x4xbf16>
    %6 = vector.shape_cast %5 : vector<1x1x1x8x8x4xbf16> to vector<1x8x8x4xbf16>
    %7 = vector.extract_strided_slice %0 {offsets = [1, 1, 0, 0, 0, 0], sizes = [1, 1, 1, 8, 8, 4], strides = [1, 1, 1, 1, 1, 1]} : vector<2x2x1x9x9x4xbf16> to vector<1x1x1x8x8x4xbf16>
    %8 = vector.shape_cast %7 : vector<1x1x1x8x8x4xbf16> to vector<1x8x8x4xbf16>
    %9 = vector.shape_cast %2 : vector<1x8x8x4xbf16> to vector<1x1x8x8x4xbf16>
    %10 = vector.shape_cast %4 : vector<1x8x8x4xbf16> to vector<1x1x8x8x4xbf16>
    %11 = vector.shape_cast %6 : vector<1x8x8x4xbf16> to vector<1x1x8x8x4xbf16>
    %12 = vector.shape_cast %8 : vector<1x8x8x4xbf16> to vector<1x1x8x8x4xbf16>
    %13 = tpu.concatenate %9, %10, %11, %12 in 0 : vector<1x1x8x8x4xbf16>, vector<1x1x8x8x4xbf16>, vector<1x1x8x8x4xbf16>, vector<1x1x8x8x4xbf16> -> vector<4x1x8x8x4xbf16>
    %14 = vector.shape_cast %13 : vector<4x1x8x8x4xbf16> to vector<256x4xbf16>
    %c0_5 = arith.constant 0 : index
    %c0_6 = arith.constant 0 : index
    %c0_7 = arith.constant 0 : index
    %15 = vector.load %arg2[%c0_5, %c0_6, %c0_7] : memref<9x4x128xbf16, #tpu.memory_space<vmem>>, vector<1x4x128xbf16>
    %16 = vector.shape_cast %15 : vector<1x4x128xbf16> to vector<4x128xbf16>
    %cst = arith.constant dense<0.000000e+00> : vector<256x128xf32>
    %17 = tpu.matmul %14, %16, %cst {dimension_numbers = #tpu.dot_dimension_numbers<[1], [0], [0], [1], [0, 0, 1, 1], [], []>} : vector<256x4xbf16>, vector<4x128xbf16>, vector<256x128xf32> -> vector<256x128xf32>
    %18 = vector.extract_strided_slice %0 {offsets = [0, 1, 0, 0, 0, 0], sizes = [1, 1, 1, 8, 8, 4], strides = [1, 1, 1, 1, 1, 1]} : vector<2x2x1x9x9x4xbf16> to vector<1x1x1x8x8x4xbf16>
    %19 = vector.shape_cast %18 : vector<1x1x1x8x8x4xbf16> to vector<1x8x8x4xbf16>
    %20 = vector.extract_strided_slice %0 {offsets = [0, 0, 0, 0, 1, 0], sizes = [1, 1, 1, 8, 8, 4], strides = [1, 1, 1, 1, 1, 1]} : vector<2x2x1x9x9x4xbf16> to vector<1x1x1x8x8x4xbf16>
    %21 = vector.shape_cast %20 : vector<1x1x1x8x8x4xbf16> to vector<1x8x8x4xbf16>
    %22 = vector.extract_strided_slice %0 {offsets = [1, 1, 0, 0, 0, 0], sizes = [1, 1, 1, 8, 8, 4], strides = [1, 1, 1, 1, 1, 1]} : vector<2x2x1x9x9x4xbf16> to vector<1x1x1x8x8x4xbf16>
    %23 = vector.shape_cast %22 : vector<1x1x1x8x8x4xbf16> to vector<1x8x8x4xbf16>
    %24 = vector.extract_strided_slice %0 {offsets = [1, 0, 0, 0, 1, 0], sizes = [1, 1, 1, 8, 8, 4], strides = [1, 1, 1, 1, 1, 1]} : vector<2x2x1x9x9x4xbf16> to vector<1x1x1x8x8x4xbf16>
    %25 = vector.shape_cast %24 : vector<1x1x1x8x8x4xbf16> to vector<1x8x8x4xbf16>
    %26 = vector.shape_cast %19 : vector<1x8x8x4xbf16> to vector<1x1x8x8x4xbf16>
    %27 = vector.shape_cast %21 : vector<1x8x8x4xbf16> to vector<1x1x8x8x4xbf16>
    %28 = vector.shape_cast %23 : vector<1x8x8x4xbf16> to vector<1x1x8x8x4xbf16>
    %29 = vector.shape_cast %25 : vector<1x8x8x4xbf16> to vector<1x1x8x8x4xbf16>
    %30 = tpu.concatenate %26, %27, %28, %29 in 0 : vector<1x1x8x8x4xbf16>, vector<1x1x8x8x4xbf16>, vector<1x1x8x8x4xbf16>, vector<1x1x8x8x4xbf16> -> vector<4x1x8x8x4xbf16>
    %31 = vector.shape_cast %30 : vector<4x1x8x8x4xbf16> to vector<256x4xbf16>
    %c1 = arith.constant 1 : index
    %c0_8 = arith.constant 0 : index
    %c0_9 = arith.constant 0 : index
    %32 = vector.load %arg2[%c1, %c0_8, %c0_9] : memref<9x4x128xbf16, #tpu.memory_space<vmem>>, vector<1x4x128xbf16>
    %33 = vector.shape_cast %32 : vector<1x4x128xbf16> to vector<4x128xbf16>
    %cst_10 = arith.constant dense<0.000000e+00> : vector<256x128xf32>
    %34 = tpu.matmul %31, %33, %cst_10 {dimension_numbers = #tpu.dot_dimension_numbers<[1], [0], [0], [1], [0, 0, 1, 1], [], []>} : vector<256x4xbf16>, vector<4x128xbf16>, vector<256x128xf32> -> vector<256x128xf32>
    %35 = arith.addf %17, %34 : vector<256x128xf32>
    %36 = vector.extract_strided_slice %0 {offsets = [0, 0, 0, 0, 1, 0], sizes = [1, 1, 1, 8, 8, 4], strides = [1, 1, 1, 1, 1, 1]} : vector<2x2x1x9x9x4xbf16> to vector<1x1x1x8x8x4xbf16>
    %37 = vector.shape_cast %36 : vector<1x1x1x8x8x4xbf16> to vector<1x8x8x4xbf16>
    %38 = vector.extract_strided_slice %0 {offsets = [0, 1, 0, 0, 1, 0], sizes = [1, 1, 1, 8, 8, 4], strides = [1, 1, 1, 1, 1, 1]} : vector<2x2x1x9x9x4xbf16> to vector<1x1x1x8x8x4xbf16>
    %39 = vector.shape_cast %38 : vector<1x1x1x8x8x4xbf16> to vector<1x8x8x4xbf16>
    %40 = vector.extract_strided_slice %0 {offsets = [1, 0, 0, 0, 1, 0], sizes = [1, 1, 1, 8, 8, 4], strides = [1, 1, 1, 1, 1, 1]} : vector<2x2x1x9x9x4xbf16> to vector<1x1x1x8x8x4xbf16>
    %41 = vector.shape_cast %40 : vector<1x1x1x8x8x4xbf16> to vector<1x8x8x4xbf16>
    %42 = vector.extract_strided_slice %0 {offsets = [1, 1, 0, 0, 1, 0], sizes = [1, 1, 1, 8, 8, 4], strides = [1, 1, 1, 1, 1, 1]} : vector<2x2x1x9x9x4xbf16> to vector<1x1x1x8x8x4xbf16>
    %43 = vector.shape_cast %42 : vector<1x1x1x8x8x4xbf16> to vector<1x8x8x4xbf16>
    %44 = vector.shape_cast %37 : vector<1x8x8x4xbf16> to vector<1x1x8x8x4xbf16>
    %45 = vector.shape_cast %39 : vector<1x8x8x4xbf16> to vector<1x1x8x8x4xbf16>
    %46 = vector.shape_cast %41 : vector<1x8x8x4xbf16> to vector<1x1x8x8x4xbf16>
    %47 = vector.shape_cast %43 : vector<1x8x8x4xbf16> to vector<1x1x8x8x4xbf16>
    %48 = tpu.concatenate %44, %45, %46, %47 in 0 : vector<1x1x8x8x4xbf16>, vector<1x1x8x8x4xbf16>, vector<1x1x8x8x4xbf16>, vector<1x1x8x8x4xbf16> -> vector<4x1x8x8x4xbf16>
    %49 = vector.shape_cast %48 : vector<4x1x8x8x4xbf16> to vector<256x4xbf16>
    %c2 = arith.constant 2 : index
    %c0_11 = arith.constant 0 : index
    %c0_12 = arith.constant 0 : index
    %50 = vector.load %arg2[%c2, %c0_11, %c0_12] : memref<9x4x128xbf16, #tpu.memory_space<vmem>>, vector<1x4x128xbf16>
    %51 = vector.shape_cast %50 : vector<1x4x128xbf16> to vector<4x128xbf16>
    %cst_13 = arith.constant dense<0.000000e+00> : vector<256x128xf32>
    %52 = tpu.matmul %49, %51, %cst_13 {dimension_numbers = #tpu.dot_dimension_numbers<[1], [0], [0], [1], [0, 0, 1, 1], [], []>} : vector<256x4xbf16>, vector<4x128xbf16>, vector<256x128xf32> -> vector<256x128xf32>
    %53 = arith.addf %35, %52 : vector<256x128xf32>
    %54 = vector.extract_strided_slice %0 {offsets = [1, 0, 0, 0, 0, 0], sizes = [1, 1, 1, 8, 8, 4], strides = [1, 1, 1, 1, 1, 1]} : vector<2x2x1x9x9x4xbf16> to vector<1x1x1x8x8x4xbf16>
    %55 = vector.shape_cast %54 : vector<1x1x1x8x8x4xbf16> to vector<1x8x8x4xbf16>
    %56 = vector.extract_strided_slice %0 {offsets = [1, 1, 0, 0, 0, 0], sizes = [1, 1, 1, 8, 8, 4], strides = [1, 1, 1, 1, 1, 1]} : vector<2x2x1x9x9x4xbf16> to vector<1x1x1x8x8x4xbf16>
    %57 = vector.shape_cast %56 : vector<1x1x1x8x8x4xbf16> to vector<1x8x8x4xbf16>
    %58 = vector.extract_strided_slice %0 {offsets = [0, 0, 0, 1, 0, 0], sizes = [1, 1, 1, 8, 8, 4], strides = [1, 1, 1, 1, 1, 1]} : vector<2x2x1x9x9x4xbf16> to vector<1x1x1x8x8x4xbf16>
    %59 = vector.shape_cast %58 : vector<1x1x1x8x8x4xbf16> to vector<1x8x8x4xbf16>
    %60 = vector.extract_strided_slice %0 {offsets = [0, 1, 0, 1, 0, 0], sizes = [1, 1, 1, 8, 8, 4], strides = [1, 1, 1, 1, 1, 1]} : vector<2x2x1x9x9x4xbf16> to vector<1x1x1x8x8x4xbf16>
    %61 = vector.shape_cast %60 : vector<1x1x1x8x8x4xbf16> to vector<1x8x8x4xbf16>
    %62 = vector.shape_cast %55 : vector<1x8x8x4xbf16> to vector<1x1x8x8x4xbf16>
    %63 = vector.shape_cast %57 : vector<1x8x8x4xbf16> to vector<1x1x8x8x4xbf16>
    %64 = vector.shape_cast %59 : vector<1x8x8x4xbf16> to vector<1x1x8x8x4xbf16>
    %65 = vector.shape_cast %61 : vector<1x8x8x4xbf16> to vector<1x1x8x8x4xbf16>
    %66 = tpu.concatenate %62, %63, %64, %65 in 0 : vector<1x1x8x8x4xbf16>, vector<1x1x8x8x4xbf16>, vector<1x1x8x8x4xbf16>, vector<1x1x8x8x4xbf16> -> vector<4x1x8x8x4xbf16>
    %67 = vector.shape_cast %66 : vector<4x1x8x8x4xbf16> to vector<256x4xbf16>
    %c3 = arith.constant 3 : index
    %c0_14 = arith.constant 0 : index
    %c0_15 = arith.constant 0 : index
    %68 = vector.load %arg2[%c3, %c0_14, %c0_15] : memref<9x4x128xbf16, #tpu.memory_space<vmem>>, vector<1x4x128xbf16>
    %69 = vector.shape_cast %68 : vector<1x4x128xbf16> to vector<4x128xbf16>
    %cst_16 = arith.constant dense<0.000000e+00> : vector<256x128xf32>
    %70 = tpu.matmul %67, %69, %cst_16 {dimension_numbers = #tpu.dot_dimension_numbers<[1], [0], [0], [1], [0, 0, 1, 1], [], []>} : vector<256x4xbf16>, vector<4x128xbf16>, vector<256x128xf32> -> vector<256x128xf32>
    %71 = arith.addf %53, %70 : vector<256x128xf32>
    %72 = vector.extract_strided_slice %0 {offsets = [1, 1, 0, 0, 0, 0], sizes = [1, 1, 1, 8, 8, 4], strides = [1, 1, 1, 1, 1, 1]} : vector<2x2x1x9x9x4xbf16> to vector<1x1x1x8x8x4xbf16>
    %73 = vector.shape_cast %72 : vector<1x1x1x8x8x4xbf16> to vector<1x8x8x4xbf16>
    %74 = vector.extract_strided_slice %0 {offsets = [1, 0, 0, 0, 1, 0], sizes = [1, 1, 1, 8, 8, 4], strides = [1, 1, 1, 1, 1, 1]} : vector<2x2x1x9x9x4xbf16> to vector<1x1x1x8x8x4xbf16>
    %75 = vector.shape_cast %74 : vector<1x1x1x8x8x4xbf16> to vector<1x8x8x4xbf16>
    %76 = vector.extract_strided_slice %0 {offsets = [0, 1, 0, 1, 0, 0], sizes = [1, 1, 1, 8, 8, 4], strides = [1, 1, 1, 1, 1, 1]} : vector<2x2x1x9x9x4xbf16> to vector<1x1x1x8x8x4xbf16>
    %77 = vector.shape_cast %76 : vector<1x1x1x8x8x4xbf16> to vector<1x8x8x4xbf16>
    %78 = vector.extract_strided_slice %0 {offsets = [0, 0, 0, 1, 1, 0], sizes = [1, 1, 1, 8, 8, 4], strides = [1, 1, 1, 1, 1, 1]} : vector<2x2x1x9x9x4xbf16> to vector<1x1x1x8x8x4xbf16>
    %79 = vector.shape_cast %78 : vector<1x1x1x8x8x4xbf16> to vector<1x8x8x4xbf16>
    %80 = vector.shape_cast %73 : vector<1x8x8x4xbf16> to vector<1x1x8x8x4xbf16>
    %81 = vector.shape_cast %75 : vector<1x8x8x4xbf16> to vector<1x1x8x8x4xbf16>
    %82 = vector.shape_cast %77 : vector<1x8x8x4xbf16> to vector<1x1x8x8x4xbf16>
    %83 = vector.shape_cast %79 : vector<1x8x8x4xbf16> to vector<1x1x8x8x4xbf16>
    %84 = tpu.concatenate %80, %81, %82, %83 in 0 : vector<1x1x8x8x4xbf16>, vector<1x1x8x8x4xbf16>, vector<1x1x8x8x4xbf16>, vector<1x1x8x8x4xbf16> -> vector<4x1x8x8x4xbf16>
    %85 = vector.shape_cast %84 : vector<4x1x8x8x4xbf16> to vector<256x4xbf16>
    %c4 = arith.constant 4 : index
    %c0_17 = arith.constant 0 : index
    %c0_18 = arith.constant 0 : index
    %86 = vector.load %arg2[%c4, %c0_17, %c0_18] : memref<9x4x128xbf16, #tpu.memory_space<vmem>>, vector<1x4x128xbf16>
    %87 = vector.shape_cast %86 : vector<1x4x128xbf16> to vector<4x128xbf16>
    %cst_19 = arith.constant dense<0.000000e+00> : vector<256x128xf32>
    %88 = tpu.matmul %85, %87, %cst_19 {dimension_numbers = #tpu.dot_dimension_numbers<[1], [0], [0], [1], [0, 0, 1, 1], [], []>} : vector<256x4xbf16>, vector<4x128xbf16>, vector<256x128xf32> -> vector<256x128xf32>
    %89 = arith.addf %71, %88 : vector<256x128xf32>
    %90 = vector.extract_strided_slice %0 {offsets = [1, 0, 0, 0, 1, 0], sizes = [1, 1, 1, 8, 8, 4], strides = [1, 1, 1, 1, 1, 1]} : vector<2x2x1x9x9x4xbf16> to vector<1x1x1x8x8x4xbf16>
    %91 = vector.shape_cast %90 : vector<1x1x1x8x8x4xbf16> to vector<1x8x8x4xbf16>
    %92 = vector.extract_strided_slice %0 {offsets = [1, 1, 0, 0, 1, 0], sizes = [1, 1, 1, 8, 8, 4], strides = [1, 1, 1, 1, 1, 1]} : vector<2x2x1x9x9x4xbf16> to vector<1x1x1x8x8x4xbf16>
    %93 = vector.shape_cast %92 : vector<1x1x1x8x8x4xbf16> to vector<1x8x8x4xbf16>
    %94 = vector.extract_strided_slice %0 {offsets = [0, 0, 0, 1, 1, 0], sizes = [1, 1, 1, 8, 8, 4], strides = [1, 1, 1, 1, 1, 1]} : vector<2x2x1x9x9x4xbf16> to vector<1x1x1x8x8x4xbf16>
    %95 = vector.shape_cast %94 : vector<1x1x1x8x8x4xbf16> to vector<1x8x8x4xbf16>
    %96 = vector.extract_strided_slice %0 {offsets = [0, 1, 0, 1, 1, 0], sizes = [1, 1, 1, 8, 8, 4], strides = [1, 1, 1, 1, 1, 1]} : vector<2x2x1x9x9x4xbf16> to vector<1x1x1x8x8x4xbf16>
    %97 = vector.shape_cast %96 : vector<1x1x1x8x8x4xbf16> to vector<1x8x8x4xbf16>
    %98 = vector.shape_cast %91 : vector<1x8x8x4xbf16> to vector<1x1x8x8x4xbf16>
    %99 = vector.shape_cast %93 : vector<1x8x8x4xbf16> to vector<1x1x8x8x4xbf16>
    %100 = vector.shape_cast %95 : vector<1x8x8x4xbf16> to vector<1x1x8x8x4xbf16>
    %101 = vector.shape_cast %97 : vector<1x8x8x4xbf16> to vector<1x1x8x8x4xbf16>
    %102 = tpu.concatenate %98, %99, %100, %101 in 0 : vector<1x1x8x8x4xbf16>, vector<1x1x8x8x4xbf16>, vector<1x1x8x8x4xbf16>, vector<1x1x8x8x4xbf16> -> vector<4x1x8x8x4xbf16>
    %103 = vector.shape_cast %102 : vector<4x1x8x8x4xbf16> to vector<256x4xbf16>
    %c5 = arith.constant 5 : index
    %c0_20 = arith.constant 0 : index
    %c0_21 = arith.constant 0 : index
    %104 = vector.load %arg2[%c5, %c0_20, %c0_21] : memref<9x4x128xbf16, #tpu.memory_space<vmem>>, vector<1x4x128xbf16>
    %105 = vector.shape_cast %104 : vector<1x4x128xbf16> to vector<4x128xbf16>
    %cst_22 = arith.constant dense<0.000000e+00> : vector<256x128xf32>
    %106 = tpu.matmul %103, %105, %cst_22 {dimension_numbers = #tpu.dot_dimension_numbers<[1], [0], [0], [1], [0, 0, 1, 1], [], []>} : vector<256x4xbf16>, vector<4x128xbf16>, vector<256x128xf32> -> vector<256x128xf32>
    %107 = arith.addf %89, %106 : vector<256x128xf32>
    %108 = vector.extract_strided_slice %0 {offsets = [0, 0, 0, 1, 0, 0], sizes = [1, 1, 1, 8, 8, 4], strides = [1, 1, 1, 1, 1, 1]} : vector<2x2x1x9x9x4xbf16> to vector<1x1x1x8x8x4xbf16>
    %109 = vector.shape_cast %108 : vector<1x1x1x8x8x4xbf16> to vector<1x8x8x4xbf16>
    %110 = vector.extract_strided_slice %0 {offsets = [0, 1, 0, 1, 0, 0], sizes = [1, 1, 1, 8, 8, 4], strides = [1, 1, 1, 1, 1, 1]} : vector<2x2x1x9x9x4xbf16> to vector<1x1x1x8x8x4xbf16>
    %111 = vector.shape_cast %110 : vector<1x1x1x8x8x4xbf16> to vector<1x8x8x4xbf16>
    %112 = vector.extract_strided_slice %0 {offsets = [1, 0, 0, 1, 0, 0], sizes = [1, 1, 1, 8, 8, 4], strides = [1, 1, 1, 1, 1, 1]} : vector<2x2x1x9x9x4xbf16> to vector<1x1x1x8x8x4xbf16>
    %113 = vector.shape_cast %112 : vector<1x1x1x8x8x4xbf16> to vector<1x8x8x4xbf16>
    %114 = vector.extract_strided_slice %0 {offsets = [1, 1, 0, 1, 0, 0], sizes = [1, 1, 1, 8, 8, 4], strides = [1, 1, 1, 1, 1, 1]} : vector<2x2x1x9x9x4xbf16> to vector<1x1x1x8x8x4xbf16>
    %115 = vector.shape_cast %114 : vector<1x1x1x8x8x4xbf16> to vector<1x8x8x4xbf16>
    %116 = vector.shape_cast %109 : vector<1x8x8x4xbf16> to vector<1x1x8x8x4xbf16>
    %117 = vector.shape_cast %111 : vector<1x8x8x4xbf16> to vector<1x1x8x8x4xbf16>
    %118 = vector.shape_cast %113 : vector<1x8x8x4xbf16> to vector<1x1x8x8x4xbf16>
    %119 = vector.shape_cast %115 : vector<1x8x8x4xbf16> to vector<1x1x8x8x4xbf16>
    %120 = tpu.concatenate %116, %117, %118, %119 in 0 : vector<1x1x8x8x4xbf16>, vector<1x1x8x8x4xbf16>, vector<1x1x8x8x4xbf16>, vector<1x1x8x8x4xbf16> -> vector<4x1x8x8x4xbf16>
    %121 = vector.shape_cast %120 : vector<4x1x8x8x4xbf16> to vector<256x4xbf16>
    %c6 = arith.constant 6 : index
    %c0_23 = arith.constant 0 : index
    %c0_24 = arith.constant 0 : index
    %122 = vector.load %arg2[%c6, %c0_23, %c0_24] : memref<9x4x128xbf16, #tpu.memory_space<vmem>>, vector<1x4x128xbf16>
    %123 = vector.shape_cast %122 : vector<1x4x128xbf16> to vector<4x128xbf16>
    %cst_25 = arith.constant dense<0.000000e+00> : vector<256x128xf32>
    %124 = tpu.matmul %121, %123, %cst_25 {dimension_numbers = #tpu.dot_dimension_numbers<[1], [0], [0], [1], [0, 0, 1, 1], [], []>} : vector<256x4xbf16>, vector<4x128xbf16>, vector<256x128xf32> -> vector<256x128xf32>
    %125 = arith.addf %107, %124 : vector<256x128xf32>
    %126 = vector.extract_strided_slice %0 {offsets = [0, 1, 0, 1, 0, 0], sizes = [1, 1, 1, 8, 8, 4], strides = [1, 1, 1, 1, 1, 1]} : vector<2x2x1x9x9x4xbf16> to vector<1x1x1x8x8x4xbf16>
    %127 = vector.shape_cast %126 : vector<1x1x1x8x8x4xbf16> to vector<1x8x8x4xbf16>
    %128 = vector.extract_strided_slice %0 {offsets = [0, 0, 0, 1, 1, 0], sizes = [1, 1, 1, 8, 8, 4], strides = [1, 1, 1, 1, 1, 1]} : vector<2x2x1x9x9x4xbf16> to vector<1x1x1x8x8x4xbf16>
    %129 = vector.shape_cast %128 : vector<1x1x1x8x8x4xbf16> to vector<1x8x8x4xbf16>
    %130 = vector.extract_strided_slice %0 {offsets = [1, 1, 0, 1, 0, 0], sizes = [1, 1, 1, 8, 8, 4], strides = [1, 1, 1, 1, 1, 1]} : vector<2x2x1x9x9x4xbf16> to vector<1x1x1x8x8x4xbf16>
    %131 = vector.shape_cast %130 : vector<1x1x1x8x8x4xbf16> to vector<1x8x8x4xbf16>
    %132 = vector.extract_strided_slice %0 {offsets = [1, 0, 0, 1, 1, 0], sizes = [1, 1, 1, 8, 8, 4], strides = [1, 1, 1, 1, 1, 1]} : vector<2x2x1x9x9x4xbf16> to vector<1x1x1x8x8x4xbf16>
    %133 = vector.shape_cast %132 : vector<1x1x1x8x8x4xbf16> to vector<1x8x8x4xbf16>
    %134 = vector.shape_cast %127 : vector<1x8x8x4xbf16> to vector<1x1x8x8x4xbf16>
    %135 = vector.shape_cast %129 : vector<1x8x8x4xbf16> to vector<1x1x8x8x4xbf16>
    %136 = vector.shape_cast %131 : vector<1x8x8x4xbf16> to vector<1x1x8x8x4xbf16>
    %137 = vector.shape_cast %133 : vector<1x8x8x4xbf16> to vector<1x1x8x8x4xbf16>
    %138 = tpu.concatenate %134, %135, %136, %137 in 0 : vector<1x1x8x8x4xbf16>, vector<1x1x8x8x4xbf16>, vector<1x1x8x8x4xbf16>, vector<1x1x8x8x4xbf16> -> vector<4x1x8x8x4xbf16>
    %139 = vector.shape_cast %138 : vector<4x1x8x8x4xbf16> to vector<256x4xbf16>
    %c7 = arith.constant 7 : index
    %c0_26 = arith.constant 0 : index
    %c0_27 = arith.constant 0 : index
    %140 = vector.load %arg2[%c7, %c0_26, %c0_27] : memref<9x4x128xbf16, #tpu.memory_space<vmem>>, vector<1x4x128xbf16>
    %141 = vector.shape_cast %140 : vector<1x4x128xbf16> to vector<4x128xbf16>
    %cst_28 = arith.constant dense<0.000000e+00> : vector<256x128xf32>
    %142 = tpu.matmul %139, %141, %cst_28 {dimension_numbers = #tpu.dot_dimension_numbers<[1], [0], [0], [1], [0, 0, 1, 1], [], []>} : vector<256x4xbf16>, vector<4x128xbf16>, vector<256x128xf32> -> vector<256x128xf32>
    %143 = arith.addf %125, %142 : vector<256x128xf32>
    %144 = vector.extract_strided_slice %0 {offsets = [0, 0, 0, 1, 1, 0], sizes = [1, 1, 1, 8, 8, 4], strides = [1, 1, 1, 1, 1, 1]} : vector<2x2x1x9x9x4xbf16> to vector<1x1x1x8x8x4xbf16>
    %145 = vector.shape_cast %144 : vector<1x1x1x8x8x4xbf16> to vector<1x8x8x4xbf16>
    %146 = vector.extract_strided_slice %0 {offsets = [0, 1, 0, 1, 1, 0], sizes = [1, 1, 1, 8, 8, 4], strides = [1, 1, 1, 1, 1, 1]} : vector<2x2x1x9x9x4xbf16> to vector<1x1x1x8x8x4xbf16>
    %147 = vector.shape_cast %146 : vector<1x1x1x8x8x4xbf16> to vector<1x8x8x4xbf16>
    %148 = vector.extract_strided_slice %0 {offsets = [1, 0, 0, 1, 1, 0], sizes = [1, 1, 1, 8, 8, 4], strides = [1, 1, 1, 1, 1, 1]} : vector<2x2x1x9x9x4xbf16> to vector<1x1x1x8x8x4xbf16>
    %149 = vector.shape_cast %148 : vector<1x1x1x8x8x4xbf16> to vector<1x8x8x4xbf16>
    %150 = vector.extract_strided_slice %0 {offsets = [1, 1, 0, 1, 1, 0], sizes = [1, 1, 1, 8, 8, 4], strides = [1, 1, 1, 1, 1, 1]} : vector<2x2x1x9x9x4xbf16> to vector<1x1x1x8x8x4xbf16>
    %151 = vector.shape_cast %150 : vector<1x1x1x8x8x4xbf16> to vector<1x8x8x4xbf16>
    %152 = vector.shape_cast %145 : vector<1x8x8x4xbf16> to vector<1x1x8x8x4xbf16>
    %153 = vector.shape_cast %147 : vector<1x8x8x4xbf16> to vector<1x1x8x8x4xbf16>
    %154 = vector.shape_cast %149 : vector<1x8x8x4xbf16> to vector<1x1x8x8x4xbf16>
    %155 = vector.shape_cast %151 : vector<1x8x8x4xbf16> to vector<1x1x8x8x4xbf16>
    %156 = tpu.concatenate %152, %153, %154, %155 in 0 : vector<1x1x8x8x4xbf16>, vector<1x1x8x8x4xbf16>, vector<1x1x8x8x4xbf16>, vector<1x1x8x8x4xbf16> -> vector<4x1x8x8x4xbf16>
    %157 = vector.shape_cast %156 : vector<4x1x8x8x4xbf16> to vector<256x4xbf16>
    %c8 = arith.constant 8 : index
    %c0_29 = arith.constant 0 : index
    %c0_30 = arith.constant 0 : index
    %158 = vector.load %arg2[%c8, %c0_29, %c0_30] : memref<9x4x128xbf16, #tpu.memory_space<vmem>>, vector<1x4x128xbf16>
    %159 = vector.shape_cast %158 : vector<1x4x128xbf16> to vector<4x128xbf16>
    %cst_31 = arith.constant dense<0.000000e+00> : vector<256x128xf32>
    %160 = tpu.matmul %157, %159, %cst_31 {dimension_numbers = #tpu.dot_dimension_numbers<[1], [0], [0], [1], [0, 0, 1, 1], [], []>} : vector<256x4xbf16>, vector<4x128xbf16>, vector<256x128xf32> -> vector<256x128xf32>
    %161 = arith.addf %143, %160 : vector<256x128xf32>
    %c0_32 = arith.constant 0 : index
    %c0_33 = arith.constant 0 : index
    %162 = vector.load %arg3[%c0_32, %c0_33] : memref<1x128xf32, #tpu.memory_space<vmem>>, vector<1x128xf32>
    %163 = vector.broadcast %162 : vector<1x128xf32> to vector<256x128xf32>
    %164 = arith.addf %161, %163 : vector<256x128xf32>
    %cst_34 = arith.constant 0.000000e+00 : f32
    %165 = vector.broadcast %cst_34 : f32 to vector<256x128xf32>
    %166 = arith.maximumf %164, %165 : vector<256x128xf32>
    %167 = vector.extract_strided_slice %166 {offsets = [0, 0], sizes = [64, 128], strides = [1, 1]} : vector<256x128xf32> to vector<64x128xf32>
    %168 = vector.extract_strided_slice %166 {offsets = [64, 0], sizes = [64, 128], strides = [1, 1]} : vector<256x128xf32> to vector<64x128xf32>
    %169 = arith.maximumf %167, %168 : vector<64x128xf32>
    %170 = vector.extract_strided_slice %166 {offsets = [128, 0], sizes = [64, 128], strides = [1, 1]} : vector<256x128xf32> to vector<64x128xf32>
    %171 = vector.extract_strided_slice %166 {offsets = [192, 0], sizes = [64, 128], strides = [1, 1]} : vector<256x128xf32> to vector<64x128xf32>
    %172 = arith.maximumf %170, %171 : vector<64x128xf32>
    %173 = arith.maximumf %169, %172 : vector<64x128xf32>
    %c0_35 = arith.constant 0 : index
    %c0_36 = arith.constant 0 : index
    %174 = vector.load %arg4[%c0_35, %c0_36] : memref<64x128xf32, #tpu.memory_space<vmem>>, vector<64x128xf32>
    tpu.vector_store %arg4[%c0_35, %c0_36], %173 {strides = array<i32>} : memref<64x128xf32, #tpu.memory_space<vmem>>, vector<64x128xf32>,
    return
  }
  func.func @transform_0(%arg0: i32) -> (i32, i32, i32, i32, i32, i32) {
    %c0_i32 = arith.constant 0 : i32
    %c0_i32_0 = arith.constant 0 : i32
    %c0_i32_1 = arith.constant 0 : i32
    %c0_i32_2 = arith.constant 0 : i32
    %c0_i32_3 = arith.constant 0 : i32
    %c0_i32_4 = arith.constant 0 : i32
    return %c0_i32, %c0_i32_0, %arg0, %c0_i32_1, %c0_i32_2, %c0_i32_3 : i32, i32, i32, i32, i32, i32
  }
  func.func @transform_1(%arg0: i32) -> (i32, i32, i32) {
    %c0_i32 = arith.constant 0 : i32
    %c0_i32_0 = arith.constant 0 : i32
    %c0_i32_1 = arith.constant 0 : i32
    %c0_i32_2 = arith.constant 0 : i32
    return %c0_i32, %c0_i32_0, %c0_i32_1 : i32, i32, i32
  }
  func.func @transform_2(%arg0: i32) -> (i32, i32) {
    %c0_i32 = arith.constant 0 : i32
    %c0_i32_0 = arith.constant 0 : i32
    %c0_i32_1 = arith.constant 0 : i32
    return %c0_i32, %c0_i32_0 : i32, i32
  }
  func.func @transform_3(%arg0: i32) -> (i32, i32) {
    %c0_i32 = arith.constant 0 : i32
    %c0_i32_0 = arith.constant 0 : i32
    return %arg0, %c0_i32 : i32, i32
  }
}

</mosaic_0001>

<llo_original>
// kernel: modality_encoder.1
$region0: #{modality_encoder.1}
  #allocation0 [shape = 'u32[]', space=smem, size = 0x4, offset = 0x4, fixed_abs, tag = 'smem constant byte address 0x4 - core index']
  #allocation1 [shape = 'u32[144,128]{1,0:T(1,128)}', space=vmem, size = 0x12000, scoped, tag = 'internal scratch']
  %s0 = inlined_call_operand.vmem [shape: bf16[2,2,2,9,9,4], index: 0, kind: input, shape index: {}]
  %s1 = inlined_call_operand.vmem [shape: bf16[9,4,128], index: 1, kind: input, shape index: {}]
  %s2 = inlined_call_operand.vmem [shape: f32[1,128], index: 2, kind: input, shape index: {}]
  %s3 = inlined_call_operand.vmem [shape: f32[128,128], index: 3, kind: output, shape index: {}]
  %s4 = sld [smem:[#allocation0]]
  $region86: #{modality_encoder.1} parent=0
    _
  %s6 = ssub.s32 1, %s4
  %s7 = scalar_select 0, %s6, %s4
  $region1: #{modality_encoder.1} parent=0
    #allocation2 [shape = 'u8[294912]{0}', space=vmem, size = 0x48000, scoped, tag = 'input window, operand 0']
    loop: start=0, step=1, limit=4
    $region2: #{modality_encoder.1} parent=1 // loop_pre_header
      _
    $region3: #{modality_encoder.1} parent=1 // loop_header
      %s9 = sphi 0, %s13
      %p10 = scmp.ge.s32.totalorder %s9, 4
      %s19 = sphi 0, %s21
      %s22 = sphi 0, %s19
      %s23 = sphi 0, %s22
      %s39 = sphi 0, %s23
      %s43 = sphi 0, %s43
      %s45 = sphi 0, %s43
      %s46 = sphi 0, %s45
      %s60 = sphi 0, %s46
      %s64 = sphi 0, %s64
      %s66 = sphi 0, %s64
      %s67 = sphi 0, %s66
      %s81 = sphi 0, %s67
      %s87 = sphi 0, %s89
      %s90 = sphi 0, %s87
      %s91 = sphi 0, %s90
      %s107 = sphi 0, %s91
    $region4: #{modality_encoder.1} parent=1 // loop_header_branch
      %12 = sbr.rel (%p10) target = $region8
    $region5: #{modality_encoder.1} parent=1 // loop_body
      %s14 = ssub.s32 %s9, 1
      %s15 = ssub.s32 %s9, 2
      %s16 = sadd.s32 %s9, 1
      %s17 = ssub.s32 %s9, %s16
      %p18 = scmp.eq.s32.totalorder %s17, 0
      %s20 = sadd.s32 %s19, 1
      %s21 = scalar_select %p18, %s19, %s20
      %p24 = pneg %p18
      %p25 = scmp.eq.s32.totalorder %s9, 1
      %p26 = por %p24, %p25
      %p27 = scmp.ne.s32.totalorder %s19, %s22
      %p28 = scmp.eq.s32.totalorder %s9, 0
      %p29 = por %p27, %p28
      %p30 = scmp.ne.s32.totalorder %s19, %s22
      %p31 = scmp.eq.s32.totalorder %s14, 1
      %p32 = por %p30, %p31
      %p33 = scmp.ne.s32.totalorder %s22, %s23
      %p34 = scmp.eq.s32.totalorder %s14, 0
      %p35 = por %p33, %p34
      %p36 = scmp.ne.s32.totalorder %s22, %s23
      %p37 = scmp.eq.s32.totalorder %s15, 1
      %p38 = por %p36, %p37
      %p40 = scmp.ne.s32.totalorder %s23, %s39
      %p41 = scmp.eq.s32.totalorder %s15, 0
      %p42 = por %p40, %p41
      %s44 = sadd.s32 %s43, 1
      %p47 = scmp.eq.s32.totalorder %s9, 1
      %p48 = scmp.ne.s32.totalorder %s43, %s45
      %p49 = scmp.eq.s32.totalorder %s9, 0
      %p50 = por %p48, %p49
      %p51 = scmp.ne.s32.totalorder %s43, %s45
      %p52 = scmp.eq.s32.totalorder %s14, 1
      %p53 = por %p51, %p52
      %p54 = scmp.ne.s32.totalorder %s45, %s46
      %p55 = scmp.eq.s32.totalorder %s14, 0
      %p56 = por %p54, %p55
      %p57 = scmp.ne.s32.totalorder %s45, %s46
      %p58 = scmp.eq.s32.totalorder %s15, 1
      %p59 = por %p57, %p58
      %p61 = scmp.ne.s32.totalorder %s46, %s60
      %p62 = scmp.eq.s32.totalorder %s15, 0
      %p63 = por %p61, %p62
      %s65 = sadd.s32 %s64, 1
      %p68 = scmp.eq.s32.totalorder %s9, 1
      %p69 = scmp.ne.s32.totalorder %s64, %s66
      %p70 = scmp.eq.s32.totalorder %s9, 0
      %p71 = por %p69, %p70
      %p72 = scmp.ne.s32.totalorder %s64, %s66
      %p73 = scmp.eq.s32.totalorder %s14, 1
      %p74 = por %p72, %p73
      %p75 = scmp.ne.s32.totalorder %s66, %s67
      %p76 = scmp.eq.s32.totalorder %s14, 0
      %p77 = por %p75, %p76
      %p78 = scmp.ne.s32.totalorder %s66, %s67
      %p79 = scmp.eq.s32.totalorder %s15, 1
      %p80 = por %p78, %p79
      %p82 = scmp.ne.s32.totalorder %s67, %s81
      %p83 = scmp.eq.s32.totalorder %s15, 0
      %p84 = por %p82, %p83
      %s85 = ssub.s32 %s9, %s16
      %p86 = scmp.eq.s32.totalorder %s85, 0
      %s88 = sadd.s32 %s87, 1
      %s89 = scalar_select %p86, %s87, %s88
      %p92 = pneg %p86
      %p93 = scmp.eq.s32.totalorder %s9, 1
      %p94 = por %p92, %p93
      %p95 = scmp.ne.s32.totalorder %s87, %s90
      %p96 = scmp.eq.s32.totalorder %s9, 0
      %p97 = por %p95, %p96
      %p98 = scmp.ne.s32.totalorder %s87, %s90
      %p99 = scmp.eq.s32.totalorder %s14, 1
      %p100 = por %p98, %p99
      %p101 = scmp.ne.s32.totalorder %s90, %s91
      %p102 = scmp.eq.s32.totalorder %s14, 0
      %p103 = por %p101, %p102
      %p104 = scmp.ne.s32.totalorder %s90, %s91
      %p105 = scmp.eq.s32.totalorder %s15, 1
      %p106 = por %p104, %p105
      %p108 = scmp.ne.s32.totalorder %s91, %s107
      %p109 = scmp.eq.s32.totalorder %s15, 0
      %p110 = por %p108, %p109
      %p111 = scmp.le.s32.totalorder 1, %s9
      %p112 = scmp.lt.s32.totalorder %s9, 3
      %p113 = pnand %p111, %p112
      %p114 = pneg %p113
      // Predicated region
      $region9: #{modality_encoder.1} parent=5 // pred_check
        _
      $region10: #{modality_encoder.1} parent=5 // pred_check_branch
        %116 = sbr.rel (%p113) target = $region12
      $region11: #{modality_encoder.1} parent=5 // pred_region
        %s117 = ssub.s32 %s9, 1
        // Predicated region
        $region13: #{modality_encoder.1} parent=11 // pred_check
          %p118 = pneg %p56
        $region14: #{modality_encoder.1} parent=11 // pred_check_branch
          %120 = sbr.rel (%p118) target = $region16
        $region15: #{modality_encoder.1} parent=11 // pred_region
          _
        $region16: #{modality_encoder.1} parent=11 // pred_fallthru
          _
        // Predicated region
        $region17: #{modality_encoder.1} parent=11 // pred_check
          %p121 = pneg %p77
        $region18: #{modality_encoder.1} parent=11 // pred_check_branch
          %123 = sbr.rel (%p121) target = $region20
        $region19: #{modality_encoder.1} parent=11 // pred_region
          _
        $region20: #{modality_encoder.1} parent=11 // pred_fallthru
          _
      $region12: #{modality_encoder.1} parent=5 // pred_fallthru
        _
      %p124 = scmp.lt.s32.totalorder %s9, 2
      // Predicated region
      $region21: #{modality_encoder.1} parent=5 // pred_check
        %p125 = pneg %p124
      $region22: #{modality_encoder.1} parent=5 // pred_check_branch
        %127 = sbr.rel (%p125) target = $region24
      $region23: #{modality_encoder.1} parent=5 // pred_region
        // Predicated region
        $region25: #{modality_encoder.1} parent=23 // pred_check
          %p128 = pneg %p29
        $region26: #{modality_encoder.1} parent=23 // pred_check_branch
          %130 = sbr.rel (%p128) target = $region28
        $region27: #{modality_encoder.1} parent=23 // pred_region
          %s131 = sand.u32 %s19, 1
          %s132 = sand.u32 %s19, 1
          %s133 = smul.addr %s132, 288
          %s134 = scalar_lea.vmem [#allocation2], %s133
          %s135 = smul.addr %s9, 18
          %s136 = smul.addr %s135, 4
          %s137 = scalar_lea.vmem %s0, %s136
          // Predicated region
          $region29: #{modality_encoder.1} parent=27 // pred_check
            _
          $region30: #{modality_encoder.1} parent=27 // pred_check_branch
            %139 = sbr.rel (0) target = $region32
          $region31: #{modality_encoder.1} parent=27 // pred_region
            // Predicated region
            $region33: #{modality_encoder.1} parent=31 // pred_check
              _
            $region34: #{modality_encoder.1} parent=31 // pred_check_branch
              %141 = sbr.rel target = $region36
            $region35: #{modality_encoder.1} parent=31 // pred_region
              // Predicated region
              $region48: #{modality_encoder.1} parent=35 // pred_check
                _
              $region49: #{modality_encoder.1} parent=35 // pred_check_branch
                %298 = sbr.rel (0) target = $region51
              $region50: #{modality_encoder.1} parent=35 // pred_region
                loop: start=0, step=1, limit=1
                $region52: #{modality_encoder.1} parent=50 // loop_pre_header
                  _
                $region53: #{modality_encoder.1} parent=50 // loop_header
                  %s300 = sphi 0, %s304
                  %p301 = scmp.ge.s32.totalorder %s300, 1
                  %s305 = sphi %s137, %s137
                  %s306 = sphi %s134, %s134
                $region54: #{modality_encoder.1} parent=50 // loop_header_branch
                  %303 = sbr.rel (%p301) target = $region58
                $region55: #{modality_encoder.1} parent=50 // loop_body
                  _
                $region56: #{modality_encoder.1} parent=50 // loop_footer
                  %s304 = sadd.s32 1, %s300
                $region57: #{modality_encoder.1} parent=50 // loop_footer_branch
                  %299 = sbr.rel target = $region53
                $region58: #{modality_encoder.1} parent=50 // loop_exit
                  _
                loop: start=0, step=1, limit=1
                $region59: #{modality_encoder.1} parent=50 // loop_pre_header
                  _
                $region60: #{modality_encoder.1} parent=50 // loop_header
                  %s309 = sphi 0, %s313
                  %p310 = scmp.ge.s32.totalorder %s309, 1
                  %s314 = sphi %s137, %s137
                  %s315 = sphi %s134, %s134
                $region61: #{modality_encoder.1} parent=50 // loop_header_branch
                  %312 = sbr.rel (%p310) target = $region65
                $region62: #{modality_encoder.1} parent=50 // loop_body
                  %v316 = vld [vmem:[%s314] sm:$0xf]
                  %317 = vst [vmem:[%s315] sm:$0xf] %v316
                  %v318 = vld [vmem:[%s314 + $0x4] sm:$0xf]
                  %319 = vst [vmem:[%s315 + $0x4] sm:$0xf] %v318
                  %v320 = vld [vmem:[%s314 + $0x8] sm:$0xf]
                  %321 = vst [vmem:[%s315 + $0x8] sm:$0xf] %v320
                  %v322 = vld [vmem:[%s314 + $0xc] sm:$0xf]
                  %323 = vst [vmem:[%s315 + $0xc] sm:$0xf] %v322
                  %v324 = vld [vmem:[%s314 + $0x10] sm:$0xf]
                  %325 = vst [vmem:[%s315 + $0x10] sm:$0xf] %v324
                  %v326 = vld [vmem:[%s314 + $0x14] sm:$0xf]
                  %327 = vst [vmem:[%s315 + $0x14] sm:$0xf] %v326
                  %v328 = vld [vmem:[%s314 + $0x18] sm:$0xf]
                  %329 = vst [vmem:[%s315 + $0x18] sm:$0xf] %v328
                  %v330 = vld [vmem:[%s314 + $0x1c] sm:$0xf]
                  %331 = vst [vmem:[%s315 + $0x1c] sm:$0xf] %v330
                  %v332 = vld [vmem:[%s314 + $0x20] sm:$0xf]
                  %333 = vst [vmem:[%s315 + $0x20] sm:$0xf] %v332
                  %v334 = vld [vmem:[%s314 + $0x24] sm:$0xf]
                  %335 = vst [vmem:[%s315 + $0x24] sm:$0xf] %v334
                  %v336 = vld [vmem:[%s314 + $0x28] sm:$0xf]
                  %337 = vst [vmem:[%s315 + $0x28] sm:$0xf] %v336
                  %v338 = vld [vmem:[%s314 + $0x2c] sm:$0xf]
                  %339 = vst [vmem:[%s315 + $0x2c] sm:$0xf] %v338
                  %v340 = vld [vmem:[%s314 + $0x30] sm:$0xf]
                  %341 = vst [vmem:[%s315 + $0x30] sm:$0xf] %v340
                  %v342 = vld [vmem:[%s314 + $0x34] sm:$0xf]
                  %343 = vst [vmem:[%s315 + $0x34] sm:$0xf] %v342
                  %v344 = vld [vmem:[%s314 + $0x38] sm:$0xf]
                  %345 = vst [vmem:[%s315 + $0x38] sm:$0xf] %v344
                  %v346 = vld [vmem:[%s314 + $0x3c] sm:$0xf]
                  %347 = vst [vmem:[%s315 + $0x3c] sm:$0xf] %v346
                  %v348 = vld [vmem:[%s314 + $0x40] sm:$0xf]
                  %349 = vst [vmem:[%s315 + $0x40] sm:$0xf] %v348
                  %v350 = vld [vmem:[%s314 + $0x44] sm:$0xf]
                  %351 = vst [vmem:[%s315 + $0x44] sm:$0xf] %v350
                  %v352 = vld [vmem:[%s314 + $0x90] sm:$0xf]
                  %353 = vst [vmem:[%s315 + $0x48] sm:$0xf] %v352
                  %v354 = vld [vmem:[%s314 + $0x94] sm:$0xf]
                  %355 = vst [vmem:[%s315 + $0x4c] sm:$0xf] %v354
                  %v356 = vld [vmem:[%s314 + $0x98] sm:$0xf]
                  %357 = vst [vmem:[%s315 + $0x50] sm:$0xf] %v356
                  %v358 = vld [vmem:[%s314 + $0x9c] sm:$0xf]
                  %359 = vst [vmem:[%s315 + $0x54] sm:$0xf] %v358
                  %v360 = vld [vmem:[%s314 + $0xa0] sm:$0xf]
                  %361 = vst [vmem:[%s315 + $0x58] sm:$0xf] %v360
                  %v362 = vld [vmem:[%s314 + $0xa4] sm:$0xf]
                  %363 = vst [vmem:[%s315 + $0x5c] sm:$0xf] %v362
                  %v364 = vld [vmem:[%s314 + $0xa8] sm:$0xf]
                  %365 = vst [vmem:[%s315 + $0x60] sm:$0xf] %v364
                  %v366 = vld [vmem:[%s314 + $0xac] sm:$0xf]
                  %367 = vst [vmem:[%s315 + $0x64] sm:$0xf] %v366
                  %v368 = vld [vmem:[%s314 + $0xb0] sm:$0xf]
                  %369 = vst [vmem:[%s315 + $0x68] sm:$0xf] %v368
                  %v370 = vld [vmem:[%s314 + $0xb4] sm:$0xf]
                  %371 = vst [vmem:[%s315 + $0x6c] sm:$0xf] %v370
                  %v372 = vld [vmem:[%s314 + $0xb8] sm:$0xf]
                  %373 = vst [vmem:[%s315 + $0x70] sm:$0xf] %v372
                  %v374 = vld [vmem:[%s314 + $0xbc] sm:$0xf]
                  %375 = vst [vmem:[%s315 + $0x74] sm:$0xf] %v374
                  %v376 = vld [vmem:[%s314 + $0xc0] sm:$0xf]
                  %377 = vst [vmem:[%s315 + $0x78] sm:$0xf] %v376
                  %v378 = vld [vmem:[%s314 + $0xc4] sm:$0xf]
                  %379 = vst [vmem:[%s315 + $0x7c] sm:$0xf] %v378
                  %v380 = vld [vmem:[%s314 + $0xc8] sm:$0xf]
                  %381 = vst [vmem:[%s315 + $0x80] sm:$0xf] %v380
                  %v382 = vld [vmem:[%s314 + $0xcc] sm:$0xf]
                  %383 = vst [vmem:[%s315 + $0x84] sm:$0xf] %v382
                  %v384 = vld [vmem:[%s314 + $0xd0] sm:$0xf]
                  %385 = vst [vmem:[%s315 + $0x88] sm:$0xf] %v384
                  %v386 = vld [vmem:[%s314 + $0xd4] sm:$0xf]
                  %387 = vst [vmem:[%s315 + $0x8c] sm:$0xf] %v386
                  %v388 = vld [vmem:[%s314 + $0x120] sm:$0xf]
                  %389 = vst [vmem:[%s315 + $0x90] sm:$0xf] %v388
                  %v390 = vld [vmem:[%s314 + $0x124] sm:$0xf]
                  %391 = vst [vmem:[%s315 + $0x94] sm:$0xf] %v390
                  %v392 = vld [vmem:[%s314 + $0x128] sm:$0xf]
                  %393 = vst [vmem:[%s315 + $0x98] sm:$0xf] %v392
                  %v394 = vld [vmem:[%s314 + $0x12c] sm:$0xf]
                  %395 = vst [vmem:[%s315 + $0x9c] sm:$0xf] %v394
                  %v396 = vld [vmem:[%s314 + $0x130] sm:$0xf]
                  %397 = vst [vmem:[%s315 + $0xa0] sm:$0xf] %v396
                  %v398 = vld [vmem:[%s314 + $0x134] sm:$0xf]
                  %399 = vst [vmem:[%s315 + $0xa4] sm:$0xf] %v398
                  %v400 = vld [vmem:[%s314 + $0x138] sm:$0xf]
                  %401 = vst [vmem:[%s315 + $0xa8] sm:$0xf] %v400
                  %v402 = vld [vmem:[%s314 + $0x13c] sm:$0xf]
                  %403 = vst [vmem:[%s315 + $0xac] sm:$0xf] %v402
                  %v404 = vld [vmem:[%s314 + $0x140] sm:$0xf]
                  %405 = vst [vmem:[%s315 + $0xb0] sm:$0xf] %v404
                  %v406 = vld [vmem:[%s314 + $0x144] sm:$0xf]
                  %407 = vst [vmem:[%s315 + $0xb4] sm:$0xf] %v406
                  %v408 = vld [vmem:[%s314 + $0x148] sm:$0xf]
                  %409 = vst [vmem:[%s315 + $0xb8] sm:$0xf] %v408
                  %v410 = vld [vmem:[%s314 + $0x14c] sm:$0xf]
                  %411 = vst [vmem:[%s315 + $0xbc] sm:$0xf] %v410
                  %v412 = vld [vmem:[%s314 + $0x150] sm:$0xf]
                  %413 = vst [vmem:[%s315 + $0xc0] sm:$0xf] %v412
                  %v414 = vld [vmem:[%s314 + $0x154] sm:$0xf]
                  %415 = vst [vmem:[%s315 + $0xc4] sm:$0xf] %v414
                  %v416 = vld [vmem:[%s314 + $0x158] sm:$0xf]
                  %417 = vst [vmem:[%s315 + $0xc8] sm:$0xf] %v416
                  %v418 = vld [vmem:[%s314 + $0x15c] sm:$0xf]
                  %419 = vst [vmem:[%s315 + $0xcc] sm:$0xf] %v418
                  %v420 = vld [vmem:[%s314 + $0x160] sm:$0xf]
                  %421 = vst [vmem:[%s315 + $0xd0] sm:$0xf] %v420
                  %v422 = vld [vmem:[%s314 + $0x164] sm:$0xf]
                  %423 = vst [vmem:[%s315 + $0xd4] sm:$0xf] %v422
                  %v424 = vld [vmem:[%s314 + $0x1b0] sm:$0xf]
                  %425 = vst [vmem:[%s315 + $0xd8] sm:$0xf] %v424
                  %v426 = vld [vmem:[%s314 + $0x1b4] sm:$0xf]
                  %427 = vst [vmem:[%s315 + $0xdc] sm:$0xf] %v426
                  %v428 = vld [vmem:[%s314 + $0x1b8] sm:$0xf]
                  %429 = vst [vmem:[%s315 + $0xe0] sm:$0xf] %v428
                  %v430 = vld [vmem:[%s314 + $0x1bc] sm:$0xf]
                  %431 = vst [vmem:[%s315 + $0xe4] sm:$0xf] %v430
                  %v432 = vld [vmem:[%s314 + $0x1c0] sm:$0xf]
                  %433 = vst [vmem:[%s315 + $0xe8] sm:$0xf] %v432
                  %v434 = vld [vmem:[%s314 + $0x1c4] sm:$0xf]
                  %435 = vst [vmem:[%s315 + $0xec] sm:$0xf] %v434
                  %v436 = vld [vmem:[%s314 + $0x1c8] sm:$0xf]
                  %437 = vst [vmem:[%s315 + $0xf0] sm:$0xf] %v436
                  %v438 = vld [vmem:[%s314 + $0x1cc] sm:$0xf]
                  %439 = vst [vmem:[%s315 + $0xf4] sm:$0xf] %v438
                  %v440 = vld [vmem:[%s314 + $0x1d0] sm:$0xf]
                  %441 = vst [vmem:[%s315 + $0xf8] sm:$0xf] %v440
                  %v442 = vld [vmem:[%s314 + $0x1d4] sm:$0xf]
                  %443 = vst [vmem:[%s315 + $0xfc] sm:$0xf] %v442
                  %v444 = vld [vmem:[%s314 + $0x1d8] sm:$0xf]
                  %445 = vst [vmem:[%s315 + $0x100] sm:$0xf] %v444
                  %v446 = vld [vmem:[%s314 + $0x1dc] sm:$0xf]
                  %447 = vst [vmem:[%s315 + $0x104] sm:$0xf] %v446
                  %v448 = vld [vmem:[%s314 + $0x1e0] sm:$0xf]
                  %449 = vst [vmem:[%s315 + $0x108] sm:$0xf] %v448
                  %v450 = vld [vmem:[%s314 + $0x1e4] sm:$0xf]
                  %451 = vst [vmem:[%s315 + $0x10c] sm:$0xf] %v450
                  %v452 = vld [vmem:[%s314 + $0x1e8] sm:$0xf]
                  %453 = vst [vmem:[%s315 + $0x110] sm:$0xf] %v452
                  %v454 = vld [vmem:[%s314 + $0x1ec] sm:$0xf]
                  %455 = vst [vmem:[%s315 + $0x114] sm:$0xf] %v454
                  %v456 = vld [vmem:[%s314 + $0x1f0] sm:$0xf]
                  %457 = vst [vmem:[%s315 + $0x118] sm:$0xf] %v456
                  %v458 = vld [vmem:[%s314 + $0x1f4] sm:$0xf]
                  %459 = vst [vmem:[%s315 + $0x11c] sm:$0xf] %v458
                $region63: #{modality_encoder.1} parent=50 // loop_footer
                  %s313 = sadd.s32 1, %s309
                $region64: #{modality_encoder.1} parent=50 // loop_footer_branch
                  %308 = sbr.rel target = $region60
                $region65: #{modality_encoder.1} parent=50 // loop_exit
                  _
              $region51: #{modality_encoder.1} parent=35 // pred_fallthru
                _
            $region36: #{modality_encoder.1} parent=31 // pred_fallthru
              _
            // Predicated region
            $region37: #{modality_encoder.1} parent=31 // pred_check
              _
            $region38: #{modality_encoder.1} parent=31 // pred_check_branch
              %143 = sbr.rel (0) target = $region40
            $region39: #{modality_encoder.1} parent=31 // pred_region
              loop: start=0, step=1, limit=1
              $region41: #{modality_encoder.1} parent=39 // loop_pre_header
                _
              $region42: #{modality_encoder.1} parent=39 // loop_header
                %s146 = sphi 0, %s150
                %p147 = scmp.ge.s32.totalorder %s146, 1
                %s151 = sphi %s137, %s137
                %s152 = sphi %s134, %s134
              $region43: #{modality_encoder.1} parent=39 // loop_header_branch
                %149 = sbr.rel (%p147) target = $region47
              $region44: #{modality_encoder.1} parent=39 // loop_body
                %v153 = vld [vmem:[%s151] sm:$0xf]
                %154 = vst [vmem:[%s152] sm:$0xf] %v153
                %v155 = vld [vmem:[%s151 + $0x4] sm:$0xf]
                %156 = vst [vmem:[%s152 + $0x4] sm:$0xf] %v155
                %v157 = vld [vmem:[%s151 + $0x8] sm:$0xf]
                %158 = vst [vmem:[%s152 + $0x8] sm:$0xf] %v157
                %v159 = vld [vmem:[%s151 + $0xc] sm:$0xf]
                %160 = vst [vmem:[%s152 + $0xc] sm:$0xf] %v159
                %v161 = vld [vmem:[%s151 + $0x10] sm:$0xf]
                %162 = vst [vmem:[%s152 + $0x10] sm:$0xf] %v161
                %v163 = vld [vmem:[%s151 + $0x14] sm:$0xf]
                %164 = vst [vmem:[%s152 + $0x14] sm:$0xf] %v163
                %v165 = vld [vmem:[%s151 + $0x18] sm:$0xf]
                %166 = vst [vmem:[%s152 + $0x18] sm:$0xf] %v165
                %v167 = vld [vmem:[%s151 + $0x1c] sm:$0xf]
                %168 = vst [vmem:[%s152 + $0x1c] sm:$0xf] %v167
                %v169 = vld [vmem:[%s151 + $0x20] sm:$0xf]
                %170 = vst [vmem:[%s152 + $0x20] sm:$0xf] %v169
                %v171 = vld [vmem:[%s151 + $0x24] sm:$0xf]
                %172 = vst [vmem:[%s152 + $0x24] sm:$0xf] %v171
                %v173 = vld [vmem:[%s151 + $0x28] sm:$0xf]
                %174 = vst [vmem:[%s152 + $0x28] sm:$0xf] %v173
                %v175 = vld [vmem:[%s151 + $0x2c] sm:$0xf]
                %176 = vst [vmem:[%s152 + $0x2c] sm:$0xf] %v175
                %v177 = vld [vmem:[%s151 + $0x30] sm:$0xf]
                %178 = vst [vmem:[%s152 + $0x30] sm:$0xf] %v177
                %v179 = vld [vmem:[%s151 + $0x34] sm:$0xf]
                %180 = vst [vmem:[%s152 + $0x34] sm:$0xf] %v179
                %v181 = vld [vmem:[%s151 + $0x38] sm:$0xf]
                %182 = vst [vmem:[%s152 + $0x38] sm:$0xf] %v181
                %v183 = vld [vmem:[%s151 + $0x3c] sm:$0xf]
                %184 = vst [vmem:[%s152 + $0x3c] sm:$0xf] %v183
                %v185 = vld [vmem:[%s151 + $0x40] sm:$0xf]
                %186 = vst [vmem:[%s152 + $0x40] sm:$0xf] %v185
                %v187 = vld [vmem:[%s151 + $0x44] sm:$0xf]
                %188 = vst [vmem:[%s152 + $0x44] sm:$0xf] %v187
                %v189 = vld [vmem:[%s151 + $0x90] sm:$0xf]
                %190 = vst [vmem:[%s152 + $0x48] sm:$0xf] %v189
                %v191 = vld [vmem:[%s151 + $0x94] sm:$0xf]
                %192 = vst [vmem:[%s152 + $0x4c] sm:$0xf] %v191
                %v193 = vld [vmem:[%s151 + $0x98] sm:$0xf]
                %194 = vst [vmem:[%s152 + $0x50] sm:$0xf] %v193
                %v195 = vld [vmem:[%s151 + $0x9c] sm:$0xf]
                %196 = vst [vmem:[%s152 + $0x54] sm:$0xf] %v195
                %v197 = vld [vmem:[%s151 + $0xa0] sm:$0xf]
                %198 = vst [vmem:[%s152 + $0x58] sm:$0xf] %v197
                %v199 = vld [vmem:[%s151 + $0xa4] sm:$0xf]
                %200 = vst [vmem:[%s152 + $0x5c] sm:$0xf] %v199
                %v201 = vld [vmem:[%s151 + $0xa8] sm:$0xf]
                %202 = vst [vmem:[%s152 + $0x60] sm:$0xf] %v201
                %v203 = vld [vmem:[%s151 + $0xac] sm:$0xf]
                %204 = vst [vmem:[%s152 + $0x64] sm:$0xf] %v203
                %v205 = vld [vmem:[%s151 + $0xb0] sm:$0xf]
                %206 = vst [vmem:[%s152 + $0x68] sm:$0xf] %v205
                %v207 = vld [vmem:[%s151 + $0xb4] sm:$0xf]
                %208 = vst [vmem:[%s152 + $0x6c] sm:$0xf] %v207
                %v209 = vld [vmem:[%s151 + $0xb8] sm:$0xf]
                %210 = vst [vmem:[%s152 + $0x70] sm:$0xf] %v209
                %v211 = vld [vmem:[%s151 + $0xbc] sm:$0xf]
                %212 = vst [vmem:[%s152 + $0x74] sm:$0xf] %v211
                %v213 = vld [vmem:[%s151 + $0xc0] sm:$0xf]
                %214 = vst [vmem:[%s152 + $0x78] sm:$0xf] %v213
                %v215 = vld [vmem:[%s151 + $0xc4] sm:$0xf]
                %216 = vst [vmem:[%s152 + $0x7c] sm:$0xf] %v215
                %v217 = vld [vmem:[%s151 + $0xc8] sm:$0xf]
                %218 = vst [vmem:[%s152 + $0x80] sm:$0xf] %v217
                %v219 = vld [vmem:[%s151 + $0xcc] sm:$0xf]
                %220 = vst [vmem:[%s152 + $0x84] sm:$0xf] %v219
                %v221 = vld [vmem:[%s151 + $0xd0] sm:$0xf]
                %222 = vst [vmem:[%s152 + $0x88] sm:$0xf] %v221
                %v223 = vld [vmem:[%s151 + $0xd4] sm:$0xf]
                %224 = vst [vmem:[%s152 + $0x8c] sm:$0xf] %v223
                %v225 = vld [vmem:[%s151 + $0x120] sm:$0xf]
                %226 = vst [vmem:[%s152 + $0x90] sm:$0xf] %v225
                %v227 = vld [vmem:[%s151 + $0x124] sm:$0xf]
                %228 = vst [vmem:[%s152 + $0x94] sm:$0xf] %v227
                %v229 = vld [vmem:[%s151 + $0x128] sm:$0xf]
                %230 = vst [vmem:[%s152 + $0x98] sm:$0xf] %v229
                %v231 = vld [vmem:[%s151 + $0x12c] sm:$0xf]
                %232 = vst [vmem:[%s152 + $0x9c] sm:$0xf] %v231
                %v233 = vld [vmem:[%s151 + $0x130] sm:$0xf]
                %234 = vst [vmem:[%s152 + $0xa0] sm:$0xf] %v233
                %v235 = vld [vmem:[%s151 + $0x134] sm:$0xf]
                %236 = vst [vmem:[%s152 + $0xa4] sm:$0xf] %v235
                %v237 = vld [vmem:[%s151 + $0x138] sm:$0xf]
                %238 = vst [vmem:[%s152 + $0xa8] sm:$0xf] %v237
                %v239 = vld [vmem:[%s151 + $0x13c] sm:$0xf]
                %240 = vst [vmem:[%s152 + $0xac] sm:$0xf] %v239
                %v241 = vld [vmem:[%s151 + $0x140] sm:$0xf]
                %242 = vst [vmem:[%s152 + $0xb0] sm:$0xf] %v241
                %v243 = vld [vmem:[%s151 + $0x144] sm:$0xf]
                %244 = vst [vmem:[%s152 + $0xb4] sm:$0xf] %v243
                %v245 = vld [vmem:[%s151 + $0x148] sm:$0xf]
                %246 = vst [vmem:[%s152 + $0xb8] sm:$0xf] %v245
                %v247 = vld [vmem:[%s151 + $0x14c] sm:$0xf]
                %248 = vst [vmem:[%s152 + $0xbc] sm:$0xf] %v247
                %v249 = vld [vmem:[%s151 + $0x150] sm:$0xf]
                %250 = vst [vmem:[%s152 + $0xc0] sm:$0xf] %v249
                %v251 = vld [vmem:[%s151 + $0x154] sm:$0xf]
                %252 = vst [vmem:[%s152 + $0xc4] sm:$0xf] %v251
                %v253 = vld [vmem:[%s151 + $0x158] sm:$0xf]
                %254 = vst [vmem:[%s152 + $0xc8] sm:$0xf] %v253
                %v255 = vld [vmem:[%s151 + $0x15c] sm:$0xf]
                %256 = vst [vmem:[%s152 + $0xcc] sm:$0xf] %v255
                %v257 = vld [vmem:[%s151 + $0x160] sm:$0xf]
                %258 = vst [vmem:[%s152 + $0xd0] sm:$0xf] %v257
                %v259 = vld [vmem:[%s151 + $0x164] sm:$0xf]
                %260 = vst [vmem:[%s152 + $0xd4] sm:$0xf] %v259
                %v261 = vld [vmem:[%s151 + $0x1b0] sm:$0xf]
                %262 = vst [vmem:[%s152 + $0xd8] sm:$0xf] %v261
                %v263 = vld [vmem:[%s151 + $0x1b4] sm:$0xf]
                %264 = vst [vmem:[%s152 + $0xdc] sm:$0xf] %v263
                %v265 = vld [vmem:[%s151 + $0x1b8] sm:$0xf]
                %266 = vst [vmem:[%s152 + $0xe0] sm:$0xf] %v265
                %v267 = vld [vmem:[%s151 + $0x1bc] sm:$0xf]
                %268 = vst [vmem:[%s152 + $0xe4] sm:$0xf] %v267
                %v269 = vld [vmem:[%s151 + $0x1c0] sm:$0xf]
                %270 = vst [vmem:[%s152 + $0xe8] sm:$0xf] %v269
                %v271 = vld [vmem:[%s151 + $0x1c4] sm:$0xf]
                %272 = vst [vmem:[%s152 + $0xec] sm:$0xf] %v271
                %v273 = vld [vmem:[%s151 + $0x1c8] sm:$0xf]
                %274 = vst [vmem:[%s152 + $0xf0] sm:$0xf] %v273
                %v275 = vld [vmem:[%s151 + $0x1cc] sm:$0xf]
                %276 = vst [vmem:[%s152 + $0xf4] sm:$0xf] %v275
                %v277 = vld [vmem:[%s151 + $0x1d0] sm:$0xf]
                %278 = vst [vmem:[%s152 + $0xf8] sm:$0xf] %v277
                %v279 = vld [vmem:[%s151 + $0x1d4] sm:$0xf]
                %280 = vst [vmem:[%s152 + $0xfc] sm:$0xf] %v279
                %v281 = vld [vmem:[%s151 + $0x1d8] sm:$0xf]
                %282 = vst [vmem:[%s152 + $0x100] sm:$0xf] %v281
                %v283 = vld [vmem:[%s151 + $0x1dc] sm:$0xf]
                %284 = vst [vmem:[%s152 + $0x104] sm:$0xf] %v283
                %v285 = vld [vmem:[%s151 + $0x1e0] sm:$0xf]
                %286 = vst [vmem:[%s152 + $0x108] sm:$0xf] %v285
                %v287 = vld [vmem:[%s151 + $0x1e4] sm:$0xf]
                %288 = vst [vmem:[%s152 + $0x10c] sm:$0xf] %v287
                %v289 = vld [vmem:[%s151 + $0x1e8] sm:$0xf]
                %290 = vst [vmem:[%s152 + $0x110] sm:$0xf] %v289
                %v291 = vld [vmem:[%s151 + $0x1ec] sm:$0xf]
                %292 = vst [vmem:[%s152 + $0x114] sm:$0xf] %v291
                %v293 = vld [vmem:[%s151 + $0x1f0] sm:$0xf]
                %294 = vst [vmem:[%s152 + $0x118] sm:$0xf] %v293
                %v295 = vld [vmem:[%s151 + $0x1f4] sm:$0xf]
                %296 = vst [vmem:[%s152 + $0x11c] sm:$0xf] %v295
              $region45: #{modality_encoder.1} parent=39 // loop_footer
                %s150 = sadd.s32 1, %s146
              $region46: #{modality_encoder.1} parent=39 // loop_footer_branch
                %145 = sbr.rel target = $region42
              $region47: #{modality_encoder.1} parent=39 // loop_exit
                _
            $region40: #{modality_encoder.1} parent=31 // pred_fallthru
              _
          $region32: #{modality_encoder.1} parent=27 // pred_fallthru
            _
          %460 = vnop
        $region28: #{modality_encoder.1} parent=23 // pred_fallthru
          _
      $region24: #{modality_encoder.1} parent=5 // pred_fallthru
        _
      %p461 = scmp.le.s32.totalorder 1, %s9
      %p462 = scmp.lt.s32.totalorder %s9, 3
      %p463 = pnand %p461, %p462
      %p464 = pneg %p463
      // Predicated region
      $region66: #{modality_encoder.1} parent=5 // pred_check
        _
      $region67: #{modality_encoder.1} parent=5 // pred_check_branch
        %466 = sbr.rel (%p463) target = $region69
      $region68: #{modality_encoder.1} parent=5 // pred_region
        %s467 = ssub.s32 %s9, 1
        %s468 = sand.u32 %s22, 1
        %s469 = sand.u32 %s22, 1
        %s470 = smul.addr %s469, 288
        %s471 = scalar_lea.vmem [#allocation2], %s470
        // Predicated region
        $region70: #{modality_encoder.1} parent=68 // pred_check
          %p472 = pneg %p35
        $region71: #{modality_encoder.1} parent=68 // pred_check_branch
          %474 = sbr.rel (%p472) target = $region73
        $region72: #{modality_encoder.1} parent=68 // pred_region
          _
        $region73: #{modality_encoder.1} parent=68 // pred_fallthru
          _
        %s475 = sand.u32 %s22, 1
        %s476 = sand.u32 %s22, 1
        %s477 = smul.addr %s476, 288
        %s478 = scalar_lea.vmem [#allocation2], %s477
        %p479 = pneg %p35
        %p480 = pneg %p32
        %p481 = pneg %p56
        %p482 = pneg %p53
        %p483 = pneg %p77
        %p484 = pneg %p74
        %p485 = pneg %p103
        %p486 = pneg %p100
        %s487 = smul.u32 8, %s14
        %p488 = scmp.lt.s32.totalorder %s487, 15
        %s489 = scalar_select %p488, %s487, 15
        %s490 = smul.addr %s489, 8
        %s491 = scalar_lea.vmem %s3, %s490
        %s492 = smul.u32 8, %s14
        %p493 = scmp.lt.s32.totalorder %s492, 15
        %s494 = scalar_select %p493, %s492, 15
        %s495 = smul.addr %s494, 8
        %s496 = scalar_lea.vmem %s3, %s495
        %s497 = smul.u32 8, %s14
        %v499 = vld [vmem:[%s471] sm:$0xf]
        %v500 = vld [vmem:[%s471 + $0x4] sm:$0x1]
        %v501 = vld [vmem:[%s471 + $0x8] sm:$0xf]
        %v502 = vld [vmem:[%s471 + $0xc] sm:$0x1]
        %v503 = vld [vmem:[%s471 + $0x10] sm:$0xf]
        %v504 = vld [vmem:[%s471 + $0x14] sm:$0x1]
        %v505 = vld [vmem:[%s471 + $0x18] sm:$0xf]
        %v506 = vld [vmem:[%s471 + $0x1c] sm:$0x1]
        %v507 = vld [vmem:[%s471 + $0x20] sm:$0xf]
        %v508 = vld [vmem:[%s471 + $0x24] sm:$0x1]
        %v509 = vld [vmem:[%s471 + $0x28] sm:$0xf]
        %v510 = vld [vmem:[%s471 + $0x2c] sm:$0x1]
        %v511 = vld [vmem:[%s471 + $0x30] sm:$0xf]
        %v512 = vld [vmem:[%s471 + $0x34] sm:$0x1]
        %v513 = vld [vmem:[%s471 + $0x38] sm:$0xf]
        %v514 = vld [vmem:[%s471 + $0x3c] sm:$0x1]
        %v515 = vld [vmem:[%s471 + $0x40] sm:$0xf]
        %v516 = vld [vmem:[%s471 + $0x44] sm:$0x1]
        %v517 = vld [vmem:[%s471 + $0x48] sm:$0xf]
        %v518 = vld [vmem:[%s471 + $0x4c] sm:$0x1]
        %v519 = vld [vmem:[%s471 + $0x50] sm:$0xf]
        %v520 = vld [vmem:[%s471 + $0x54] sm:$0x1]
        %v521 = vld [vmem:[%s471 + $0x58] sm:$0xf]
        %v522 = vld [vmem:[%s471 + $0x5c] sm:$0x1]
        %v523 = vld [vmem:[%s471 + $0x60] sm:$0xf]
        %v524 = vld [vmem:[%s471 + $0x64] sm:$0x1]
        %v525 = vld [vmem:[%s471 + $0x68] sm:$0xf]
        %v526 = vld [vmem:[%s471 + $0x6c] sm:$0x1]
        %v527 = vld [vmem:[%s471 + $0x70] sm:$0xf]
        %v528 = vld [vmem:[%s471 + $0x74] sm:$0x1]
        %v529 = vld [vmem:[%s471 + $0x78] sm:$0xf]
        %v530 = vld [vmem:[%s471 + $0x7c] sm:$0x1]
        %v531 = vld [vmem:[%s471 + $0x80] sm:$0xf]
        %v532 = vld [vmem:[%s471 + $0x84] sm:$0x1]
        %v533 = vld [vmem:[%s471 + $0x88] sm:$0xf]
        %v534 = vld [vmem:[%s471 + $0x8c] sm:$0x1]
        %v535 = vld [vmem:[%s471 + $0x90] sm:$0xf]
        %v536 = vld [vmem:[%s471 + $0x94] sm:$0x1]
        %v537 = vld [vmem:[%s471 + $0x98] sm:$0xf]
        %v538 = vld [vmem:[%s471 + $0x9c] sm:$0x1]
        %v539 = vld [vmem:[%s471 + $0xa0] sm:$0xf]
        %v540 = vld [vmem:[%s471 + $0xa4] sm:$0x1]
        %v541 = vld [vmem:[%s471 + $0xa8] sm:$0xf]
        %v542 = vld [vmem:[%s471 + $0xac] sm:$0x1]
        %v543 = vld [vmem:[%s471 + $0xb0] sm:$0xf]
        %v544 = vld [vmem:[%s471 + $0xb4] sm:$0x1]
        %v545 = vld [vmem:[%s471 + $0xb8] sm:$0xf]
        %v546 = vld [vmem:[%s471 + $0xbc] sm:$0x1]
        %v547 = vld [vmem:[%s471 + $0xc0] sm:$0xf]
        %v548 = vld [vmem:[%s471 + $0xc4] sm:$0x1]
        %v549 = vld [vmem:[%s471 + $0xc8] sm:$0xf]
        %v550 = vld [vmem:[%s471 + $0xcc] sm:$0x1]
        %v551 = vld [vmem:[%s471 + $0xd0] sm:$0xf]
        %v552 = vld [vmem:[%s471 + $0xd4] sm:$0x1]
        %v553 = vld [vmem:[%s471 + $0xd8] sm:$0xf]
        %v554 = vld [vmem:[%s471 + $0xdc] sm:$0x1]
        %v555 = vld [vmem:[%s471 + $0xe0] sm:$0xf]
        %v556 = vld [vmem:[%s471 + $0xe4] sm:$0x1]
        %v557 = vld [vmem:[%s471 + $0xe8] sm:$0xf]
        %v558 = vld [vmem:[%s471 + $0xec] sm:$0x1]
        %v559 = vld [vmem:[%s471 + $0xf0] sm:$0xf]
        %v560 = vld [vmem:[%s471 + $0xf4] sm:$0x1]
        %v561 = vld [vmem:[%s471 + $0xf8] sm:$0xf]
        %v562 = vld [vmem:[%s471 + $0xfc] sm:$0x1]
        %v563 = vld [vmem:[%s471 + $0x100] sm:$0xf]
        %v564 = vld [vmem:[%s471 + $0x104] sm:$0x1]
        %v565 = vld [vmem:[%s471 + $0x108] sm:$0xf]
        %v566 = vld [vmem:[%s471 + $0x10c] sm:$0x1]
        %v567 = vld [vmem:[%s471 + $0x110] sm:$0xf]
        %v568 = vld [vmem:[%s471 + $0x114] sm:$0x1]
        %v569 = vld [vmem:[%s471 + $0x118] sm:$0xf]
        %v570 = vld [vmem:[%s471 + $0x11c] sm:$0x1]
        %v571 = vld [vmem:[%s1] sm:$0x3]
        %vm572 = vsmask.f32 3328
        %vm573 = vsmask.f32 7440
        %vm574 = vmor %vm572, %vm573
        %v576 = vshrl.u32 %v499, 16
        %v578 = vrot.slane %v576, 4
        %v579 = vshll.u32 %v499, 16
        %v581 = vrot.slane %v579, 5
        %v582 = vor.u32 %v578, %v581
        %v583 = vrot.slane %v582, 4
        %v585 = vshll.u32 %v500, 16
        %v587 = vrot.slane %v585, 5
        %v588 = vsel %vm574, %v583, %v587
        %v590 = vshrl.u32 %v501, 16
        %v592 = vrot.slane %v590, 4
        %v593 = vshll.u32 %v501, 16
        %v595 = vrot.slane %v593, 5
        %v596 = vor.u32 %v592, %v595
        %v597 = vrot.slane %v596, 4
        %v599 = vshll.u32 %v502, 16
        %v601 = vrot.slane %v599, 5
        %v602 = vsel %vm574, %v597, %v601
        %v604 = vshrl.u32 %v503, 16
        %v606 = vrot.slane %v604, 4
        %v607 = vshll.u32 %v503, 16
        %v609 = vrot.slane %v607, 5
        %v610 = vor.u32 %v606, %v609
        %v611 = vrot.slane %v610, 4
        %v613 = vshll.u32 %v504, 16
        %v615 = vrot.slane %v613, 5
        %v616 = vsel %vm574, %v611, %v615
        %v618 = vshrl.u32 %v505, 16
        %v620 = vrot.slane %v618, 4
        %v621 = vshll.u32 %v505, 16
        %v623 = vrot.slane %v621, 5
        %v624 = vor.u32 %v620, %v623
        %v625 = vrot.slane %v624, 4
        %v627 = vshll.u32 %v506, 16
        %v629 = vrot.slane %v627, 5
        %v630 = vsel %vm574, %v625, %v629
        %v632 = vshrl.u32 %v507, 16
        %v634 = vrot.slane %v632, 4
        %v635 = vshll.u32 %v507, 16
        %v637 = vrot.slane %v635, 5
        %v638 = vor.u32 %v634, %v637
        %v639 = vrot.slane %v638, 4
        %v641 = vshll.u32 %v508, 16
        %v643 = vrot.slane %v641, 5
        %v644 = vsel %vm574, %v639, %v643
        %v646 = vshrl.u32 %v509, 16
        %v648 = vrot.slane %v646, 4
        %v649 = vshll.u32 %v509, 16
        %v651 = vrot.slane %v649, 5
        %v652 = vor.u32 %v648, %v651
        %v653 = vrot.slane %v652, 4
        %v655 = vshll.u32 %v510, 16
        %v657 = vrot.slane %v655, 5
        %v658 = vsel %vm574, %v653, %v657
        %v660 = vshrl.u32 %v511, 16
        %v662 = vrot.slane %v660, 4
        %v663 = vshll.u32 %v511, 16
        %v665 = vrot.slane %v663, 5
        %v666 = vor.u32 %v662, %v665
        %v667 = vrot.slane %v666, 4
        %v669 = vshll.u32 %v512, 16
        %v671 = vrot.slane %v669, 5
        %v672 = vsel %vm574, %v667, %v671
        %v674 = vshrl.u32 %v513, 16
        %v676 = vrot.slane %v674, 4
        %v677 = vshll.u32 %v513, 16
        %v679 = vrot.slane %v677, 5
        %v680 = vor.u32 %v676, %v679
        %v681 = vrot.slane %v680, 4
        %v683 = vshll.u32 %v514, 16
        %v685 = vrot.slane %v683, 5
        %v686 = vsel %vm574, %v681, %v685
        %v688 = vshrl.u32 %v535, 16
        %v690 = vrot.slane %v688, 4
        %v691 = vshll.u32 %v535, 16
        %v693 = vrot.slane %v691, 5
        %v694 = vor.u32 %v690, %v693
        %v695 = vrot.slane %v694, 4
        %v697 = vshll.u32 %v536, 16
        %v699 = vrot.slane %v697, 5
        %v700 = vsel %vm574, %v695, %v699
        %v702 = vshrl.u32 %v537, 16
        %v704 = vrot.slane %v702, 4
        %v705 = vshll.u32 %v537, 16
        %v707 = vrot.slane %v705, 5
        %v708 = vor.u32 %v704, %v707
        %v709 = vrot.slane %v708, 4
        %v711 = vshll.u32 %v538, 16
        %v713 = vrot.slane %v711, 5
        %v714 = vsel %vm574, %v709, %v713
        %v716 = vshrl.u32 %v539, 16
        %v718 = vrot.slane %v716, 4
        %v719 = vshll.u32 %v539, 16
        %v721 = vrot.slane %v719, 5
        %v722 = vor.u32 %v718, %v721
        %v723 = vrot.slane %v722, 4
        %v725 = vshll.u32 %v540, 16
        %v727 = vrot.slane %v725, 5
        %v728 = vsel %vm574, %v723, %v727
        %v730 = vshrl.u32 %v541, 16
        %v732 = vrot.slane %v730, 4
        %v733 = vshll.u32 %v541, 16
        %v735 = vrot.slane %v733, 5
        %v736 = vor.u32 %v732, %v735
        %v737 = vrot.slane %v736, 4
        %v739 = vshll.u32 %v542, 16
        %v741 = vrot.slane %v739, 5
        %v742 = vsel %vm574, %v737, %v741
        %v744 = vshrl.u32 %v543, 16
        %v746 = vrot.slane %v744, 4
        %v747 = vshll.u32 %v543, 16
        %v749 = vrot.slane %v747, 5
        %v750 = vor.u32 %v746, %v749
        %v751 = vrot.slane %v750, 4
        %v753 = vshll.u32 %v544, 16
        %v755 = vrot.slane %v753, 5
        %v756 = vsel %vm574, %v751, %v755
        %v758 = vshrl.u32 %v545, 16
        %v760 = vrot.slane %v758, 4
        %v761 = vshll.u32 %v545, 16
        %v763 = vrot.slane %v761, 5
        %v764 = vor.u32 %v760, %v763
        %v765 = vrot.slane %v764, 4
        %v767 = vshll.u32 %v546, 16
        %v769 = vrot.slane %v767, 5
        %v770 = vsel %vm574, %v765, %v769
        %v772 = vshrl.u32 %v547, 16
        %v774 = vrot.slane %v772, 4
        %v775 = vshll.u32 %v547, 16
        %v777 = vrot.slane %v775, 5
        %v778 = vor.u32 %v774, %v777
        %v779 = vrot.slane %v778, 4
        %v781 = vshll.u32 %v548, 16
        %v783 = vrot.slane %v781, 5
        %v784 = vsel %vm574, %v779, %v783
        %v786 = vshrl.u32 %v549, 16
        %v788 = vrot.slane %v786, 4
        %v789 = vshll.u32 %v549, 16
        %v791 = vrot.slane %v789, 5
        %v792 = vor.u32 %v788, %v791
        %v793 = vrot.slane %v792, 4
        %v795 = vshll.u32 %v550, 16
        %v797 = vrot.slane %v795, 5
        %v798 = vsel %vm574, %v793, %v797
        %s799 = scalar_lea.vmem %s1, 2
        %v800 = vld [vmem:[%s799] sm:$0x3]
        %v817 = vunpack.c.l.b16 %v517
        %v818 = vunpack.c.l.b16 %v519
        %v819 = vunpack.c.l.b16 %v521
        %v820 = vunpack.c.l.b16 %v523
        %v821 = vunpack.c.l.b16 %v525
        %v822 = vunpack.c.l.b16 %v527
        %v823 = vunpack.c.l.b16 %v529
        %v824 = vunpack.c.l.b16 %v531
        %v825 = vunpack.c.l.b16 %v588
        %v826 = vunpack.c.l.b16 %v602
        %v827 = vunpack.c.l.b16 %v616
        %v828 = vunpack.c.l.b16 %v630
        %v829 = vunpack.c.l.b16 %v644
        %v830 = vunpack.c.l.b16 %v658
        %v831 = vunpack.c.l.b16 %v672
        %v832 = vunpack.c.l.b16 %v686
        %v833 = vunpack.c.l.b16 %v553
        %v834 = vunpack.c.l.b16 %v555
        %v835 = vunpack.c.l.b16 %v557
        %v836 = vunpack.c.l.b16 %v559
        %v837 = vunpack.c.l.b16 %v561
        %v838 = vunpack.c.l.b16 %v563
        %v839 = vunpack.c.l.b16 %v565
        %v840 = vunpack.c.l.b16 %v567
        %v841 = vunpack.c.l.b16 %v700
        %v842 = vunpack.c.l.b16 %v714
        %v843 = vunpack.c.l.b16 %v728
        %v844 = vunpack.c.l.b16 %v742
        %v845 = vunpack.c.l.b16 %v756
        %v846 = vunpack.c.l.b16 %v770
        %v847 = vunpack.c.l.b16 %v784
        %v848 = vunpack.c.l.b16 %v798
        %v849 = vpack.c.b16 %v818, %v817
        %v850 = vpack.c.b16 %v820, %v819
        %v851 = vpack.c.b16 %v822, %v821
        %v852 = vpack.c.b16 %v824, %v823
        %v853 = vpack.c.b16 %v826, %v825
        %v854 = vpack.c.b16 %v828, %v827
        %v855 = vpack.c.b16 %v830, %v829
        %v856 = vpack.c.b16 %v832, %v831
        %v857 = vpack.c.b16 %v834, %v833
        %v858 = vpack.c.b16 %v836, %v835
        %v859 = vpack.c.b16 %v838, %v837
        %v860 = vpack.c.b16 %v840, %v839
        %v861 = vpack.c.b16 %v842, %v841
        %v862 = vpack.c.b16 %v844, %v843
        %v863 = vpack.c.b16 %v846, %v845
        %v864 = vpack.c.b16 %v848, %v847
        %vm865 = vcmask 31744
        %v867 = vsel %vm865, %v849, 0
        %v870 = vsel %vm865, %v850, 0
        %v873 = vsel %vm865, %v851, 0
        %v876 = vsel %vm865, %v852, 0
        %v879 = vsel %vm865, %v853, 0
        %v882 = vsel %vm865, %v854, 0
        %v885 = vsel %vm865, %v855, 0
        %v888 = vsel %vm865, %v856, 0
        %v891 = vsel %vm865, %v857, 0
        %v894 = vsel %vm865, %v858, 0
        %v897 = vsel %vm865, %v859, 0
        %v900 = vsel %vm865, %v860, 0
        %v903 = vsel %vm865, %v861, 0
        %v906 = vsel %vm865, %v862, 0
        %v909 = vsel %vm865, %v863, 0
        %v912 = vsel %vm865, %v864, 0
        %vm914 = vcmask 1041408
        %v916 = vsel %vm914, %v800, 0
        %918 = vmatprep.subr.bf16.mxu0 0
        %919 = vmatpush1.bf16.msra.mxu0 %v916
        %920 = vmatprep.subr.bf16.mxu0 0
        %921 = vmatpush1.bf16.msra.mxu0 0
        %922 = vmatprep.subr.bf16.mxu0 0
        %923 = vmatpush1.bf16.msra.mxu0 0
        %924 = vmatprep.subr.bf16.mxu0 0
        %925 = vmatpush1.bf16.msra.mxu0 0
        %926 = vmatprep.subr.bf16.mxu0 0
        %927 = vmatpush1.bf16.msra.mxu0 0
        %928 = vmatprep.subr.bf16.mxu0 0
        %929 = vmatpush1.bf16.msra.mxu0 0
        %930 = vmatprep.subr.bf16.mxu0 0
        %931 = vmatpush1.bf16.msra.mxu0 0
        %932 = vmatprep.subr.bf16.mxu0 0
        %933 = vmatpush1.bf16.msra.mxu0 0
        %934 = vmatprep.subr.bf16.mxu0 0
        %935 = vmatpush1.bf16.msra.mxu0 0
        %936 = vmatprep.subr.bf16.mxu0 0
        %937 = vmatpush1.bf16.msra.mxu0 0
        %938 = vmatprep.subr.bf16.mxu0 0
        %939 = vmatpush1.bf16.msra.mxu0 0
        %940 = vmatprep.subr.bf16.mxu0 0
        %941 = vmatpush1.bf16.msra.mxu0 0
        %942 = vmatprep.subr.bf16.mxu0 0
        %943 = vmatpush1.bf16.msra.mxu0 0
        %944 = vmatprep.subr.bf16.mxu0 0
        %945 = vmatpush1.bf16.msra.mxu0 0
        %946 = vmatprep.subr.bf16.mxu0 0
        %947 = vmatpush1.bf16.msra.mxu0 0
        %948 = vmatprep.subr.bf16.mxu0 0
        %949 = vmatpush1.bf16.msra.mxu0 0
        %950 = vmatprep.mubr.bf16.mxu0 0
        %951 = vmatmul.mubr.bf16.gmra.mrb[0].mxu0 %v867
        %v952 = vpop.f32.mrb[0].mxu0
        %v953 = vadd.f32 0.0, %v952
        %v954 = vpop.f32.mrb[0].mxu0
        %v955 = vpop.f32.mrb[0].mxu0
        %v956 = vadd.f32 0.0, %v955
        %v957 = vpop.f32.mrb[0].mxu0
        %958 = vmatprep.mubr.bf16.mxu0 0
        %959 = vmatmul.mubr.bf16.gmra.mrb[0].mxu0 %v870
        %v960 = vpop.f32.mrb[0].mxu0
        %v961 = vadd.f32 0.0, %v960
        %v962 = vpop.f32.mrb[0].mxu0
        %v963 = vpop.f32.mrb[0].mxu0
        %v964 = vadd.f32 0.0, %v963
        %v965 = vpop.f32.mrb[0].mxu0
        %966 = vmatprep.mubr.bf16.mxu0 0
        %967 = vmatmul.mubr.bf16.gmra.mrb[0].mxu0 %v873
        %v968 = vpop.f32.mrb[0].mxu0
        %v969 = vadd.f32 0.0, %v968
        %v970 = vpop.f32.mrb[0].mxu0
        %v971 = vpop.f32.mrb[0].mxu0
        %v972 = vadd.f32 0.0, %v971
        %v973 = vpop.f32.mrb[0].mxu0
        %974 = vmatprep.mubr.bf16.mxu0 0
        %975 = vmatmul.mubr.bf16.gmra.mrb[0].mxu0 %v876
        %v976 = vpop.f32.mrb[0].mxu0
        %v977 = vadd.f32 0.0, %v976
        %v978 = vpop.f32.mrb[0].mxu0
        %v979 = vpop.f32.mrb[0].mxu0
        %v980 = vadd.f32 0.0, %v979
        %v981 = vpop.f32.mrb[0].mxu0
        %982 = vmatprep.mubr.bf16.mxu0 0
        %983 = vmatmul.mubr.bf16.gmra.mrb[0].mxu0 %v879
        %v984 = vpop.f32.mrb[0].mxu0
        %v985 = vadd.f32 0.0, %v984
        %v986 = vpop.f32.mrb[0].mxu0
        %v987 = vpop.f32.mrb[0].mxu0
        %v988 = vadd.f32 0.0, %v987
        %v989 = vpop.f32.mrb[0].mxu0
        %990 = vmatprep.mubr.bf16.mxu0 0
        %991 = vmatmul.mubr.bf16.gmra.mrb[0].mxu0 %v882
        %v992 = vpop.f32.mrb[0].mxu0
        %v993 = vadd.f32 0.0, %v992
        %v994 = vpop.f32.mrb[0].mxu0
        %v995 = vpop.f32.mrb[0].mxu0
        %v996 = vadd.f32 0.0, %v995
        %v997 = vpop.f32.mrb[0].mxu0
        %998 = vmatprep.mubr.bf16.mxu0 0
        %999 = vmatmul.mubr.bf16.gmra.mrb[0].mxu0 %v885
        %v1000 = vpop.f32.mrb[0].mxu0
        %v1001 = vadd.f32 0.0, %v1000
        %v1002 = vpop.f32.mrb[0].mxu0
        %v1003 = vpop.f32.mrb[0].mxu0
        %v1004 = vadd.f32 0.0, %v1003
        %v1005 = vpop.f32.mrb[0].mxu0
        %1006 = vmatprep.mubr.bf16.mxu0 0
        %1007 = vmatmul.mubr.bf16.gmra.mrb[0].mxu0 %v888
        %v1008 = vpop.f32.mrb[0].mxu0
        %v1009 = vadd.f32 0.0, %v1008
        %v1010 = vpop.f32.mrb[0].mxu0
        %v1011 = vpop.f32.mrb[0].mxu0
        %v1012 = vadd.f32 0.0, %v1011
        %v1013 = vpop.f32.mrb[0].mxu0
        %1014 = vmatprep.mubr.bf16.mxu0 0
        %1015 = vmatmul.mubr.bf16.gmra.mrb[0].mxu0 %v891
        %v1016 = vpop.f32.mrb[0].mxu0
        %v1017 = vadd.f32 0.0, %v1016
        %v1018 = vpop.f32.mrb[0].mxu0
        %v1019 = vpop.f32.mrb[0].mxu0
        %v1020 = vadd.f32 0.0, %v1019
        %v1021 = vpop.f32.mrb[0].mxu0
        %1022 = vmatprep.mubr.bf16.mxu0 0
        %1023 = vmatmul.mubr.bf16.gmra.mrb[0].mxu0 %v894
        %v1024 = vpop.f32.mrb[0].mxu0
        %v1025 = vadd.f32 0.0, %v1024
        %v1026 = vpop.f32.mrb[0].mxu0
        %v1027 = vpop.f32.mrb[0].mxu0
        %v1028 = vadd.f32 0.0, %v1027
        %v1029 = vpop.f32.mrb[0].mxu0
        %1030 = vmatprep.mubr.bf16.mxu0 0
        %1031 = vmatmul.mubr.bf16.gmra.mrb[0].mxu0 %v897
        %v1032 = vpop.f32.mrb[0].mxu0
        %v1033 = vadd.f32 0.0, %v1032
        %v1034 = vpop.f32.mrb[0].mxu0
        %v1035 = vpop.f32.mrb[0].mxu0
        %v1036 = vadd.f32 0.0, %v1035
        %v1037 = vpop.f32.mrb[0].mxu0
        %1038 = vmatprep.mubr.bf16.mxu0 0
        %1039 = vmatmul.mubr.bf16.gmra.mrb[0].mxu0 %v900
        %v1040 = vpop.f32.mrb[0].mxu0
        %v1041 = vadd.f32 0.0, %v1040
        %v1042 = vpop.f32.mrb[0].mxu0
        %v1043 = vpop.f32.mrb[0].mxu0
        %v1044 = vadd.f32 0.0, %v1043
        %v1045 = vpop.f32.mrb[0].mxu0
        %1046 = vmatprep.mubr.bf16.mxu0 0
        %1047 = vmatmul.mubr.bf16.gmra.mrb[0].mxu0 %v903
        %v1048 = vpop.f32.mrb[0].mxu0
        %v1049 = vadd.f32 0.0, %v1048
        %v1050 = vpop.f32.mrb[0].mxu0
        %v1051 = vpop.f32.mrb[0].mxu0
        %v1052 = vadd.f32 0.0, %v1051
        %v1053 = vpop.f32.mrb[0].mxu0
        %1054 = vmatprep.mubr.bf16.mxu0 0
        %1055 = vmatmul.mubr.bf16.gmra.mrb[0].mxu0 %v906
        %v1056 = vpop.f32.mrb[0].mxu0
        %v1057 = vadd.f32 0.0, %v1056
        %v1058 = vpop.f32.mrb[0].mxu0
        %v1059 = vpop.f32.mrb[0].mxu0
        %v1060 = vadd.f32 0.0, %v1059
        %v1061 = vpop.f32.mrb[0].mxu0
        %1062 = vmatprep.mubr.bf16.mxu0 0
        %1063 = vmatmul.mubr.bf16.gmra.mrb[0].mxu0 %v909
        %v1064 = vpop.f32.mrb[0].mxu0
        %v1065 = vadd.f32 0.0, %v1064
        %v1066 = vpop.f32.mrb[0].mxu0
        %v1067 = vpop.f32.mrb[0].mxu0
        %v1068 = vadd.f32 0.0, %v1067
        %v1069 = vpop.f32.mrb[0].mxu0
        %1070 = vmatprep.mubr.bf16.mxu0 0
        %1071 = vmatmul.mubr.bf16.gmra.mrb[0].mxu0 %v912
        %v1072 = vpop.f32.mrb[0].mxu0
        %v1073 = vadd.f32 0.0, %v1072
        %v1074 = vpop.f32.mrb[0].mxu0
        %v1075 = vpop.f32.mrb[0].mxu0
        %v1076 = vadd.f32 0.0, %v1075
        %v1077 = vpop.f32.mrb[0].mxu0
        %1078 = vdwg.mxu0
        %v1095 = vunpack.c.l.b16 %v499
        %v1096 = vunpack.c.l.b16 %v501
        %v1097 = vunpack.c.l.b16 %v503
        %v1098 = vunpack.c.l.b16 %v505
        %v1099 = vunpack.c.l.b16 %v507
        %v1100 = vunpack.c.l.b16 %v509
        %v1101 = vunpack.c.l.b16 %v511
        %v1102 = vunpack.c.l.b16 %v513
        %v1103 = vunpack.c.l.b16 %v535
        %v1104 = vunpack.c.l.b16 %v537
        %v1105 = vunpack.c.l.b16 %v539
        %v1106 = vunpack.c.l.b16 %v541
        %v1107 = vunpack.c.l.b16 %v543
        %v1108 = vunpack.c.l.b16 %v545
        %v1109 = vunpack.c.l.b16 %v547
        %v1110 = vunpack.c.l.b16 %v549
        %v1111 = vpack.c.b16 %v1096, %v1095
        %v1112 = vpack.c.b16 %v1098, %v1097
        %v1113 = vpack.c.b16 %v1100, %v1099
        %v1114 = vpack.c.b16 %v1102, %v1101
        %v1115 = vpack.c.b16 %v1104, %v1103
        %v1116 = vpack.c.b16 %v1106, %v1105
        %v1117 = vpack.c.b16 %v1108, %v1107
        %v1118 = vpack.c.b16 %v1110, %v1109
        %v1120 = vsel %vm865, %v1111, 0
        %v1123 = vsel %vm865, %v1112, 0
        %v1126 = vsel %vm865, %v1113, 0
        %v1129 = vsel %vm865, %v1114, 0
        %v1132 = vsel %vm865, %v1115, 0
        %v1135 = vsel %vm865, %v1116, 0
        %v1138 = vsel %vm865, %v1117, 0
        %v1141 = vsel %vm865, %v1118, 0
        %v1144 = vsel %vm914, %v571, 0
        %1146 = vmatprep.subr.bf16.mxu0 0
        %1147 = vmatpush1.bf16.msra.mxu0 %v1144
        %1148 = vmatprep.subr.bf16.mxu0 0
        %1149 = vmatpush1.bf16.msra.mxu0 0
        %1150 = vmatprep.subr.bf16.mxu0 0
        %1151 = vmatpush1.bf16.msra.mxu0 0
        %1152 = vmatprep.subr.bf16.mxu0 0
        %1153 = vmatpush1.bf16.msra.mxu0 0
        %1154 = vmatprep.subr.bf16.mxu0 0
        %1155 = vmatpush1.bf16.msra.mxu0 0
        %1156 = vmatprep.subr.bf16.mxu0 0
        %1157 = vmatpush1.bf16.msra.mxu0 0
        %1158 = vmatprep.subr.bf16.mxu0 0
        %1159 = vmatpush1.bf16.msra.mxu0 0
        %1160 = vmatprep.subr.bf16.mxu0 0
        %1161 = vmatpush1.bf16.msra.mxu0 0
        %1162 = vmatprep.subr.bf16.mxu0 0
        %1163 = vmatpush1.bf16.msra.mxu0 0
        %1164 = vmatprep.subr.bf16.mxu0 0
        %1165 = vmatpush1.bf16.msra.mxu0 0
        %1166 = vmatprep.subr.bf16.mxu0 0
        %1167 = vmatpush1.bf16.msra.mxu0 0
        %1168 = vmatprep.subr.bf16.mxu0 0
        %1169 = vmatpush1.bf16.msra.mxu0 0
        %1170 = vmatprep.subr.bf16.mxu0 0
        %1171 = vmatpush1.bf16.msra.mxu0 0
        %1172 = vmatprep.subr.bf16.mxu0 0
        %1173 = vmatpush1.bf16.msra.mxu0 0
        %1174 = vmatprep.subr.bf16.mxu0 0
        %1175 = vmatpush1.bf16.msra.mxu0 0
        %1176 = vmatprep.subr.bf16.mxu0 0
        %1177 = vmatpush1.bf16.msra.mxu0 0
        %1178 = vmatprep.mubr.bf16.mxu0 0
        %1179 = vmatmul.mubr.bf16.gmra.mrb[0].mxu0 %v1120
        %v1180 = vpop.f32.mrb[0].mxu0
        %v1181 = vadd.f32 %v953, %v1180
        %v1182 = vpop.f32.mrb[0].mxu0
        %v1183 = vpop.f32.mrb[0].mxu0
        %v1184 = vadd.f32 %v956, %v1183
        %v1185 = vpop.f32.mrb[0].mxu0
        %1186 = vmatprep.mubr.bf16.mxu0 0
        %1187 = vmatmul.mubr.bf16.gmra.mrb[0].mxu0 %v1123
        %v1188 = vpop.f32.mrb[0].mxu0
        %v1189 = vadd.f32 %v961, %v1188
        %v1190 = vpop.f32.mrb[0].mxu0
        %v1191 = vpop.f32.mrb[0].mxu0
        %v1192 = vadd.f32 %v964, %v1191
        %v1193 = vpop.f32.mrb[0].mxu0
        %1194 = vmatprep.mubr.bf16.mxu0 0
        %1195 = vmatmul.mubr.bf16.gmra.mrb[0].mxu0 %v1126
        %v1196 = vpop.f32.mrb[0].mxu0
        %v1197 = vadd.f32 %v969, %v1196
        %v1198 = vpop.f32.mrb[0].mxu0
        %v1199 = vpop.f32.mrb[0].mxu0
        %v1200 = vadd.f32 %v972, %v1199
        %v1201 = vpop.f32.mrb[0].mxu0
        %1202 = vmatprep.mubr.bf16.mxu0 0
        %1203 = vmatmul.mubr.bf16.gmra.mrb[0].mxu0 %v1129
        %v1204 = vpop.f32.mrb[0].mxu0
        %v1205 = vadd.f32 %v977, %v1204
        %v1206 = vpop.f32.mrb[0].mxu0
        %v1207 = vpop.f32.mrb[0].mxu0
        %v1208 = vadd.f32 %v980, %v1207
        %v1209 = vpop.f32.mrb[0].mxu0
        %1210 = vmatprep.mubr.bf16.mxu0 0
        %1211 = vmatmul.mubr.bf16.gmra.mrb[0].mxu0 %v867
        %v1212 = vpop.f32.mrb[0].mxu0
        %v1213 = vadd.f32 %v985, %v1212
        %v1214 = vpop.f32.mrb[0].mxu0
        %v1215 = vpop.f32.mrb[0].mxu0
        %v1216 = vadd.f32 %v988, %v1215
        %v1217 = vpop.f32.mrb[0].mxu0
        %1218 = vmatprep.mubr.bf16.mxu0 0
        %1219 = vmatmul.mubr.bf16.gmra.mrb[0].mxu0 %v870
        %v1220 = vpop.f32.mrb[0].mxu0
        %v1221 = vadd.f32 %v993, %v1220
        %v1222 = vpop.f32.mrb[0].mxu0
        %v1223 = vpop.f32.mrb[0].mxu0
        %v1224 = vadd.f32 %v996, %v1223
        %v1225 = vpop.f32.mrb[0].mxu0
        %1226 = vmatprep.mubr.bf16.mxu0 0
        %1227 = vmatmul.mubr.bf16.gmra.mrb[0].mxu0 %v873
        %v1228 = vpop.f32.mrb[0].mxu0
        %v1229 = vadd.f32 %v1001, %v1228
        %v1230 = vpop.f32.mrb[0].mxu0
        %v1231 = vpop.f32.mrb[0].mxu0
        %v1232 = vadd.f32 %v1004, %v1231
        %v1233 = vpop.f32.mrb[0].mxu0
        %1234 = vmatprep.mubr.bf16.mxu0 0
        %1235 = vmatmul.mubr.bf16.gmra.mrb[0].mxu0 %v876
        %v1236 = vpop.f32.mrb[0].mxu0
        %v1237 = vadd.f32 %v1009, %v1236
        %v1238 = vpop.f32.mrb[0].mxu0
        %v1239 = vpop.f32.mrb[0].mxu0
        %v1240 = vadd.f32 %v1012, %v1239
        %v1241 = vpop.f32.mrb[0].mxu0
        %1242 = vmatprep.mubr.bf16.mxu0 0
        %1243 = vmatmul.mubr.bf16.gmra.mrb[0].mxu0 %v1132
        %v1244 = vpop.f32.mrb[0].mxu0
        %v1245 = vadd.f32 %v1017, %v1244
        %v1246 = vpop.f32.mrb[0].mxu0
        %v1247 = vpop.f32.mrb[0].mxu0
        %v1248 = vadd.f32 %v1020, %v1247
        %v1249 = vpop.f32.mrb[0].mxu0
        %1250 = vmatprep.mubr.bf16.mxu0 0
        %1251 = vmatmul.mubr.bf16.gmra.mrb[0].mxu0 %v1135
        %v1252 = vpop.f32.mrb[0].mxu0
        %v1253 = vadd.f32 %v1025, %v1252
        %v1254 = vpop.f32.mrb[0].mxu0
        %v1255 = vpop.f32.mrb[0].mxu0
        %v1256 = vadd.f32 %v1028, %v1255
        %v1257 = vpop.f32.mrb[0].mxu0
        %1258 = vmatprep.mubr.bf16.mxu0 0
        %1259 = vmatmul.mubr.bf16.gmra.mrb[0].mxu0 %v1138
        %v1260 = vpop.f32.mrb[0].mxu0
        %v1261 = vadd.f32 %v1033, %v1260
        %v1262 = vpop.f32.mrb[0].mxu0
        %v1263 = vpop.f32.mrb[0].mxu0
        %v1264 = vadd.f32 %v1036, %v1263
        %v1265 = vpop.f32.mrb[0].mxu0
        %1266 = vmatprep.mubr.bf16.mxu0 0
        %1267 = vmatmul.mubr.bf16.gmra.mrb[0].mxu0 %v1141
        %v1268 = vpop.f32.mrb[0].mxu0
        %v1269 = vadd.f32 %v1041, %v1268
        %v1270 = vpop.f32.mrb[0].mxu0
        %v1271 = vpop.f32.mrb[0].mxu0
        %v1272 = vadd.f32 %v1044, %v1271
        %v1273 = vpop.f32.mrb[0].mxu0
        %1274 = vmatprep.mubr.bf16.mxu0 0
        %1275 = vmatmul.mubr.bf16.gmra.mrb[0].mxu0 %v891
        %v1276 = vpop.f32.mrb[0].mxu0
        %v1277 = vadd.f32 %v1049, %v1276
        %v1278 = vpop.f32.mrb[0].mxu0
        %v1279 = vpop.f32.mrb[0].mxu0
        %v1280 = vadd.f32 %v1052, %v1279
        %v1281 = vpop.f32.mrb[0].mxu0
        %1282 = vmatprep.mubr.bf16.mxu0 0
        %1283 = vmatmul.mubr.bf16.gmra.mrb[0].mxu0 %v894
        %v1284 = vpop.f32.mrb[0].mxu0
        %v1285 = vadd.f32 %v1057, %v1284
        %v1286 = vpop.f32.mrb[0].mxu0
        %v1287 = vpop.f32.mrb[0].mxu0
        %v1288 = vadd.f32 %v1060, %v1287
        %v1289 = vpop.f32.mrb[0].mxu0
        %1290 = vmatprep.mubr.bf16.mxu0 0
        %1291 = vmatmul.mubr.bf16.gmra.mrb[0].mxu0 %v897
        %v1292 = vpop.f32.mrb[0].mxu0
        %v1293 = vadd.f32 %v1065, %v1292
        %v1294 = vpop.f32.mrb[0].mxu0
        %v1295 = vpop.f32.mrb[0].mxu0
        %v1296 = vadd.f32 %v1068, %v1295
        %v1297 = vpop.f32.mrb[0].mxu0
        %1298 = vmatprep.mubr.bf16.mxu0 0
        %1299 = vmatmul.mubr.bf16.gmra.mrb[0].mxu0 %v900
        %v1300 = vpop.f32.mrb[0].mxu0
        %v1301 = vadd.f32 %v1073, %v1300
        %v1302 = vpop.f32.mrb[0].mxu0
        %v1303 = vpop.f32.mrb[0].mxu0
        %v1304 = vadd.f32 %v1076, %v1303
        %v1305 = vpop.f32.mrb[0].mxu0
        %1306 = vdwg.mxu0
        %v1308 = vshrl.u32 %v517, 16
        %v1310 = vrot.slane %v1308, 4
        %v1311 = vshll.u32 %v517, 16
        %v1313 = vrot.slane %v1311, 5
        %v1314 = vor.u32 %v1310, %v1313
        %v1315 = vrot.slane %v1314, 4
        %v1317 = vshll.u32 %v518, 16
        %v1319 = vrot.slane %v1317, 5
        %v1320 = vsel %vm574, %v1315, %v1319
        %v1322 = vshrl.u32 %v519, 16
        %v1324 = vrot.slane %v1322, 4
        %v1325 = vshll.u32 %v519, 16
        %v1327 = vrot.slane %v1325, 5
        %v1328 = vor.u32 %v1324, %v1327
        %v1329 = vrot.slane %v1328, 4
        %v1331 = vshll.u32 %v520, 16
        %v1333 = vrot.slane %v1331, 5
        %v1334 = vsel %vm574, %v1329, %v1333
        %v1336 = vshrl.u32 %v521, 16
        %v1338 = vrot.slane %v1336, 4
        %v1339 = vshll.u32 %v521, 16
        %v1341 = vrot.slane %v1339, 5
        %v1342 = vor.u32 %v1338, %v1341
        %v1343 = vrot.slane %v1342, 4
        %v1345 = vshll.u32 %v522, 16
        %v1347 = vrot.slane %v1345, 5
        %v1348 = vsel %vm574, %v1343, %v1347
        %v1350 = vshrl.u32 %v523, 16
        %v1352 = vrot.slane %v1350, 4
        %v1353 = vshll.u32 %v523, 16
        %v1355 = vrot.slane %v1353, 5
        %v1356 = vor.u32 %v1352, %v1355
        %v1357 = vrot.slane %v1356, 4
        %v1359 = vshll.u32 %v524, 16
        %v1361 = vrot.slane %v1359, 5
        %v1362 = vsel %vm574, %v1357, %v1361
        %v1364 = vshrl.u32 %v525, 16
        %v1366 = vrot.slane %v1364, 4
        %v1367 = vshll.u32 %v525, 16
        %v1369 = vrot.slane %v1367, 5
        %v1370 = vor.u32 %v1366, %v1369
        %v1371 = vrot.slane %v1370, 4
        %v1373 = vshll.u32 %v526, 16
        %v1375 = vrot.slane %v1373, 5
        %v1376 = vsel %vm574, %v1371, %v1375
        %v1378 = vshrl.u32 %v527, 16
        %v1380 = vrot.slane %v1378, 4
        %v1381 = vshll.u32 %v527, 16
        %v1383 = vrot.slane %v1381, 5
        %v1384 = vor.u32 %v1380, %v1383
        %v1385 = vrot.slane %v1384, 4
        %v1387 = vshll.u32 %v528, 16
        %v1389 = vrot.slane %v1387, 5
        %v1390 = vsel %vm574, %v1385, %v1389
        %v1392 = vshrl.u32 %v529, 16
        %v1394 = vrot.slane %v1392, 4
        %v1395 = vshll.u32 %v529, 16
        %v1397 = vrot.slane %v1395, 5
        %v1398 = vor.u32 %v1394, %v1397
        %v1399 = vrot.slane %v1398, 4
        %v1401 = vshll.u32 %v530, 16
        %v1403 = vrot.slane %v1401, 5
        %v1404 = vsel %vm574, %v1399, %v1403
        %v1406 = vshrl.u32 %v531, 16
        %v1408 = vrot.slane %v1406, 4
        %v1409 = vshll.u32 %v531, 16
        %v1411 = vrot.slane %v1409, 5
        %v1412 = vor.u32 %v1408, %v1411
        %v1413 = vrot.slane %v1412, 4
        %v1415 = vshll.u32 %v532, 16
        %v1417 = vrot.slane %v1415, 5
        %v1418 = vsel %vm574, %v1413, %v1417
        %v1420 = vshrl.u32 %v553, 16
        %v1422 = vrot.slane %v1420, 4
        %v1423 = vshll.u32 %v553, 16
        %v1425 = vrot.slane %v1423, 5
        %v1426 = vor.u32 %v1422, %v1425
        %v1427 = vrot.slane %v1426, 4
        %v1429 = vshll.u32 %v554, 16
        %v1431 = vrot.slane %v1429, 5
        %v1432 = vsel %vm574, %v1427, %v1431
        %v1434 = vshrl.u32 %v555, 16
        %v1436 = vrot.slane %v1434, 4
        %v1437 = vshll.u32 %v555, 16
        %v1439 = vrot.slane %v1437, 5
        %v1440 = vor.u32 %v1436, %v1439
        %v1441 = vrot.slane %v1440, 4
        %v1443 = vshll.u32 %v556, 16
        %v1445 = vrot.slane %v1443, 5
        %v1446 = vsel %vm574, %v1441, %v1445
        %v1448 = vshrl.u32 %v557, 16
        %v1450 = vrot.slane %v1448, 4
        %v1451 = vshll.u32 %v557, 16
        %v1453 = vrot.slane %v1451, 5
        %v1454 = vor.u32 %v1450, %v1453
        %v1455 = vrot.slane %v1454, 4
        %v1457 = vshll.u32 %v558, 16
        %v1459 = vrot.slane %v1457, 5
        %v1460 = vsel %vm574, %v1455, %v1459
        %v1462 = vshrl.u32 %v559, 16
        %v1464 = vrot.slane %v1462, 4
        %v1465 = vshll.u32 %v559, 16
        %v1467 = vrot.slane %v1465, 5
        %v1468 = vor.u32 %v1464, %v1467
        %v1469 = vrot.slane %v1468, 4
        %v1471 = vshll.u32 %v560, 16
        %v1473 = vrot.slane %v1471, 5
        %v1474 = vsel %vm574, %v1469, %v1473
        %v1476 = vshrl.u32 %v561, 16
        %v1478 = vrot.slane %v1476, 4
        %v1479 = vshll.u32 %v561, 16
        %v1481 = vrot.slane %v1479, 5
        %v1482 = vor.u32 %v1478, %v1481
        %v1483 = vrot.slane %v1482, 4
        %v1485 = vshll.u32 %v562, 16
        %v1487 = vrot.slane %v1485, 5
        %v1488 = vsel %vm574, %v1483, %v1487
        %v1490 = vshrl.u32 %v563, 16
        %v1492 = vrot.slane %v1490, 4
        %v1493 = vshll.u32 %v563, 16
        %v1495 = vrot.slane %v1493, 5
        %v1496 = vor.u32 %v1492, %v1495
        %v1497 = vrot.slane %v1496, 4
        %v1499 = vshll.u32 %v564, 16
        %v1501 = vrot.slane %v1499, 5
        %v1502 = vsel %vm574, %v1497, %v1501
        %v1504 = vshrl.u32 %v565, 16
        %v1506 = vrot.slane %v1504, 4
        %v1507 = vshll.u32 %v565, 16
        %v1509 = vrot.slane %v1507, 5
        %v1510 = vor.u32 %v1506, %v1509
        %v1511 = vrot.slane %v1510, 4
        %v1513 = vshll.u32 %v566, 16
        %v1515 = vrot.slane %v1513, 5
        %v1516 = vsel %vm574, %v1511, %v1515
        %v1518 = vshrl.u32 %v567, 16
        %v1520 = vrot.slane %v1518, 4
        %v1521 = vshll.u32 %v567, 16
        %v1523 = vrot.slane %v1521, 5
        %v1524 = vor.u32 %v1520, %v1523
        %v1525 = vrot.slane %v1524, 4
        %v1527 = vshll.u32 %v568, 16
        %v1529 = vrot.slane %v1527, 5
        %v1530 = vsel %vm574, %v1525, %v1529
        %s1531 = scalar_lea.vmem %s1, 4
        %v1532 = vld [vmem:[%s1531] sm:$0x3]
        %v1533 = vunpack.c.l.b16 %v1320
        %v1534 = vunpack.c.l.b16 %v1334
        %v1535 = vunpack.c.l.b16 %v1348
        %v1536 = vunpack.c.l.b16 %v1362
        %v1537 = vunpack.c.l.b16 %v1376
        %v1538 = vunpack.c.l.b16 %v1390
        %v1539 = vunpack.c.l.b16 %v1404
        %v1540 = vunpack.c.l.b16 %v1418
        %v1541 = vunpack.c.l.b16 %v1432
        %v1542 = vunpack.c.l.b16 %v1446
        %v1543 = vunpack.c.l.b16 %v1460
        %v1544 = vunpack.c.l.b16 %v1474
        %v1545 = vunpack.c.l.b16 %v1488
        %v1546 = vunpack.c.l.b16 %v1502
        %v1547 = vunpack.c.l.b16 %v1516
        %v1548 = vunpack.c.l.b16 %v1530
        %v1549 = vpack.c.b16 %v1534, %v1533
        %v1550 = vpack.c.b16 %v1536, %v1535
        %v1551 = vpack.c.b16 %v1538, %v1537
        %v1552 = vpack.c.b16 %v1540, %v1539
        %v1553 = vpack.c.b16 %v1542, %v1541
        %v1554 = vpack.c.b16 %v1544, %v1543
        %v1555 = vpack.c.b16 %v1546, %v1545
        %v1556 = vpack.c.b16 %v1548, %v1547
        %v1558 = vsel %vm865, %v1549, 0
        %v1561 = vsel %vm865, %v1550, 0
        %v1564 = vsel %vm865, %v1551, 0
        %v1567 = vsel %vm865, %v1552, 0
        %v1570 = vsel %vm865, %v1553, 0
        %v1573 = vsel %vm865, %v1554, 0
        %v1576 = vsel %vm865, %v1555, 0
        %v1579 = vsel %vm865, %v1556, 0
        %v1582 = vsel %vm914, %v1532, 0
        %1584 = vmatprep.subr.bf16.mxu0 0
        %1585 = vmatpush1.bf16.msra.mxu0 %v1582
        %1586 = vmatprep.subr.bf16.mxu0 0
        %1587 = vmatpush1.bf16.msra.mxu0 0
        %1588 = vmatprep.subr.bf16.mxu0 0
        %1589 = vmatpush1.bf16.msra.mxu0 0
        %1590 = vmatprep.subr.bf16.mxu0 0
        %1591 = vmatpush1.bf16.msra.mxu0 0
        %1592 = vmatprep.subr.bf16.mxu0 0
        %1593 = vmatpush1.bf16.msra.mxu0 0
        %1594 = vmatprep.subr.bf16.mxu0 0
        %1595 = vmatpush1.bf16.msra.mxu0 0
        %1596 = vmatprep.subr.bf16.mxu0 0
        %1597 = vmatpush1.bf16.msra.mxu0 0
        %1598 = vmatprep.subr.bf16.mxu0 0
        %1599 = vmatpush1.bf16.msra.mxu0 0
        %1600 = vmatprep.subr.bf16.mxu0 0
        %1601 = vmatpush1.bf16.msra.mxu0 0
        %1602 = vmatprep.subr.bf16.mxu0 0
        %1603 = vmatpush1.bf16.msra.mxu0 0
        %1604 = vmatprep.subr.bf16.mxu0 0
        %1605 = vmatpush1.bf16.msra.mxu0 0
        %1606 = vmatprep.subr.bf16.mxu0 0
        %1607 = vmatpush1.bf16.msra.mxu0 0
        %1608 = vmatprep.subr.bf16.mxu0 0
        %1609 = vmatpush1.bf16.msra.mxu0 0
        %1610 = vmatprep.subr.bf16.mxu0 0
        %1611 = vmatpush1.bf16.msra.mxu0 0
        %1612 = vmatprep.subr.bf16.mxu0 0
        %1613 = vmatpush1.bf16.msra.mxu0 0
        %1614 = vmatprep.subr.bf16.mxu0 0
        %1615 = vmatpush1.bf16.msra.mxu0 0
        %1616 = vmatprep.mubr.bf16.mxu0 0
        %1617 = vmatmul.mubr.bf16.gmra.mrb[0].mxu0 %v879
        %v1618 = vpop.f32.mrb[0].mxu0
        %v1619 = vadd.f32 0.0, %v1618
        %v1620 = vpop.f32.mrb[0].mxu0
        %v1621 = vpop.f32.mrb[0].mxu0
        %v1622 = vadd.f32 0.0, %v1621
        %v1623 = vpop.f32.mrb[0].mxu0
        %1624 = vmatprep.mubr.bf16.mxu0 0
        %1625 = vmatmul.mubr.bf16.gmra.mrb[0].mxu0 %v882
        %v1626 = vpop.f32.mrb[0].mxu0
        %v1627 = vadd.f32 0.0, %v1626
        %v1628 = vpop.f32.mrb[0].mxu0
        %v1629 = vpop.f32.mrb[0].mxu0
        %v1630 = vadd.f32 0.0, %v1629
        %v1631 = vpop.f32.mrb[0].mxu0
        %1632 = vmatprep.mubr.bf16.mxu0 0
        %1633 = vmatmul.mubr.bf16.gmra.mrb[0].mxu0 %v885
        %v1634 = vpop.f32.mrb[0].mxu0
        %v1635 = vadd.f32 0.0, %v1634
        %v1636 = vpop.f32.mrb[0].mxu0
        %v1637 = vpop.f32.mrb[0].mxu0
        %v1638 = vadd.f32 0.0, %v1637
        %v1639 = vpop.f32.mrb[0].mxu0
        %1640 = vmatprep.mubr.bf16.mxu0 0
        %1641 = vmatmul.mubr.bf16.gmra.mrb[0].mxu0 %v888
        %v1642 = vpop.f32.mrb[0].mxu0
        %v1643 = vadd.f32 0.0, %v1642
        %v1644 = vpop.f32.mrb[0].mxu0
        %v1645 = vpop.f32.mrb[0].mxu0
        %v1646 = vadd.f32 0.0, %v1645
        %v1647 = vpop.f32.mrb[0].mxu0
        %1648 = vmatprep.mubr.bf16.mxu0 0
        %1649 = vmatmul.mubr.bf16.gmra.mrb[0].mxu0 %v1558
        %v1650 = vpop.f32.mrb[0].mxu0
        %v1651 = vadd.f32 0.0, %v1650
        %v1652 = vpop.f32.mrb[0].mxu0
        %v1653 = vpop.f32.mrb[0].mxu0
        %v1654 = vadd.f32 0.0, %v1653
        %v1655 = vpop.f32.mrb[0].mxu0
        %1656 = vmatprep.mubr.bf16.mxu0 0
        %1657 = vmatmul.mubr.bf16.gmra.mrb[0].mxu0 %v1561
        %v1658 = vpop.f32.mrb[0].mxu0
        %v1659 = vadd.f32 0.0, %v1658
        %v1660 = vpop.f32.mrb[0].mxu0
        %v1661 = vpop.f32.mrb[0].mxu0
        %v1662 = vadd.f32 0.0, %v1661
        %v1663 = vpop.f32.mrb[0].mxu0
        %1664 = vmatprep.mubr.bf16.mxu0 0
        %1665 = vmatmul.mubr.bf16.gmra.mrb[0].mxu0 %v1564
        %v1666 = vpop.f32.mrb[0].mxu0
        %v1667 = vadd.f32 0.0, %v1666
        %v1668 = vpop.f32.mrb[0].mxu0
        %v1669 = vpop.f32.mrb[0].mxu0
        %v1670 = vadd.f32 0.0, %v1669
        %v1671 = vpop.f32.mrb[0].mxu0
        %1672 = vmatprep.mubr.bf16.mxu0 0
        %1673 = vmatmul.mubr.bf16.gmra.mrb[0].mxu0 %v1567
        %v1674 = vpop.f32.mrb[0].mxu0
        %v1675 = vadd.f32 0.0, %v1674
        %v1676 = vpop.f32.mrb[0].mxu0
        %v1677 = vpop.f32.mrb[0].mxu0
        %v1678 = vadd.f32 0.0, %v1677
        %v1679 = vpop.f32.mrb[0].mxu0
        %1680 = vmatprep.mubr.bf16.mxu0 0
        %1681 = vmatmul.mubr.bf16.gmra.mrb[0].mxu0 %v903
        %v1682 = vpop.f32.mrb[0].mxu0
        %v1683 = vadd.f32 0.0, %v1682
        %v1684 = vpop.f32.mrb[0].mxu0
        %v1685 = vpop.f32.mrb[0].mxu0
        %v1686 = vadd.f32 0.0, %v1685
        %v1687 = vpop.f32.mrb[0].mxu0
        %1688 = vmatprep.mubr.bf16.mxu0 0
        %1689 = vmatmul.mubr.bf16.gmra.mrb[0].mxu0 %v906
        %v1690 = vpop.f32.mrb[0].mxu0
        %v1691 = vadd.f32 0.0, %v1690
        %v1692 = vpop.f32.mrb[0].mxu0
        %v1693 = vpop.f32.mrb[0].mxu0
        %v1694 = vadd.f32 0.0, %v1693
        %v1695 = vpop.f32.mrb[0].mxu0
        %1696 = vmatprep.mubr.bf16.mxu0 0
        %1697 = vmatmul.mubr.bf16.gmra.mrb[0].mxu0 %v909
        %v1698 = vpop.f32.mrb[0].mxu0
        %v1699 = vadd.f32 0.0, %v1698
        %v1700 = vpop.f32.mrb[0].mxu0
        %v1701 = vpop.f32.mrb[0].mxu0
        %v1702 = vadd.f32 0.0, %v1701
        %v1703 = vpop.f32.mrb[0].mxu0
        %1704 = vmatprep.mubr.bf16.mxu0 0
        %1705 = vmatmul.mubr.bf16.gmra.mrb[0].mxu0 %v912
        %v1706 = vpop.f32.mrb[0].mxu0
        %v1707 = vadd.f32 0.0, %v1706
        %v1708 = vpop.f32.mrb[0].mxu0
        %v1709 = vpop.f32.mrb[0].mxu0
        %v1710 = vadd.f32 0.0, %v1709
        %v1711 = vpop.f32.mrb[0].mxu0
        %1712 = vmatprep.mubr.bf16.mxu0 0
        %1713 = vmatmul.mubr.bf16.gmra.mrb[0].mxu0 %v1570
        %v1714 = vpop.f32.mrb[0].mxu0
        %v1715 = vadd.f32 0.0, %v1714
        %v1716 = vpop.f32.mrb[0].mxu0
        %v1717 = vpop.f32.mrb[0].mxu0
        %v1718 = vadd.f32 0.0, %v1717
        %v1719 = vpop.f32.mrb[0].mxu0
        %1720 = vmatprep.mubr.bf16.mxu0 0
        %1721 = vmatmul.mubr.bf16.gmra.mrb[0].mxu0 %v1573
        %v1722 = vpop.f32.mrb[0].mxu0
        %v1723 = vadd.f32 0.0, %v1722
        %v1724 = vpop.f32.mrb[0].mxu0
        %v1725 = vpop.f32.mrb[0].mxu0
        %v1726 = vadd.f32 0.0, %v1725
        %v1727 = vpop.f32.mrb[0].mxu0
        %1728 = vmatprep.mubr.bf16.mxu0 0
        %1729 = vmatmul.mubr.bf16.gmra.mrb[0].mxu0 %v1576
        %v1730 = vpop.f32.mrb[0].mxu0
        %v1731 = vadd.f32 0.0, %v1730
        %v1732 = vpop.f32.mrb[0].mxu0
        %v1733 = vpop.f32.mrb[0].mxu0
        %v1734 = vadd.f32 0.0, %v1733
        %v1735 = vpop.f32.mrb[0].mxu0
        %1736 = vmatprep.mubr.bf16.mxu0 0
        %1737 = vmatmul.mubr.bf16.gmra.mrb[0].mxu0 %v1579
        %v1738 = vpop.f32.mrb[0].mxu0
        %v1739 = vadd.f32 0.0, %v1738
        %v1740 = vpop.f32.mrb[0].mxu0
        %v1741 = vpop.f32.mrb[0].mxu0
        %v1742 = vadd.f32 0.0, %v1741
        %v1743 = vpop.f32.mrb[0].mxu0
        %1744 = vdwg.mxu0
        %v1745 = vadd.f32 %v1181, %v1619
        %v1746 = vadd.f32 %v1184, %v1622
        %v1747 = vadd.f32 %v1189, %v1627
        %v1748 = vadd.f32 %v1192, %v1630
        %v1749 = vadd.f32 %v1197, %v1635
        %v1750 = vadd.f32 %v1200, %v1638
        %v1751 = vadd.f32 %v1205, %v1643
        %v1752 = vadd.f32 %v1208, %v1646
        %v1753 = vadd.f32 %v1213, %v1651
        %v1754 = vadd.f32 %v1216, %v1654
        %v1755 = vadd.f32 %v1221, %v1659
        %v1756 = vadd.f32 %v1224, %v1662
        %v1757 = vadd.f32 %v1229, %v1667
        %v1758 = vadd.f32 %v1232, %v1670
        %v1759 = vadd.f32 %v1237, %v1675
        %v1760 = vadd.f32 %v1240, %v1678
        %v1761 = vadd.f32 %v1245, %v1683
        %v1762 = vadd.f32 %v1248, %v1686
        %v1763 = vadd.f32 %v1253, %v1691
        %v1764 = vadd.f32 %v1256, %v1694
        %v1765 = vadd.f32 %v1261, %v1699
        %v1766 = vadd.f32 %v1264, %v1702
        %v1767 = vadd.f32 %v1269, %v1707
        %v1768 = vadd.f32 %v1272, %v1710
        %v1769 = vadd.f32 %v1277, %v1715
        %v1770 = vadd.f32 %v1280, %v1718
        %v1771 = vadd.f32 %v1285, %v1723
        %v1772 = vadd.f32 %v1288, %v1726
        %v1773 = vadd.f32 %v1293, %v1731
        %v1774 = vadd.f32 %v1296, %v1734
        %v1775 = vadd.f32 %v1301, %v1739
        %v1776 = vadd.f32 %v1304, %v1742
        %s1777 = scalar_lea.vmem %s1, 6
        %v1778 = vld [vmem:[%s1777] sm:$0x3]
        %v1781 = vunpack.c.l.b16 %v515
        %v1782 = vunpack.c.l.b16 %v533
        %v1783 = vpack.c.b16 %v1097, %v1096
        %v1784 = vpack.c.b16 %v1099, %v1098
        %v1785 = vpack.c.b16 %v1101, %v1100
        %v1786 = vpack.c.b16 %v1781, %v1102
        %v1787 = vpack.c.b16 %v819, %v818
        %v1788 = vpack.c.b16 %v821, %v820
        %v1789 = vpack.c.b16 %v823, %v822
        %v1790 = vpack.c.b16 %v1782, %v824
        %v1792 = vsel %vm865, %v1783, 0
        %v1795 = vsel %vm865, %v1784, 0
        %v1798 = vsel %vm865, %v1785, 0
        %v1801 = vsel %vm865, %v1786, 0
        %v1804 = vsel %vm865, %v1787, 0
        %v1807 = vsel %vm865, %v1788, 0
        %v1810 = vsel %vm865, %v1789, 0
        %v1813 = vsel %vm865, %v1790, 0
        %v1816 = vsel %vm914, %v1778, 0
        %1818 = vmatprep.subr.bf16.mxu0 0
        %1819 = vmatpush1.bf16.msra.mxu0 %v1816
        %1820 = vmatprep.subr.bf16.mxu0 0
        %1821 = vmatpush1.bf16.msra.mxu0 0
        %1822 = vmatprep.subr.bf16.mxu0 0
        %1823 = vmatpush1.bf16.msra.mxu0 0
        %1824 = vmatprep.subr.bf16.mxu0 0
        %1825 = vmatpush1.bf16.msra.mxu0 0
        %1826 = vmatprep.subr.bf16.mxu0 0
        %1827 = vmatpush1.bf16.msra.mxu0 0
        %1828 = vmatprep.subr.bf16.mxu0 0
        %1829 = vmatpush1.bf16.msra.mxu0 0
        %1830 = vmatprep.subr.bf16.mxu0 0
        %1831 = vmatpush1.bf16.msra.mxu0 0
        %1832 = vmatprep.subr.bf16.mxu0 0
        %1833 = vmatpush1.bf16.msra.mxu0 0
        %1834 = vmatprep.subr.bf16.mxu0 0
        %1835 = vmatpush1.bf16.msra.mxu0 0
        %1836 = vmatprep.subr.bf16.mxu0 0
        %1837 = vmatpush1.bf16.msra.mxu0 0
        %1838 = vmatprep.subr.bf16.mxu0 0
        %1839 = vmatpush1.bf16.msra.mxu0 0
        %1840 = vmatprep.subr.bf16.mxu0 0
        %1841 = vmatpush1.bf16.msra.mxu0 0
        %1842 = vmatprep.subr.bf16.mxu0 0
        %1843 = vmatpush1.bf16.msra.mxu0 0
        %1844 = vmatprep.subr.bf16.mxu0 0
        %1845 = vmatpush1.bf16.msra.mxu0 0
        %1846 = vmatprep.subr.bf16.mxu0 0
        %1847 = vmatpush1.bf16.msra.mxu0 0
        %1848 = vmatprep.subr.bf16.mxu0 0
        %1849 = vmatpush1.bf16.msra.mxu0 0
        %1850 = vmatprep.mubr.bf16.mxu0 0
        %1851 = vmatmul.mubr.bf16.gmra.mrb[0].mxu0 %v1132
        %v1852 = vpop.f32.mrb[0].mxu0
        %v1853 = vadd.f32 0.0, %v1852
        %v1854 = vpop.f32.mrb[0].mxu0
        %v1855 = vpop.f32.mrb[0].mxu0
        %v1856 = vadd.f32 0.0, %v1855
        %v1857 = vpop.f32.mrb[0].mxu0
        %1858 = vmatprep.mubr.bf16.mxu0 0
        %1859 = vmatmul.mubr.bf16.gmra.mrb[0].mxu0 %v1135
        %v1860 = vpop.f32.mrb[0].mxu0
        %v1861 = vadd.f32 0.0, %v1860
        %v1862 = vpop.f32.mrb[0].mxu0
        %v1863 = vpop.f32.mrb[0].mxu0
        %v1864 = vadd.f32 0.0, %v1863
        %v1865 = vpop.f32.mrb[0].mxu0
        %1866 = vmatprep.mubr.bf16.mxu0 0
        %1867 = vmatmul.mubr.bf16.gmra.mrb[0].mxu0 %v1138
        %v1868 = vpop.f32.mrb[0].mxu0
        %v1869 = vadd.f32 0.0, %v1868
        %v1870 = vpop.f32.mrb[0].mxu0
        %v1871 = vpop.f32.mrb[0].mxu0
        %v1872 = vadd.f32 0.0, %v1871
        %v1873 = vpop.f32.mrb[0].mxu0
        %1874 = vmatprep.mubr.bf16.mxu0 0
        %1875 = vmatmul.mubr.bf16.gmra.mrb[0].mxu0 %v1141
        %v1876 = vpop.f32.mrb[0].mxu0
        %v1877 = vadd.f32 0.0, %v1876
        %v1878 = vpop.f32.mrb[0].mxu0
        %v1879 = vpop.f32.mrb[0].mxu0
        %v1880 = vadd.f32 0.0, %v1879
        %v1881 = vpop.f32.mrb[0].mxu0
        %1882 = vmatprep.mubr.bf16.mxu0 0
        %1883 = vmatmul.mubr.bf16.gmra.mrb[0].mxu0 %v891
        %v1884 = vpop.f32.mrb[0].mxu0
        %v1885 = vadd.f32 0.0, %v1884
        %v1886 = vpop.f32.mrb[0].mxu0
        %v1887 = vpop.f32.mrb[0].mxu0
        %v1888 = vadd.f32 0.0, %v1887
        %v1889 = vpop.f32.mrb[0].mxu0
        %1890 = vmatprep.mubr.bf16.mxu0 0
        %1891 = vmatmul.mubr.bf16.gmra.mrb[0].mxu0 %v894
        %v1892 = vpop.f32.mrb[0].mxu0
        %v1893 = vadd.f32 0.0, %v1892
        %v1894 = vpop.f32.mrb[0].mxu0
        %v1895 = vpop.f32.mrb[0].mxu0
        %v1896 = vadd.f32 0.0, %v1895
        %v1897 = vpop.f32.mrb[0].mxu0
        %1898 = vmatprep.mubr.bf16.mxu0 0
        %1899 = vmatmul.mubr.bf16.gmra.mrb[0].mxu0 %v897
        %v1900 = vpop.f32.mrb[0].mxu0
        %v1901 = vadd.f32 0.0, %v1900
        %v1902 = vpop.f32.mrb[0].mxu0
        %v1903 = vpop.f32.mrb[0].mxu0
        %v1904 = vadd.f32 0.0, %v1903
        %v1905 = vpop.f32.mrb[0].mxu0
        %1906 = vmatprep.mubr.bf16.mxu0 0
        %1907 = vmatmul.mubr.bf16.gmra.mrb[0].mxu0 %v900
        %v1908 = vpop.f32.mrb[0].mxu0
        %v1909 = vadd.f32 0.0, %v1908
        %v1910 = vpop.f32.mrb[0].mxu0
        %v1911 = vpop.f32.mrb[0].mxu0
        %v1912 = vadd.f32 0.0, %v1911
        %v1913 = vpop.f32.mrb[0].mxu0
        %1914 = vmatprep.mubr.bf16.mxu0 0
        %1915 = vmatmul.mubr.bf16.gmra.mrb[0].mxu0 %v1792
        %v1916 = vpop.f32.mrb[0].mxu0
        %v1917 = vadd.f32 0.0, %v1916
        %v1918 = vpop.f32.mrb[0].mxu0
        %v1919 = vpop.f32.mrb[0].mxu0
        %v1920 = vadd.f32 0.0, %v1919
        %v1921 = vpop.f32.mrb[0].mxu0
        %1922 = vmatprep.mubr.bf16.mxu0 0
        %1923 = vmatmul.mubr.bf16.gmra.mrb[0].mxu0 %v1795
        %v1924 = vpop.f32.mrb[0].mxu0
        %v1925 = vadd.f32 0.0, %v1924
        %v1926 = vpop.f32.mrb[0].mxu0
        %v1927 = vpop.f32.mrb[0].mxu0
        %v1928 = vadd.f32 0.0, %v1927
        %v1929 = vpop.f32.mrb[0].mxu0
        %1930 = vmatprep.mubr.bf16.mxu0 0
        %1931 = vmatmul.mubr.bf16.gmra.mrb[0].mxu0 %v1798
        %v1932 = vpop.f32.mrb[0].mxu0
        %v1933 = vadd.f32 0.0, %v1932
        %v1934 = vpop.f32.mrb[0].mxu0
        %v1935 = vpop.f32.mrb[0].mxu0
        %v1936 = vadd.f32 0.0, %v1935
        %v1937 = vpop.f32.mrb[0].mxu0
        %1938 = vmatprep.mubr.bf16.mxu0 0
        %1939 = vmatmul.mubr.bf16.gmra.mrb[0].mxu0 %v1801
        %v1940 = vpop.f32.mrb[0].mxu0
        %v1941 = vadd.f32 0.0, %v1940
        %v1942 = vpop.f32.mrb[0].mxu0
        %v1943 = vpop.f32.mrb[0].mxu0
        %v1944 = vadd.f32 0.0, %v1943
        %v1945 = vpop.f32.mrb[0].mxu0
        %1946 = vmatprep.mubr.bf16.mxu0 0
        %1947 = vmatmul.mubr.bf16.gmra.mrb[0].mxu0 %v1804
        %v1948 = vpop.f32.mrb[0].mxu0
        %v1949 = vadd.f32 0.0, %v1948
        %v1950 = vpop.f32.mrb[0].mxu0
        %v1951 = vpop.f32.mrb[0].mxu0
        %v1952 = vadd.f32 0.0, %v1951
        %v1953 = vpop.f32.mrb[0].mxu0
        %1954 = vmatprep.mubr.bf16.mxu0 0
        %1955 = vmatmul.mubr.bf16.gmra.mrb[0].mxu0 %v1807
        %v1956 = vpop.f32.mrb[0].mxu0
        %v1957 = vadd.f32 0.0, %v1956
        %v1958 = vpop.f32.mrb[0].mxu0
        %v1959 = vpop.f32.mrb[0].mxu0
        %v1960 = vadd.f32 0.0, %v1959
        %v1961 = vpop.f32.mrb[0].mxu0
        %1962 = vmatprep.mubr.bf16.mxu0 0
        %1963 = vmatmul.mubr.bf16.gmra.mrb[0].mxu0 %v1810
        %v1964 = vpop.f32.mrb[0].mxu0
        %v1965 = vadd.f32 0.0, %v1964
        %v1966 = vpop.f32.mrb[0].mxu0
        %v1967 = vpop.f32.mrb[0].mxu0
        %v1968 = vadd.f32 0.0, %v1967
        %v1969 = vpop.f32.mrb[0].mxu0
        %1970 = vmatprep.mubr.bf16.mxu0 0
        %1971 = vmatmul.mubr.bf16.gmra.mrb[0].mxu0 %v1813
        %v1972 = vpop.f32.mrb[0].mxu0
        %v1973 = vadd.f32 0.0, %v1972
        %v1974 = vpop.f32.mrb[0].mxu0
        %v1975 = vpop.f32.mrb[0].mxu0
        %v1976 = vadd.f32 0.0, %v1975
        %v1977 = vpop.f32.mrb[0].mxu0
        %1978 = vdwg.mxu0
        %v1979 = vadd.f32 %v1745, %v1853
        %v1980 = vadd.f32 %v1746, %v1856
        %v1981 = vadd.f32 %v1747, %v1861
        %v1982 = vadd.f32 %v1748, %v1864
        %v1983 = vadd.f32 %v1749, %v1869
        %v1984 = vadd.f32 %v1750, %v1872
        %v1985 = vadd.f32 %v1751, %v1877
        %v1986 = vadd.f32 %v1752, %v1880
        %v1987 = vadd.f32 %v1753, %v1885
        %v1988 = vadd.f32 %v1754, %v1888
        %v1989 = vadd.f32 %v1755, %v1893
        %v1990 = vadd.f32 %v1756, %v1896
        %v1991 = vadd.f32 %v1757, %v1901
        %v1992 = vadd.f32 %v1758, %v1904
        %v1993 = vadd.f32 %v1759, %v1909
        %v1994 = vadd.f32 %v1760, %v1912
        %v1995 = vadd.f32 %v1761, %v1917
        %v1996 = vadd.f32 %v1762, %v1920
        %v1997 = vadd.f32 %v1763, %v1925
        %v1998 = vadd.f32 %v1764, %v1928
        %v1999 = vadd.f32 %v1765, %v1933
        %v2000 = vadd.f32 %v1766, %v1936
        %v2001 = vadd.f32 %v1767, %v1941
        %v2002 = vadd.f32 %v1768, %v1944
        %v2003 = vadd.f32 %v1769, %v1949
        %v2004 = vadd.f32 %v1770, %v1952
        %v2005 = vadd.f32 %v1771, %v1957
        %v2006 = vadd.f32 %v1772, %v1960
        %v2007 = vadd.f32 %v1773, %v1965
        %v2008 = vadd.f32 %v1774, %v1968
        %v2009 = vadd.f32 %v1775, %v1973
        %v2010 = vadd.f32 %v1776, %v1976
        %v2012 = vshrl.u32 %v515, 16
        %v2014 = vrot.slane %v2012, 4
        %v2015 = vshll.u32 %v515, 16
        %v2017 = vrot.slane %v2015, 5
        %v2018 = vor.u32 %v2014, %v2017
        %v2019 = vrot.slane %v2018, 4
        %v2021 = vshll.u32 %v516, 16
        %v2023 = vrot.slane %v2021, 5
        %v2024 = vsel %vm574, %v2019, %v2023
        %s2025 = scalar_lea.vmem %s1, 8
        %v2026 = vld [vmem:[%s2025] sm:$0x3]
        %v2027 = vunpack.c.l.b16 %v2024
        %v2028 = vpack.c.b16 %v827, %v826
        %v2029 = vpack.c.b16 %v829, %v828
        %v2030 = vpack.c.b16 %v831, %v830
        %v2031 = vpack.c.b16 %v2027, %v832
        %v2033 = vsel %vm865, %v2028, 0
        %v2036 = vsel %vm865, %v2029, 0
        %v2039 = vsel %vm865, %v2030, 0
        %v2042 = vsel %vm865, %v2031, 0
        %v2045 = vsel %vm914, %v2026, 0
        %2047 = vmatprep.subr.bf16.mxu0 0
        %2048 = vmatpush1.bf16.msra.mxu0 %v2045
        %2049 = vmatprep.subr.bf16.mxu0 0
        %2050 = vmatpush1.bf16.msra.mxu0 0
        %2051 = vmatprep.subr.bf16.mxu0 0
        %2052 = vmatpush1.bf16.msra.mxu0 0
        %2053 = vmatprep.subr.bf16.mxu0 0
        %2054 = vmatpush1.bf16.msra.mxu0 0
        %2055 = vmatprep.subr.bf16.mxu0 0
        %2056 = vmatpush1.bf16.msra.mxu0 0
        %2057 = vmatprep.subr.bf16.mxu0 0
        %2058 = vmatpush1.bf16.msra.mxu0 0
        %2059 = vmatprep.subr.bf16.mxu0 0
        %2060 = vmatpush1.bf16.msra.mxu0 0
        %2061 = vmatprep.subr.bf16.mxu0 0
        %2062 = vmatpush1.bf16.msra.mxu0 0
        %2063 = vmatprep.subr.bf16.mxu0 0
        %2064 = vmatpush1.bf16.msra.mxu0 0
        %2065 = vmatprep.subr.bf16.mxu0 0
        %2066 = vmatpush1.bf16.msra.mxu0 0
        %2067 = vmatprep.subr.bf16.mxu0 0
        %2068 = vmatpush1.bf16.msra.mxu0 0
        %2069 = vmatprep.subr.bf16.mxu0 0
        %2070 = vmatpush1.bf16.msra.mxu0 0
        %2071 = vmatprep.subr.bf16.mxu0 0
        %2072 = vmatpush1.bf16.msra.mxu0 0
        %2073 = vmatprep.subr.bf16.mxu0 0
        %2074 = vmatpush1.bf16.msra.mxu0 0
        %2075 = vmatprep.subr.bf16.mxu0 0
        %2076 = vmatpush1.bf16.msra.mxu0 0
        %2077 = vmatprep.subr.bf16.mxu0 0
        %2078 = vmatpush1.bf16.msra.mxu0 0
        %2079 = vmatprep.mubr.bf16.mxu0 0
        %2080 = vmatmul.mubr.bf16.gmra.mrb[0].mxu0 %v891
        %v2081 = vpop.f32.mrb[0].mxu0
        %v2082 = vadd.f32 0.0, %v2081
        %v2083 = vpop.f32.mrb[0].mxu0
        %v2084 = vpop.f32.mrb[0].mxu0
        %v2085 = vadd.f32 0.0, %v2084
        %v2086 = vpop.f32.mrb[0].mxu0
        %2087 = vmatprep.mubr.bf16.mxu0 0
        %2088 = vmatmul.mubr.bf16.gmra.mrb[0].mxu0 %v894
        %v2089 = vpop.f32.mrb[0].mxu0
        %v2090 = vadd.f32 0.0, %v2089
        %v2091 = vpop.f32.mrb[0].mxu0
        %v2092 = vpop.f32.mrb[0].mxu0
        %v2093 = vadd.f32 0.0, %v2092
        %v2094 = vpop.f32.mrb[0].mxu0
        %2095 = vmatprep.mubr.bf16.mxu0 0
        %2096 = vmatmul.mubr.bf16.gmra.mrb[0].mxu0 %v897
        %v2097 = vpop.f32.mrb[0].mxu0
        %v2098 = vadd.f32 0.0, %v2097
        %v2099 = vpop.f32.mrb[0].mxu0
        %v2100 = vpop.f32.mrb[0].mxu0
        %v2101 = vadd.f32 0.0, %v2100
        %v2102 = vpop.f32.mrb[0].mxu0
        %2103 = vmatprep.mubr.bf16.mxu0 0
        %2104 = vmatmul.mubr.bf16.gmra.mrb[0].mxu0 %v900
        %v2105 = vpop.f32.mrb[0].mxu0
        %v2106 = vadd.f32 0.0, %v2105
        %v2107 = vpop.f32.mrb[0].mxu0
        %v2108 = vpop.f32.mrb[0].mxu0
        %v2109 = vadd.f32 0.0, %v2108
        %v2110 = vpop.f32.mrb[0].mxu0
        %2111 = vmatprep.mubr.bf16.mxu0 0
        %2112 = vmatmul.mubr.bf16.gmra.mrb[0].mxu0 %v903
        %v2113 = vpop.f32.mrb[0].mxu0
        %v2114 = vadd.f32 0.0, %v2113
        %v2115 = vpop.f32.mrb[0].mxu0
        %v2116 = vpop.f32.mrb[0].mxu0
        %v2117 = vadd.f32 0.0, %v2116
        %v2118 = vpop.f32.mrb[0].mxu0
        %2119 = vmatprep.mubr.bf16.mxu0 0
        %2120 = vmatmul.mubr.bf16.gmra.mrb[0].mxu0 %v906
        %v2121 = vpop.f32.mrb[0].mxu0
        %v2122 = vadd.f32 0.0, %v2121
        %v2123 = vpop.f32.mrb[0].mxu0
        %v2124 = vpop.f32.mrb[0].mxu0
        %v2125 = vadd.f32 0.0, %v2124
        %v2126 = vpop.f32.mrb[0].mxu0
        %2127 = vmatprep.mubr.bf16.mxu0 0
        %2128 = vmatmul.mubr.bf16.gmra.mrb[0].mxu0 %v909
        %v2129 = vpop.f32.mrb[0].mxu0
        %v2130 = vadd.f32 0.0, %v2129
        %v2131 = vpop.f32.mrb[0].mxu0
        %v2132 = vpop.f32.mrb[0].mxu0
        %v2133 = vadd.f32 0.0, %v2132
        %v2134 = vpop.f32.mrb[0].mxu0
        %2135 = vmatprep.mubr.bf16.mxu0 0
        %2136 = vmatmul.mubr.bf16.gmra.mrb[0].mxu0 %v912
        %v2137 = vpop.f32.mrb[0].mxu0
        %v2138 = vadd.f32 0.0, %v2137
        %v2139 = vpop.f32.mrb[0].mxu0
        %v2140 = vpop.f32.mrb[0].mxu0
        %v2141 = vadd.f32 0.0, %v2140
        %v2142 = vpop.f32.mrb[0].mxu0
        %2143 = vmatprep.mubr.bf16.mxu0 0
        %2144 = vmatmul.mubr.bf16.gmra.mrb[0].mxu0 %v1804
        %v2145 = vpop.f32.mrb[0].mxu0
        %v2146 = vadd.f32 0.0, %v2145
        %v2147 = vpop.f32.mrb[0].mxu0
        %v2148 = vpop.f32.mrb[0].mxu0
        %v2149 = vadd.f32 0.0, %v2148
        %v2150 = vpop.f32.mrb[0].mxu0
        %2151 = vmatprep.mubr.bf16.mxu0 0
        %2152 = vmatmul.mubr.bf16.gmra.mrb[0].mxu0 %v1807
        %v2153 = vpop.f32.mrb[0].mxu0
        %v2154 = vadd.f32 0.0, %v2153
        %v2155 = vpop.f32.mrb[0].mxu0
        %v2156 = vpop.f32.mrb[0].mxu0
        %v2157 = vadd.f32 0.0, %v2156
        %v2158 = vpop.f32.mrb[0].mxu0
        %2159 = vmatprep.mubr.bf16.mxu0 0
        %2160 = vmatmul.mubr.bf16.gmra.mrb[0].mxu0 %v1810
        %v2161 = vpop.f32.mrb[0].mxu0
        %v2162 = vadd.f32 0.0, %v2161
        %v2163 = vpop.f32.mrb[0].mxu0
        %v2164 = vpop.f32.mrb[0].mxu0
        %v2165 = vadd.f32 0.0, %v2164
        %v2166 = vpop.f32.mrb[0].mxu0
        %2167 = vmatprep.mubr.bf16.mxu0 0
        %2168 = vmatmul.mubr.bf16.gmra.mrb[0].mxu0 %v1813
        %v2169 = vpop.f32.mrb[0].mxu0
        %v2170 = vadd.f32 0.0, %v2169
        %v2171 = vpop.f32.mrb[0].mxu0
        %v2172 = vpop.f32.mrb[0].mxu0
        %v2173 = vadd.f32 0.0, %v2172
        %v2174 = vpop.f32.mrb[0].mxu0
        %2175 = vmatprep.mubr.bf16.mxu0 0
        %2176 = vmatmul.mubr.bf16.gmra.mrb[0].mxu0 %v2033
        %v2177 = vpop.f32.mrb[0].mxu0
        %v2178 = vadd.f32 0.0, %v2177
        %v2179 = vpop.f32.mrb[0].mxu0
        %v2180 = vpop.f32.mrb[0].mxu0
        %v2181 = vadd.f32 0.0, %v2180
        %v2182 = vpop.f32.mrb[0].mxu0
        %2183 = vmatprep.mubr.bf16.mxu0 0
        %2184 = vmatmul.mubr.bf16.gmra.mrb[0].mxu0 %v2036
        %v2185 = vpop.f32.mrb[0].mxu0
        %v2186 = vadd.f32 0.0, %v2185
        %v2187 = vpop.f32.mrb[0].mxu0
        %v2188 = vpop.f32.mrb[0].mxu0
        %v2189 = vadd.f32 0.0, %v2188
        %v2190 = vpop.f32.mrb[0].mxu0
        %2191 = vmatprep.mubr.bf16.mxu0 0
        %2192 = vmatmul.mubr.bf16.gmra.mrb[0].mxu0 %v2039
        %v2193 = vpop.f32.mrb[0].mxu0
        %v2194 = vadd.f32 0.0, %v2193
        %v2195 = vpop.f32.mrb[0].mxu0
        %v2196 = vpop.f32.mrb[0].mxu0
        %v2197 = vadd.f32 0.0, %v2196
        %v2198 = vpop.f32.mrb[0].mxu0
        %2199 = vmatprep.mubr.bf16.mxu0 0
        %2200 = vmatmul.mubr.bf16.gmra.mrb[0].mxu0 %v2042
        %v2201 = vpop.f32.mrb[0].mxu0
        %v2202 = vadd.f32 0.0, %v2201
        %v2203 = vpop.f32.mrb[0].mxu0
        %v2204 = vpop.f32.mrb[0].mxu0
        %v2205 = vadd.f32 0.0, %v2204
        %v2206 = vpop.f32.mrb[0].mxu0
        %2207 = vdwg.mxu0
        %v2208 = vadd.f32 %v1979, %v2082
        %v2209 = vadd.f32 %v1980, %v2085
        %v2210 = vadd.f32 %v1981, %v2090
        %v2211 = vadd.f32 %v1982, %v2093
        %v2212 = vadd.f32 %v1983, %v2098
        %v2213 = vadd.f32 %v1984, %v2101
        %v2214 = vadd.f32 %v1985, %v2106
        %v2215 = vadd.f32 %v1986, %v2109
        %v2216 = vadd.f32 %v1987, %v2114
        %v2217 = vadd.f32 %v1988, %v2117
        %v2218 = vadd.f32 %v1989, %v2122
        %v2219 = vadd.f32 %v1990, %v2125
        %v2220 = vadd.f32 %v1991, %v2130
        %v2221 = vadd.f32 %v1992, %v2133
        %v2222 = vadd.f32 %v1993, %v2138
        %v2223 = vadd.f32 %v1994, %v2141
        %v2224 = vadd.f32 %v1995, %v2146
        %v2225 = vadd.f32 %v1996, %v2149
        %v2226 = vadd.f32 %v1997, %v2154
        %v2227 = vadd.f32 %v1998, %v2157
        %v2228 = vadd.f32 %v1999, %v2162
        %v2229 = vadd.f32 %v2000, %v2165
        %v2230 = vadd.f32 %v2001, %v2170
        %v2231 = vadd.f32 %v2002, %v2173
        %v2232 = vadd.f32 %v2003, %v2178
        %v2233 = vadd.f32 %v2004, %v2181
        %v2234 = vadd.f32 %v2005, %v2186
        %v2235 = vadd.f32 %v2006, %v2189
        %v2236 = vadd.f32 %v2007, %v2194
        %v2237 = vadd.f32 %v2008, %v2197
        %v2238 = vadd.f32 %v2009, %v2202
        %v2239 = vadd.f32 %v2010, %v2205
        %v2241 = vshrl.u32 %v533, 16
        %v2243 = vrot.slane %v2241, 4
        %v2244 = vshll.u32 %v533, 16
        %v2246 = vrot.slane %v2244, 5
        %v2247 = vor.u32 %v2243, %v2246
        %v2248 = vrot.slane %v2247, 4
        %v2250 = vshll.u32 %v534, 16
        %v2252 = vrot.slane %v2250, 5
        %v2253 = vsel %vm574, %v2248, %v2252
        %s2254 = scalar_lea.vmem %s1, 10
        %v2255 = vld [vmem:[%s2254] sm:$0x3]
        %v2256 = vunpack.c.l.b16 %v2253
        %v2257 = vpack.c.b16 %v1535, %v1534
        %v2258 = vpack.c.b16 %v1537, %v1536
        %v2259 = vpack.c.b16 %v1539, %v1538
        %v2260 = vpack.c.b16 %v2256, %v1540
        %v2262 = vsel %vm865, %v2257, 0
        %v2265 = vsel %vm865, %v2258, 0
        %v2268 = vsel %vm865, %v2259, 0
        %v2271 = vsel %vm865, %v2260, 0
        %v2274 = vsel %vm914, %v2255, 0
        %2276 = vmatprep.subr.bf16.mxu0 0
        %2277 = vmatpush1.bf16.msra.mxu0 %v2274
        %2278 = vmatprep.subr.bf16.mxu0 0
        %2279 = vmatpush1.bf16.msra.mxu0 0
        %2280 = vmatprep.subr.bf16.mxu0 0
        %2281 = vmatpush1.bf16.msra.mxu0 0
        %2282 = vmatprep.subr.bf16.mxu0 0
        %2283 = vmatpush1.bf16.msra.mxu0 0
        %2284 = vmatprep.subr.bf16.mxu0 0
        %2285 = vmatpush1.bf16.msra.mxu0 0
        %2286 = vmatprep.subr.bf16.mxu0 0
        %2287 = vmatpush1.bf16.msra.mxu0 0
        %2288 = vmatprep.subr.bf16.mxu0 0
        %2289 = vmatpush1.bf16.msra.mxu0 0
        %2290 = vmatprep.subr.bf16.mxu0 0
        %2291 = vmatpush1.bf16.msra.mxu0 0
        %2292 = vmatprep.subr.bf16.mxu0 0
        %2293 = vmatpush1.bf16.msra.mxu0 0
        %2294 = vmatprep.subr.bf16.mxu0 0
        %2295 = vmatpush1.bf16.msra.mxu0 0
        %2296 = vmatprep.subr.bf16.mxu0 0
        %2297 = vmatpush1.bf16.msra.mxu0 0
        %2298 = vmatprep.subr.bf16.mxu0 0
        %2299 = vmatpush1.bf16.msra.mxu0 0
        %2300 = vmatprep.subr.bf16.mxu0 0
        %2301 = vmatpush1.bf16.msra.mxu0 0
        %2302 = vmatprep.subr.bf16.mxu0 0
        %2303 = vmatpush1.bf16.msra.mxu0 0
        %2304 = vmatprep.subr.bf16.mxu0 0
        %2305 = vmatpush1.bf16.msra.mxu0 0
        %2306 = vmatprep.subr.bf16.mxu0 0
        %2307 = vmatpush1.bf16.msra.mxu0 0
        %2308 = vmatprep.mubr.bf16.mxu0 0
        %2309 = vmatmul.mubr.bf16.gmra.mrb[0].mxu0 %v903
        %v2310 = vpop.f32.mrb[0].mxu0
        %v2311 = vadd.f32 0.0, %v2310
        %v2312 = vpop.f32.mrb[0].mxu0
        %v2313 = vpop.f32.mrb[0].mxu0
        %v2314 = vadd.f32 0.0, %v2313
        %v2315 = vpop.f32.mrb[0].mxu0
        %2316 = vmatprep.mubr.bf16.mxu0 0
        %2317 = vmatmul.mubr.bf16.gmra.mrb[0].mxu0 %v906
        %v2318 = vpop.f32.mrb[0].mxu0
        %v2319 = vadd.f32 0.0, %v2318
        %v2320 = vpop.f32.mrb[0].mxu0
        %v2321 = vpop.f32.mrb[0].mxu0
        %v2322 = vadd.f32 0.0, %v2321
        %v2323 = vpop.f32.mrb[0].mxu0
        %2324 = vmatprep.mubr.bf16.mxu0 0
        %2325 = vmatmul.mubr.bf16.gmra.mrb[0].mxu0 %v909
        %v2326 = vpop.f32.mrb[0].mxu0
        %v2327 = vadd.f32 0.0, %v2326
        %v2328 = vpop.f32.mrb[0].mxu0
        %v2329 = vpop.f32.mrb[0].mxu0
        %v2330 = vadd.f32 0.0, %v2329
        %v2331 = vpop.f32.mrb[0].mxu0
        %2332 = vmatprep.mubr.bf16.mxu0 0
        %2333 = vmatmul.mubr.bf16.gmra.mrb[0].mxu0 %v912
        %v2334 = vpop.f32.mrb[0].mxu0
        %v2335 = vadd.f32 0.0, %v2334
        %v2336 = vpop.f32.mrb[0].mxu0
        %v2337 = vpop.f32.mrb[0].mxu0
        %v2338 = vadd.f32 0.0, %v2337
        %v2339 = vpop.f32.mrb[0].mxu0
        %2340 = vmatprep.mubr.bf16.mxu0 0
        %2341 = vmatmul.mubr.bf16.gmra.mrb[0].mxu0 %v1570
        %v2342 = vpop.f32.mrb[0].mxu0
        %v2343 = vadd.f32 0.0, %v2342
        %v2344 = vpop.f32.mrb[0].mxu0
        %v2345 = vpop.f32.mrb[0].mxu0
        %v2346 = vadd.f32 0.0, %v2345
        %v2347 = vpop.f32.mrb[0].mxu0
        %2348 = vmatprep.mubr.bf16.mxu0 0
        %2349 = vmatmul.mubr.bf16.gmra.mrb[0].mxu0 %v1573
        %v2350 = vpop.f32.mrb[0].mxu0
        %v2351 = vadd.f32 0.0, %v2350
        %v2352 = vpop.f32.mrb[0].mxu0
        %v2353 = vpop.f32.mrb[0].mxu0
        %v2354 = vadd.f32 0.0, %v2353
        %v2355 = vpop.f32.mrb[0].mxu0
        %2356 = vmatprep.mubr.bf16.mxu0 0
        %2357 = vmatmul.mubr.bf16.gmra.mrb[0].mxu0 %v1576
        %v2358 = vpop.f32.mrb[0].mxu0
        %v2359 = vadd.f32 0.0, %v2358
        %v2360 = vpop.f32.mrb[0].mxu0
        %v2361 = vpop.f32.mrb[0].mxu0
        %v2362 = vadd.f32 0.0, %v2361
        %v2363 = vpop.f32.mrb[0].mxu0
        %2364 = vmatprep.mubr.bf16.mxu0 0
        %2365 = vmatmul.mubr.bf16.gmra.mrb[0].mxu0 %v1579
        %v2366 = vpop.f32.mrb[0].mxu0
        %v2367 = vadd.f32 0.0, %v2366
        %v2368 = vpop.f32.mrb[0].mxu0
        %v2369 = vpop.f32.mrb[0].mxu0
        %v2370 = vadd.f32 0.0, %v2369
        %v2371 = vpop.f32.mrb[0].mxu0
        %2372 = vmatprep.mubr.bf16.mxu0 0
        %2373 = vmatmul.mubr.bf16.gmra.mrb[0].mxu0 %v2033
        %v2374 = vpop.f32.mrb[0].mxu0
        %v2375 = vadd.f32 0.0, %v2374
        %v2376 = vpop.f32.mrb[0].mxu0
        %v2377 = vpop.f32.mrb[0].mxu0
        %v2378 = vadd.f32 0.0, %v2377
        %v2379 = vpop.f32.mrb[0].mxu0
        %2380 = vmatprep.mubr.bf16.mxu0 0
        %2381 = vmatmul.mubr.bf16.gmra.mrb[0].mxu0 %v2036
        %v2382 = vpop.f32.mrb[0].mxu0
        %v2383 = vadd.f32 0.0, %v2382
        %v2384 = vpop.f32.mrb[0].mxu0
        %v2385 = vpop.f32.mrb[0].mxu0
        %v2386 = vadd.f32 0.0, %v2385
        %v2387 = vpop.f32.mrb[0].mxu0
        %2388 = vmatprep.mubr.bf16.mxu0 0
        %2389 = vmatmul.mubr.bf16.gmra.mrb[0].mxu0 %v2039
        %v2390 = vpop.f32.mrb[0].mxu0
        %v2391 = vadd.f32 0.0, %v2390
        %v2392 = vpop.f32.mrb[0].mxu0
        %v2393 = vpop.f32.mrb[0].mxu0
        %v2394 = vadd.f32 0.0, %v2393
        %v2395 = vpop.f32.mrb[0].mxu0
        %2396 = vmatprep.mubr.bf16.mxu0 0
        %2397 = vmatmul.mubr.bf16.gmra.mrb[0].mxu0 %v2042
        %v2398 = vpop.f32.mrb[0].mxu0
        %v2399 = vadd.f32 0.0, %v2398
        %v2400 = vpop.f32.mrb[0].mxu0
        %v2401 = vpop.f32.mrb[0].mxu0
        %v2402 = vadd.f32 0.0, %v2401
        %v2403 = vpop.f32.mrb[0].mxu0
        %2404 = vmatprep.mubr.bf16.mxu0 0
        %2405 = vmatmul.mubr.bf16.gmra.mrb[0].mxu0 %v2262
        %v2406 = vpop.f32.mrb[0].mxu0
        %v2407 = vadd.f32 0.0, %v2406
        %v2408 = vpop.f32.mrb[0].mxu0
        %v2409 = vpop.f32.mrb[0].mxu0
        %v2410 = vadd.f32 0.0, %v2409
        %v2411 = vpop.f32.mrb[0].mxu0
        %2412 = vmatprep.mubr.bf16.mxu0 0
        %2413 = vmatmul.mubr.bf16.gmra.mrb[0].mxu0 %v2265
        %v2414 = vpop.f32.mrb[0].mxu0
        %v2415 = vadd.f32 0.0, %v2414
        %v2416 = vpop.f32.mrb[0].mxu0
        %v2417 = vpop.f32.mrb[0].mxu0
        %v2418 = vadd.f32 0.0, %v2417
        %v2419 = vpop.f32.mrb[0].mxu0
        %2420 = vmatprep.mubr.bf16.mxu0 0
        %2421 = vmatmul.mubr.bf16.gmra.mrb[0].mxu0 %v2268
        %v2422 = vpop.f32.mrb[0].mxu0
        %v2423 = vadd.f32 0.0, %v2422
        %v2424 = vpop.f32.mrb[0].mxu0
        %v2425 = vpop.f32.mrb[0].mxu0
        %v2426 = vadd.f32 0.0, %v2425
        %v2427 = vpop.f32.mrb[0].mxu0
        %2428 = vmatprep.mubr.bf16.mxu0 0
        %2429 = vmatmul.mubr.bf16.gmra.mrb[0].mxu0 %v2271
        %v2430 = vpop.f32.mrb[0].mxu0
        %v2431 = vadd.f32 0.0, %v2430
        %v2432 = vpop.f32.mrb[0].mxu0
        %v2433 = vpop.f32.mrb[0].mxu0
        %v2434 = vadd.f32 0.0, %v2433
        %v2435 = vpop.f32.mrb[0].mxu0
        %2436 = vdwg.mxu0
        %v2437 = vadd.f32 %v2208, %v2311
        %v2438 = vadd.f32 %v2209, %v2314
        %v2439 = vadd.f32 %v2210, %v2319
        %v2440 = vadd.f32 %v2211, %v2322
        %v2441 = vadd.f32 %v2212, %v2327
        %v2442 = vadd.f32 %v2213, %v2330
        %v2443 = vadd.f32 %v2214, %v2335
        %v2444 = vadd.f32 %v2215, %v2338
        %v2445 = vadd.f32 %v2216, %v2343
        %v2446 = vadd.f32 %v2217, %v2346
        %v2447 = vadd.f32 %v2218, %v2351
        %v2448 = vadd.f32 %v2219, %v2354
        %v2449 = vadd.f32 %v2220, %v2359
        %v2450 = vadd.f32 %v2221, %v2362
        %v2451 = vadd.f32 %v2222, %v2367
        %v2452 = vadd.f32 %v2223, %v2370
        %v2453 = vadd.f32 %v2224, %v2375
        %v2454 = vadd.f32 %v2225, %v2378
        %v2455 = vadd.f32 %v2226, %v2383
        %v2456 = vadd.f32 %v2227, %v2386
        %v2457 = vadd.f32 %v2228, %v2391
        %v2458 = vadd.f32 %v2229, %v2394
        %v2459 = vadd.f32 %v2230, %v2399
        %v2460 = vadd.f32 %v2231, %v2402
        %v2461 = vadd.f32 %v2232, %v2407
        %v2462 = vadd.f32 %v2233, %v2410
        %v2463 = vadd.f32 %v2234, %v2415
        %v2464 = vadd.f32 %v2235, %v2418
        %v2465 = vadd.f32 %v2236, %v2423
        %v2466 = vadd.f32 %v2237, %v2426
        %v2467 = vadd.f32 %v2238, %v2431
        %v2468 = vadd.f32 %v2239, %v2434
        %s2469 = scalar_lea.vmem %s1, 12
        %v2470 = vld [vmem:[%s2469] sm:$0x3]
        %v2473 = vunpack.c.l.b16 %v551
        %v2474 = vunpack.c.l.b16 %v569
        %v2475 = vpack.c.b16 %v1105, %v1104
        %v2476 = vpack.c.b16 %v1107, %v1106
        %v2477 = vpack.c.b16 %v1109, %v1108
        %v2478 = vpack.c.b16 %v2473, %v1110
        %v2479 = vpack.c.b16 %v835, %v834
        %v2480 = vpack.c.b16 %v837, %v836
        %v2481 = vpack.c.b16 %v839, %v838
        %v2482 = vpack.c.b16 %v2474, %v840
        %v2484 = vsel %vm865, %v2475, 0
        %v2487 = vsel %vm865, %v2476, 0
        %v2490 = vsel %vm865, %v2477, 0
        %v2493 = vsel %vm865, %v2478, 0
        %v2496 = vsel %vm865, %v2479, 0
        %v2499 = vsel %vm865, %v2480, 0
        %v2502 = vsel %vm865, %v2481, 0
        %v2505 = vsel %vm865, %v2482, 0
        %v2508 = vsel %vm914, %v2470, 0
        %2510 = vmatprep.subr.bf16.mxu0 0
        %2511 = vmatpush1.bf16.msra.mxu0 %v2508
        %2512 = vmatprep.subr.bf16.mxu0 0
        %2513 = vmatpush1.bf16.msra.mxu0 0
        %2514 = vmatprep.subr.bf16.mxu0 0
        %2515 = vmatpush1.bf16.msra.mxu0 0
        %2516 = vmatprep.subr.bf16.mxu0 0
        %2517 = vmatpush1.bf16.msra.mxu0 0
        %2518 = vmatprep.subr.bf16.mxu0 0
        %2519 = vmatpush1.bf16.msra.mxu0 0
        %2520 = vmatprep.subr.bf16.mxu0 0
        %2521 = vmatpush1.bf16.msra.mxu0 0
        %2522 = vmatprep.subr.bf16.mxu0 0
        %2523 = vmatpush1.bf16.msra.mxu0 0
        %2524 = vmatprep.subr.bf16.mxu0 0
        %2525 = vmatpush1.bf16.msra.mxu0 0
        %2526 = vmatprep.subr.bf16.mxu0 0
        %2527 = vmatpush1.bf16.msra.mxu0 0
        %2528 = vmatprep.subr.bf16.mxu0 0
        %2529 = vmatpush1.bf16.msra.mxu0 0
        %2530 = vmatprep.subr.bf16.mxu0 0
        %2531 = vmatpush1.bf16.msra.mxu0 0
        %2532 = vmatprep.subr.bf16.mxu0 0
        %2533 = vmatpush1.bf16.msra.mxu0 0
        %2534 = vmatprep.subr.bf16.mxu0 0
        %2535 = vmatpush1.bf16.msra.mxu0 0
        %2536 = vmatprep.subr.bf16.mxu0 0
        %2537 = vmatpush1.bf16.msra.mxu0 0
        %2538 = vmatprep.subr.bf16.mxu0 0
        %2539 = vmatpush1.bf16.msra.mxu0 0
        %2540 = vmatprep.subr.bf16.mxu0 0
        %2541 = vmatpush1.bf16.msra.mxu0 0
        %2542 = vmatprep.mubr.bf16.mxu0 0
        %2543 = vmatmul.mubr.bf16.gmra.mrb[0].mxu0 %v1792
        %v2544 = vpop.f32.mrb[0].mxu0
        %v2545 = vadd.f32 0.0, %v2544
        %v2546 = vpop.f32.mrb[0].mxu0
        %v2547 = vpop.f32.mrb[0].mxu0
        %v2548 = vadd.f32 0.0, %v2547
        %v2549 = vpop.f32.mrb[0].mxu0
        %2550 = vmatprep.mubr.bf16.mxu0 0
        %2551 = vmatmul.mubr.bf16.gmra.mrb[0].mxu0 %v1795
        %v2552 = vpop.f32.mrb[0].mxu0
        %v2553 = vadd.f32 0.0, %v2552
        %v2554 = vpop.f32.mrb[0].mxu0
        %v2555 = vpop.f32.mrb[0].mxu0
        %v2556 = vadd.f32 0.0, %v2555
        %v2557 = vpop.f32.mrb[0].mxu0
        %2558 = vmatprep.mubr.bf16.mxu0 0
        %2559 = vmatmul.mubr.bf16.gmra.mrb[0].mxu0 %v1798
        %v2560 = vpop.f32.mrb[0].mxu0
        %v2561 = vadd.f32 0.0, %v2560
        %v2562 = vpop.f32.mrb[0].mxu0
        %v2563 = vpop.f32.mrb[0].mxu0
        %v2564 = vadd.f32 0.0, %v2563
        %v2565 = vpop.f32.mrb[0].mxu0
        %2566 = vmatprep.mubr.bf16.mxu0 0
        %2567 = vmatmul.mubr.bf16.gmra.mrb[0].mxu0 %v1801
        %v2568 = vpop.f32.mrb[0].mxu0
        %v2569 = vadd.f32 0.0, %v2568
        %v2570 = vpop.f32.mrb[0].mxu0
        %v2571 = vpop.f32.mrb[0].mxu0
        %v2572 = vadd.f32 0.0, %v2571
        %v2573 = vpop.f32.mrb[0].mxu0
        %2574 = vmatprep.mubr.bf16.mxu0 0
        %2575 = vmatmul.mubr.bf16.gmra.mrb[0].mxu0 %v1804
        %v2576 = vpop.f32.mrb[0].mxu0
        %v2577 = vadd.f32 0.0, %v2576
        %v2578 = vpop.f32.mrb[0].mxu0
        %v2579 = vpop.f32.mrb[0].mxu0
        %v2580 = vadd.f32 0.0, %v2579
        %v2581 = vpop.f32.mrb[0].mxu0
        %2582 = vmatprep.mubr.bf16.mxu0 0
        %2583 = vmatmul.mubr.bf16.gmra.mrb[0].mxu0 %v1807
        %v2584 = vpop.f32.mrb[0].mxu0
        %v2585 = vadd.f32 0.0, %v2584
        %v2586 = vpop.f32.mrb[0].mxu0
        %v2587 = vpop.f32.mrb[0].mxu0
        %v2588 = vadd.f32 0.0, %v2587
        %v2589 = vpop.f32.mrb[0].mxu0
        %2590 = vmatprep.mubr.bf16.mxu0 0
        %2591 = vmatmul.mubr.bf16.gmra.mrb[0].mxu0 %v1810
        %v2592 = vpop.f32.mrb[0].mxu0
        %v2593 = vadd.f32 0.0, %v2592
        %v2594 = vpop.f32.mrb[0].mxu0
        %v2595 = vpop.f32.mrb[0].mxu0
        %v2596 = vadd.f32 0.0, %v2595
        %v2597 = vpop.f32.mrb[0].mxu0
        %2598 = vmatprep.mubr.bf16.mxu0 0
        %2599 = vmatmul.mubr.bf16.gmra.mrb[0].mxu0 %v1813
        %v2600 = vpop.f32.mrb[0].mxu0
        %v2601 = vadd.f32 0.0, %v2600
        %v2602 = vpop.f32.mrb[0].mxu0
        %v2603 = vpop.f32.mrb[0].mxu0
        %v2604 = vadd.f32 0.0, %v2603
        %v2605 = vpop.f32.mrb[0].mxu0
        %2606 = vmatprep.mubr.bf16.mxu0 0
        %2607 = vmatmul.mubr.bf16.gmra.mrb[0].mxu0 %v2484
        %v2608 = vpop.f32.mrb[0].mxu0
        %v2609 = vadd.f32 0.0, %v2608
        %v2610 = vpop.f32.mrb[0].mxu0
        %v2611 = vpop.f32.mrb[0].mxu0
        %v2612 = vadd.f32 0.0, %v2611
        %v2613 = vpop.f32.mrb[0].mxu0
        %2614 = vmatprep.mubr.bf16.mxu0 0
        %2615 = vmatmul.mubr.bf16.gmra.mrb[0].mxu0 %v2487
        %v2616 = vpop.f32.mrb[0].mxu0
        %v2617 = vadd.f32 0.0, %v2616
        %v2618 = vpop.f32.mrb[0].mxu0
        %v2619 = vpop.f32.mrb[0].mxu0
        %v2620 = vadd.f32 0.0, %v2619
        %v2621 = vpop.f32.mrb[0].mxu0
        %2622 = vmatprep.mubr.bf16.mxu0 0
        %2623 = vmatmul.mubr.bf16.gmra.mrb[0].mxu0 %v2490
        %v2624 = vpop.f32.mrb[0].mxu0
        %v2625 = vadd.f32 0.0, %v2624
        %v2626 = vpop.f32.mrb[0].mxu0
        %v2627 = vpop.f32.mrb[0].mxu0
        %v2628 = vadd.f32 0.0, %v2627
        %v2629 = vpop.f32.mrb[0].mxu0
        %2630 = vmatprep.mubr.bf16.mxu0 0
        %2631 = vmatmul.mubr.bf16.gmra.mrb[0].mxu0 %v2493
        %v2632 = vpop.f32.mrb[0].mxu0
        %v2633 = vadd.f32 0.0, %v2632
        %v2634 = vpop.f32.mrb[0].mxu0
        %v2635 = vpop.f32.mrb[0].mxu0
        %v2636 = vadd.f32 0.0, %v2635
        %v2637 = vpop.f32.mrb[0].mxu0
        %2638 = vmatprep.mubr.bf16.mxu0 0
        %2639 = vmatmul.mubr.bf16.gmra.mrb[0].mxu0 %v2496
        %v2640 = vpop.f32.mrb[0].mxu0
        %v2641 = vadd.f32 0.0, %v2640
        %v2642 = vpop.f32.mrb[0].mxu0
        %v2643 = vpop.f32.mrb[0].mxu0
        %v2644 = vadd.f32 0.0, %v2643
        %v2645 = vpop.f32.mrb[0].mxu0
        %2646 = vmatprep.mubr.bf16.mxu0 0
        %2647 = vmatmul.mubr.bf16.gmra.mrb[0].mxu0 %v2499
        %v2648 = vpop.f32.mrb[0].mxu0
        %v2649 = vadd.f32 0.0, %v2648
        %v2650 = vpop.f32.mrb[0].mxu0
        %v2651 = vpop.f32.mrb[0].mxu0
        %v2652 = vadd.f32 0.0, %v2651
        %v2653 = vpop.f32.mrb[0].mxu0
        %2654 = vmatprep.mubr.bf16.mxu0 0
        %2655 = vmatmul.mubr.bf16.gmra.mrb[0].mxu0 %v2502
        %v2656 = vpop.f32.mrb[0].mxu0
        %v2657 = vadd.f32 0.0, %v2656
        %v2658 = vpop.f32.mrb[0].mxu0
        %v2659 = vpop.f32.mrb[0].mxu0
        %v2660 = vadd.f32 0.0, %v2659
        %v2661 = vpop.f32.mrb[0].mxu0
        %2662 = vmatprep.mubr.bf16.mxu0 0
        %2663 = vmatmul.mubr.bf16.gmra.mrb[0].mxu0 %v2505
        %v2664 = vpop.f32.mrb[0].mxu0
        %v2665 = vadd.f32 0.0, %v2664
        %v2666 = vpop.f32.mrb[0].mxu0
        %v2667 = vpop.f32.mrb[0].mxu0
        %v2668 = vadd.f32 0.0, %v2667
        %v2669 = vpop.f32.mrb[0].mxu0
        %2670 = vdwg.mxu0
        %v2671 = vadd.f32 %v2437, %v2545
        %v2672 = vadd.f32 %v2438, %v2548
        %v2673 = vadd.f32 %v2439, %v2553
        %v2674 = vadd.f32 %v2440, %v2556
        %v2675 = vadd.f32 %v2441, %v2561
        %v2676 = vadd.f32 %v2442, %v2564
        %v2677 = vadd.f32 %v2443, %v2569
        %v2678 = vadd.f32 %v2444, %v2572
        %v2679 = vadd.f32 %v2445, %v2577
        %v2680 = vadd.f32 %v2446, %v2580
        %v2681 = vadd.f32 %v2447, %v2585
        %v2682 = vadd.f32 %v2448, %v2588
        %v2683 = vadd.f32 %v2449, %v2593
        %v2684 = vadd.f32 %v2450, %v2596
        %v2685 = vadd.f32 %v2451, %v2601
        %v2686 = vadd.f32 %v2452, %v2604
        %v2687 = vadd.f32 %v2453, %v2609
        %v2688 = vadd.f32 %v2454, %v2612
        %v2689 = vadd.f32 %v2455, %v2617
        %v2690 = vadd.f32 %v2456, %v2620
        %v2691 = vadd.f32 %v2457, %v2625
        %v2692 = vadd.f32 %v2458, %v2628
        %v2693 = vadd.f32 %v2459, %v2633
        %v2694 = vadd.f32 %v2460, %v2636
        %v2695 = vadd.f32 %v2461, %v2641
        %v2696 = vadd.f32 %v2462, %v2644
        %v2697 = vadd.f32 %v2463, %v2649
        %v2698 = vadd.f32 %v2464, %v2652
        %v2699 = vadd.f32 %v2465, %v2657
        %v2700 = vadd.f32 %v2466, %v2660
        %v2701 = vadd.f32 %v2467, %v2665
        %v2702 = vadd.f32 %v2468, %v2668
        %v2704 = vshrl.u32 %v551, 16
        %v2706 = vrot.slane %v2704, 4
        %v2707 = vshll.u32 %v551, 16
        %v2709 = vrot.slane %v2707, 5
        %v2710 = vor.u32 %v2706, %v2709
        %v2711 = vrot.slane %v2710, 4
        %v2713 = vshll.u32 %v552, 16
        %v2715 = vrot.slane %v2713, 5
        %v2716 = vsel %vm574, %v2711, %v2715
        %s2717 = scalar_lea.vmem %s1, 14
        %v2718 = vld [vmem:[%s2717] sm:$0x3]
        %v2719 = vunpack.c.l.b16 %v2716
        %v2720 = vpack.c.b16 %v843, %v842
        %v2721 = vpack.c.b16 %v845, %v844
        %v2722 = vpack.c.b16 %v847, %v846
        %v2723 = vpack.c.b16 %v2719, %v848
        %v2725 = vsel %vm865, %v2720, 0
        %v2728 = vsel %vm865, %v2721, 0
        %v2731 = vsel %vm865, %v2722, 0
        %v2734 = vsel %vm865, %v2723, 0
        %v2737 = vsel %vm914, %v2718, 0
        %2739 = vmatprep.subr.bf16.mxu0 0
        %2740 = vmatpush1.bf16.msra.mxu0 %v2737
        %2741 = vmatprep.subr.bf16.mxu0 0
        %2742 = vmatpush1.bf16.msra.mxu0 0
        %2743 = vmatprep.subr.bf16.mxu0 0
        %2744 = vmatpush1.bf16.msra.mxu0 0
        %2745 = vmatprep.subr.bf16.mxu0 0
        %2746 = vmatpush1.bf16.msra.mxu0 0
        %2747 = vmatprep.subr.bf16.mxu0 0
        %2748 = vmatpush1.bf16.msra.mxu0 0
        %2749 = vmatprep.subr.bf16.mxu0 0
        %2750 = vmatpush1.bf16.msra.mxu0 0
        %2751 = vmatprep.subr.bf16.mxu0 0
        %2752 = vmatpush1.bf16.msra.mxu0 0
        %2753 = vmatprep.subr.bf16.mxu0 0
        %2754 = vmatpush1.bf16.msra.mxu0 0
        %2755 = vmatprep.subr.bf16.mxu0 0
        %2756 = vmatpush1.bf16.msra.mxu0 0
        %2757 = vmatprep.subr.bf16.mxu0 0
        %2758 = vmatpush1.bf16.msra.mxu0 0
        %2759 = vmatprep.subr.bf16.mxu0 0
        %2760 = vmatpush1.bf16.msra.mxu0 0
        %2761 = vmatprep.subr.bf16.mxu0 0
        %2762 = vmatpush1.bf16.msra.mxu0 0
        %2763 = vmatprep.subr.bf16.mxu0 0
        %2764 = vmatpush1.bf16.msra.mxu0 0
        %2765 = vmatprep.subr.bf16.mxu0 0
        %2766 = vmatpush1.bf16.msra.mxu0 0
        %2767 = vmatprep.subr.bf16.mxu0 0
        %2768 = vmatpush1.bf16.msra.mxu0 0
        %2769 = vmatprep.subr.bf16.mxu0 0
        %2770 = vmatpush1.bf16.msra.mxu0 0
        %2771 = vmatprep.mubr.bf16.mxu0 0
        %2772 = vmatmul.mubr.bf16.gmra.mrb[0].mxu0 %v1804
        %v2773 = vpop.f32.mrb[0].mxu0
        %v2774 = vadd.f32 0.0, %v2773
        %v2775 = vpop.f32.mrb[0].mxu0
        %v2776 = vpop.f32.mrb[0].mxu0
        %v2777 = vadd.f32 0.0, %v2776
        %v2778 = vpop.f32.mrb[0].mxu0
        %2779 = vmatprep.mubr.bf16.mxu0 0
        %2780 = vmatmul.mubr.bf16.gmra.mrb[0].mxu0 %v1807
        %v2781 = vpop.f32.mrb[0].mxu0
        %v2782 = vadd.f32 0.0, %v2781
        %v2783 = vpop.f32.mrb[0].mxu0
        %v2784 = vpop.f32.mrb[0].mxu0
        %v2785 = vadd.f32 0.0, %v2784
        %v2786 = vpop.f32.mrb[0].mxu0
        %2787 = vmatprep.mubr.bf16.mxu0 0
        %2788 = vmatmul.mubr.bf16.gmra.mrb[0].mxu0 %v1810
        %v2789 = vpop.f32.mrb[0].mxu0
        %v2790 = vadd.f32 0.0, %v2789
        %v2791 = vpop.f32.mrb[0].mxu0
        %v2792 = vpop.f32.mrb[0].mxu0
        %v2793 = vadd.f32 0.0, %v2792
        %v2794 = vpop.f32.mrb[0].mxu0
        %2795 = vmatprep.mubr.bf16.mxu0 0
        %2796 = vmatmul.mubr.bf16.gmra.mrb[0].mxu0 %v1813
        %v2797 = vpop.f32.mrb[0].mxu0
        %v2798 = vadd.f32 0.0, %v2797
        %v2799 = vpop.f32.mrb[0].mxu0
        %v2800 = vpop.f32.mrb[0].mxu0
        %v2801 = vadd.f32 0.0, %v2800
        %v2802 = vpop.f32.mrb[0].mxu0
        %2803 = vmatprep.mubr.bf16.mxu0 0
        %2804 = vmatmul.mubr.bf16.gmra.mrb[0].mxu0 %v2033
        %v2805 = vpop.f32.mrb[0].mxu0
        %v2806 = vadd.f32 0.0, %v2805
        %v2807 = vpop.f32.mrb[0].mxu0
        %v2808 = vpop.f32.mrb[0].mxu0
        %v2809 = vadd.f32 0.0, %v2808
        %v2810 = vpop.f32.mrb[0].mxu0
        %2811 = vmatprep.mubr.bf16.mxu0 0
        %2812 = vmatmul.mubr.bf16.gmra.mrb[0].mxu0 %v2036
        %v2813 = vpop.f32.mrb[0].mxu0
        %v2814 = vadd.f32 0.0, %v2813
        %v2815 = vpop.f32.mrb[0].mxu0
        %v2816 = vpop.f32.mrb[0].mxu0
        %v2817 = vadd.f32 0.0, %v2816
        %v2818 = vpop.f32.mrb[0].mxu0
        %2819 = vmatprep.mubr.bf16.mxu0 0
        %2820 = vmatmul.mubr.bf16.gmra.mrb[0].mxu0 %v2039
        %v2821 = vpop.f32.mrb[0].mxu0
        %v2822 = vadd.f32 0.0, %v2821
        %v2823 = vpop.f32.mrb[0].mxu0
        %v2824 = vpop.f32.mrb[0].mxu0
        %v2825 = vadd.f32 0.0, %v2824
        %v2826 = vpop.f32.mrb[0].mxu0
        %2827 = vmatprep.mubr.bf16.mxu0 0
        %2828 = vmatmul.mubr.bf16.gmra.mrb[0].mxu0 %v2042
        %v2829 = vpop.f32.mrb[0].mxu0
        %v2830 = vadd.f32 0.0, %v2829
        %v2831 = vpop.f32.mrb[0].mxu0
        %v2832 = vpop.f32.mrb[0].mxu0
        %v2833 = vadd.f32 0.0, %v2832
        %v2834 = vpop.f32.mrb[0].mxu0
        %2835 = vmatprep.mubr.bf16.mxu0 0
        %2836 = vmatmul.mubr.bf16.gmra.mrb[0].mxu0 %v2496
        %v2837 = vpop.f32.mrb[0].mxu0
        %v2838 = vadd.f32 0.0, %v2837
        %v2839 = vpop.f32.mrb[0].mxu0
        %v2840 = vpop.f32.mrb[0].mxu0
        %v2841 = vadd.f32 0.0, %v2840
        %v2842 = vpop.f32.mrb[0].mxu0
        %2843 = vmatprep.mubr.bf16.mxu0 0
        %2844 = vmatmul.mubr.bf16.gmra.mrb[0].mxu0 %v2499
        %v2845 = vpop.f32.mrb[0].mxu0
        %v2846 = vadd.f32 0.0, %v2845
        %v2847 = vpop.f32.mrb[0].mxu0
        %v2848 = vpop.f32.mrb[0].mxu0
        %v2849 = vadd.f32 0.0, %v2848
        %v2850 = vpop.f32.mrb[0].mxu0
        %2851 = vmatprep.mubr.bf16.mxu0 0
        %2852 = vmatmul.mubr.bf16.gmra.mrb[0].mxu0 %v2502
        %v2853 = vpop.f32.mrb[0].mxu0
        %v2854 = vadd.f32 0.0, %v2853
        %v2855 = vpop.f32.mrb[0].mxu0
        %v2856 = vpop.f32.mrb[0].mxu0
        %v2857 = vadd.f32 0.0, %v2856
        %v2858 = vpop.f32.mrb[0].mxu0
        %2859 = vmatprep.mubr.bf16.mxu0 0
        %2860 = vmatmul.mubr.bf16.gmra.mrb[0].mxu0 %v2505
        %v2861 = vpop.f32.mrb[0].mxu0
        %v2862 = vadd.f32 0.0, %v2861
        %v2863 = vpop.f32.mrb[0].mxu0
        %v2864 = vpop.f32.mrb[0].mxu0
        %v2865 = vadd.f32 0.0, %v2864
        %v2866 = vpop.f32.mrb[0].mxu0
        %2867 = vmatprep.mubr.bf16.mxu0 0
        %2868 = vmatmul.mubr.bf16.gmra.mrb[0].mxu0 %v2725
        %v2869 = vpop.f32.mrb[0].mxu0
        %v2870 = vadd.f32 0.0, %v2869
        %v2871 = vpop.f32.mrb[0].mxu0
        %v2872 = vpop.f32.mrb[0].mxu0
        %v2873 = vadd.f32 0.0, %v2872
        %v2874 = vpop.f32.mrb[0].mxu0
        %2875 = vmatprep.mubr.bf16.mxu0 0
        %2876 = vmatmul.mubr.bf16.gmra.mrb[0].mxu0 %v2728
        %v2877 = vpop.f32.mrb[0].mxu0
        %v2878 = vadd.f32 0.0, %v2877
        %v2879 = vpop.f32.mrb[0].mxu0
        %v2880 = vpop.f32.mrb[0].mxu0
        %v2881 = vadd.f32 0.0, %v2880
        %v2882 = vpop.f32.mrb[0].mxu0
        %2883 = vmatprep.mubr.bf16.mxu0 0
        %2884 = vmatmul.mubr.bf16.gmra.mrb[0].mxu0 %v2731
        %v2885 = vpop.f32.mrb[0].mxu0
        %v2886 = vadd.f32 0.0, %v2885
        %v2887 = vpop.f32.mrb[0].mxu0
        %v2888 = vpop.f32.mrb[0].mxu0
        %v2889 = vadd.f32 0.0, %v2888
        %v2890 = vpop.f32.mrb[0].mxu0
        %2891 = vmatprep.mubr.bf16.mxu0 0
        %2892 = vmatmul.mubr.bf16.gmra.mrb[0].mxu0 %v2734
        %v2893 = vpop.f32.mrb[0].mxu0
        %v2894 = vadd.f32 0.0, %v2893
        %v2895 = vpop.f32.mrb[0].mxu0
        %v2896 = vpop.f32.mrb[0].mxu0
        %v2897 = vadd.f32 0.0, %v2896
        %v2898 = vpop.f32.mrb[0].mxu0
        %2899 = vdwg.mxu0
        %v2900 = vadd.f32 %v2671, %v2774
        %v2901 = vadd.f32 %v2672, %v2777
        %v2902 = vadd.f32 %v2673, %v2782
        %v2903 = vadd.f32 %v2674, %v2785
        %v2904 = vadd.f32 %v2675, %v2790
        %v2905 = vadd.f32 %v2676, %v2793
        %v2906 = vadd.f32 %v2677, %v2798
        %v2907 = vadd.f32 %v2678, %v2801
        %v2908 = vadd.f32 %v2679, %v2806
        %v2909 = vadd.f32 %v2680, %v2809
        %v2910 = vadd.f32 %v2681, %v2814
        %v2911 = vadd.f32 %v2682, %v2817
        %v2912 = vadd.f32 %v2683, %v2822
        %v2913 = vadd.f32 %v2684, %v2825
        %v2914 = vadd.f32 %v2685, %v2830
        %v2915 = vadd.f32 %v2686, %v2833
        %v2916 = vadd.f32 %v2687, %v2838
        %v2917 = vadd.f32 %v2688, %v2841
        %v2918 = vadd.f32 %v2689, %v2846
        %v2919 = vadd.f32 %v2690, %v2849
        %v2920 = vadd.f32 %v2691, %v2854
        %v2921 = vadd.f32 %v2692, %v2857
        %v2922 = vadd.f32 %v2693, %v2862
        %v2923 = vadd.f32 %v2694, %v2865
        %v2924 = vadd.f32 %v2695, %v2870
        %v2925 = vadd.f32 %v2696, %v2873
        %v2926 = vadd.f32 %v2697, %v2878
        %v2927 = vadd.f32 %v2698, %v2881
        %v2928 = vadd.f32 %v2699, %v2886
        %v2929 = vadd.f32 %v2700, %v2889
        %v2930 = vadd.f32 %v2701, %v2894
        %v2931 = vadd.f32 %v2702, %v2897
        %v2933 = vshrl.u32 %v569, 16
        %v2935 = vrot.slane %v2933, 4
        %v2936 = vshll.u32 %v569, 16
        %v2938 = vrot.slane %v2936, 5
        %v2939 = vor.u32 %v2935, %v2938
        %v2940 = vrot.slane %v2939, 4
        %v2942 = vshll.u32 %v570, 16
        %v2944 = vrot.slane %v2942, 5
        %v2945 = vsel %vm574, %v2940, %v2944
        %s2946 = scalar_lea.vmem %s1, 16
        %v2947 = vld [vmem:[%s2946] sm:$0x3]
        %v2948 = vunpack.c.l.b16 %v2945
        %v2949 = vpack.c.b16 %v1543, %v1542
        %v2950 = vpack.c.b16 %v1545, %v1544
        %v2951 = vpack.c.b16 %v1547, %v1546
        %v2952 = vpack.c.b16 %v2948, %v1548
        %v2954 = vsel %vm865, %v2949, 0
        %v2957 = vsel %vm865, %v2950, 0
        %v2960 = vsel %vm865, %v2951, 0
        %v2963 = vsel %vm865, %v2952, 0
        %v2966 = vsel %vm914, %v2947, 0
        %2968 = vmatprep.subr.bf16.mxu0 0
        %2969 = vmatpush1.bf16.msra.mxu0 %v2966
        %2970 = vmatprep.subr.bf16.mxu0 0
        %2971 = vmatpush1.bf16.msra.mxu0 0
        %2972 = vmatprep.subr.bf16.mxu0 0
        %2973 = vmatpush1.bf16.msra.mxu0 0
        %2974 = vmatprep.subr.bf16.mxu0 0
        %2975 = vmatpush1.bf16.msra.mxu0 0
        %2976 = vmatprep.subr.bf16.mxu0 0
        %2977 = vmatpush1.bf16.msra.mxu0 0
        %2978 = vmatprep.subr.bf16.mxu0 0
        %2979 = vmatpush1.bf16.msra.mxu0 0
        %2980 = vmatprep.subr.bf16.mxu0 0
        %2981 = vmatpush1.bf16.msra.mxu0 0
        %2982 = vmatprep.subr.bf16.mxu0 0
        %2983 = vmatpush1.bf16.msra.mxu0 0
        %2984 = vmatprep.subr.bf16.mxu0 0
        %2985 = vmatpush1.bf16.msra.mxu0 0
        %2986 = vmatprep.subr.bf16.mxu0 0
        %2987 = vmatpush1.bf16.msra.mxu0 0
        %2988 = vmatprep.subr.bf16.mxu0 0
        %2989 = vmatpush1.bf16.msra.mxu0 0
        %2990 = vmatprep.subr.bf16.mxu0 0
        %2991 = vmatpush1.bf16.msra.mxu0 0
        %2992 = vmatprep.subr.bf16.mxu0 0
        %2993 = vmatpush1.bf16.msra.mxu0 0
        %2994 = vmatprep.subr.bf16.mxu0 0
        %2995 = vmatpush1.bf16.msra.mxu0 0
        %2996 = vmatprep.subr.bf16.mxu0 0
        %2997 = vmatpush1.bf16.msra.mxu0 0
        %2998 = vmatprep.subr.bf16.mxu0 0
        %2999 = vmatpush1.bf16.msra.mxu0 0
        %3000 = vmatprep.mubr.bf16.mxu0 0
        %3001 = vmatmul.mubr.bf16.gmra.mrb[0].mxu0 %v2033
        %v3002 = vpop.f32.mrb[0].mxu0
        %v3003 = vadd.f32 0.0, %v3002
        %v3004 = vpop.f32.mrb[0].mxu0
        %v3005 = vpop.f32.mrb[0].mxu0
        %v3006 = vadd.f32 0.0, %v3005
        %v3007 = vpop.f32.mrb[0].mxu0
        %3008 = vmatprep.mubr.bf16.mxu0 0
        %3009 = vmatmul.mubr.bf16.gmra.mrb[0].mxu0 %v2036
        %v3010 = vpop.f32.mrb[0].mxu0
        %v3011 = vadd.f32 0.0, %v3010
        %v3012 = vpop.f32.mrb[0].mxu0
        %v3013 = vpop.f32.mrb[0].mxu0
        %v3014 = vadd.f32 0.0, %v3013
        %v3015 = vpop.f32.mrb[0].mxu0
        %3016 = vmatprep.mubr.bf16.mxu0 0
        %3017 = vmatmul.mubr.bf16.gmra.mrb[0].mxu0 %v2039
        %v3018 = vpop.f32.mrb[0].mxu0
        %v3019 = vadd.f32 0.0, %v3018
        %v3020 = vpop.f32.mrb[0].mxu0
        %v3021 = vpop.f32.mrb[0].mxu0
        %v3022 = vadd.f32 0.0, %v3021
        %v3023 = vpop.f32.mrb[0].mxu0
        %3024 = vmatprep.mubr.bf16.mxu0 0
        %3025 = vmatmul.mubr.bf16.gmra.mrb[0].mxu0 %v2042
        %v3026 = vpop.f32.mrb[0].mxu0
        %v3027 = vadd.f32 0.0, %v3026
        %v3028 = vpop.f32.mrb[0].mxu0
        %v3029 = vpop.f32.mrb[0].mxu0
        %v3030 = vadd.f32 0.0, %v3029
        %v3031 = vpop.f32.mrb[0].mxu0
        %3032 = vmatprep.mubr.bf16.mxu0 0
        %3033 = vmatmul.mubr.bf16.gmra.mrb[0].mxu0 %v2262
        %v3034 = vpop.f32.mrb[0].mxu0
        %v3035 = vadd.f32 0.0, %v3034
        %v3036 = vpop.f32.mrb[0].mxu0
        %v3037 = vpop.f32.mrb[0].mxu0
        %v3038 = vadd.f32 0.0, %v3037
        %v3039 = vpop.f32.mrb[0].mxu0
        %3040 = vmatprep.mubr.bf16.mxu0 0
        %3041 = vmatmul.mubr.bf16.gmra.mrb[0].mxu0 %v2265
        %v3042 = vpop.f32.mrb[0].mxu0
        %v3043 = vadd.f32 0.0, %v3042
        %v3044 = vpop.f32.mrb[0].mxu0
        %v3045 = vpop.f32.mrb[0].mxu0
        %v3046 = vadd.f32 0.0, %v3045
        %v3047 = vpop.f32.mrb[0].mxu0
        %3048 = vmatprep.mubr.bf16.mxu0 0
        %3049 = vmatmul.mubr.bf16.gmra.mrb[0].mxu0 %v2268
        %v3050 = vpop.f32.mrb[0].mxu0
        %v3051 = vadd.f32 0.0, %v3050
        %v3052 = vpop.f32.mrb[0].mxu0
        %v3053 = vpop.f32.mrb[0].mxu0
        %v3054 = vadd.f32 0.0, %v3053
        %v3055 = vpop.f32.mrb[0].mxu0
        %3056 = vmatprep.mubr.bf16.mxu0 0
        %3057 = vmatmul.mubr.bf16.gmra.mrb[0].mxu0 %v2271
        %v3058 = vpop.f32.mrb[0].mxu0
        %v3059 = vadd.f32 0.0, %v3058
        %v3060 = vpop.f32.mrb[0].mxu0
        %v3061 = vpop.f32.mrb[0].mxu0
        %v3062 = vadd.f32 0.0, %v3061
        %v3063 = vpop.f32.mrb[0].mxu0
        %3064 = vmatprep.mubr.bf16.mxu0 0
        %3065 = vmatmul.mubr.bf16.gmra.mrb[0].mxu0 %v2725
        %v3066 = vpop.f32.mrb[0].mxu0
        %v3067 = vadd.f32 0.0, %v3066
        %v3068 = vpop.f32.mrb[0].mxu0
        %v3069 = vpop.f32.mrb[0].mxu0
        %v3070 = vadd.f32 0.0, %v3069
        %v3071 = vpop.f32.mrb[0].mxu0
        %3072 = vmatprep.mubr.bf16.mxu0 0
        %3073 = vmatmul.mubr.bf16.gmra.mrb[0].mxu0 %v2728
        %v3074 = vpop.f32.mrb[0].mxu0
        %v3075 = vadd.f32 0.0, %v3074
        %v3076 = vpop.f32.mrb[0].mxu0
        %v3077 = vpop.f32.mrb[0].mxu0
        %v3078 = vadd.f32 0.0, %v3077
        %v3079 = vpop.f32.mrb[0].mxu0
        %3080 = vmatprep.mubr.bf16.mxu0 0
        %3081 = vmatmul.mubr.bf16.gmra.mrb[0].mxu0 %v2731
        %v3082 = vpop.f32.mrb[0].mxu0
        %v3083 = vadd.f32 0.0, %v3082
        %v3084 = vpop.f32.mrb[0].mxu0
        %v3085 = vpop.f32.mrb[0].mxu0
        %v3086 = vadd.f32 0.0, %v3085
        %v3087 = vpop.f32.mrb[0].mxu0
        %3088 = vmatprep.mubr.bf16.mxu0 0
        %3089 = vmatmul.mubr.bf16.gmra.mrb[0].mxu0 %v2734
        %v3090 = vpop.f32.mrb[0].mxu0
        %v3091 = vadd.f32 0.0, %v3090
        %v3092 = vpop.f32.mrb[0].mxu0
        %v3093 = vpop.f32.mrb[0].mxu0
        %v3094 = vadd.f32 0.0, %v3093
        %v3095 = vpop.f32.mrb[0].mxu0
        %3096 = vmatprep.mubr.bf16.mxu0 0
        %3097 = vmatmul.mubr.bf16.gmra.mrb[0].mxu0 %v2954
        %v3098 = vpop.f32.mrb[0].mxu0
        %v3099 = vadd.f32 0.0, %v3098
        %v3100 = vpop.f32.mrb[0].mxu0
        %v3101 = vpop.f32.mrb[0].mxu0
        %v3102 = vadd.f32 0.0, %v3101
        %v3103 = vpop.f32.mrb[0].mxu0
        %3104 = vmatprep.mubr.bf16.mxu0 0
        %3105 = vmatmul.mubr.bf16.gmra.mrb[0].mxu0 %v2957
        %v3106 = vpop.f32.mrb[0].mxu0
        %v3107 = vadd.f32 0.0, %v3106
        %v3108 = vpop.f32.mrb[0].mxu0
        %v3109 = vpop.f32.mrb[0].mxu0
        %v3110 = vadd.f32 0.0, %v3109
        %v3111 = vpop.f32.mrb[0].mxu0
        %3112 = vmatprep.mubr.bf16.mxu0 0
        %3113 = vmatmul.mubr.bf16.gmra.mrb[0].mxu0 %v2960
        %v3114 = vpop.f32.mrb[0].mxu0
        %v3115 = vadd.f32 0.0, %v3114
        %v3116 = vpop.f32.mrb[0].mxu0
        %v3117 = vpop.f32.mrb[0].mxu0
        %v3118 = vadd.f32 0.0, %v3117
        %v3119 = vpop.f32.mrb[0].mxu0
        %3120 = vmatprep.mubr.bf16.mxu0 0
        %3121 = vmatmul.mubr.bf16.gmra.mrb[0].mxu0 %v2963
        %v3122 = vpop.f32.mrb[0].mxu0
        %v3123 = vadd.f32 0.0, %v3122
        %v3124 = vpop.f32.mrb[0].mxu0
        %v3125 = vpop.f32.mrb[0].mxu0
        %v3126 = vadd.f32 0.0, %v3125
        %v3127 = vpop.f32.mrb[0].mxu0
        %3128 = vdwg.mxu0
        %v3129 = vadd.f32 %v2900, %v3003
        %v3130 = vadd.f32 %v2901, %v3006
        %v3131 = vadd.f32 %v2902, %v3011
        %v3132 = vadd.f32 %v2903, %v3014
        %v3133 = vadd.f32 %v2904, %v3019
        %v3134 = vadd.f32 %v2905, %v3022
        %v3135 = vadd.f32 %v2906, %v3027
        %v3136 = vadd.f32 %v2907, %v3030
        %v3137 = vadd.f32 %v2908, %v3035
        %v3138 = vadd.f32 %v2909, %v3038
        %v3139 = vadd.f32 %v2910, %v3043
        %v3140 = vadd.f32 %v2911, %v3046
        %v3141 = vadd.f32 %v2912, %v3051
        %v3142 = vadd.f32 %v2913, %v3054
        %v3143 = vadd.f32 %v2914, %v3059
        %v3144 = vadd.f32 %v2915, %v3062
        %v3145 = vadd.f32 %v2916, %v3067
        %v3146 = vadd.f32 %v2917, %v3070
        %v3147 = vadd.f32 %v2918, %v3075
        %v3148 = vadd.f32 %v2919, %v3078
        %v3149 = vadd.f32 %v2920, %v3083
        %v3150 = vadd.f32 %v2921, %v3086
        %v3151 = vadd.f32 %v2922, %v3091
        %v3152 = vadd.f32 %v2923, %v3094
        %v3153 = vadd.f32 %v2924, %v3099
        %v3154 = vadd.f32 %v2925, %v3102
        %v3155 = vadd.f32 %v2926, %v3107
        %v3156 = vadd.f32 %v2927, %v3110
        %v3157 = vadd.f32 %v2928, %v3115
        %v3158 = vadd.f32 %v2929, %v3118
        %v3159 = vadd.f32 %v2930, %v3123
        %v3160 = vadd.f32 %v2931, %v3126
        %v3161 = vld [vmem:[%s2] sm:$0x1]
        %v3163 = vlaneseq
        %v3164 = vshrl.u32 %v3163, 7
        %v3165 = vsub.s32 0, %v3164
        %v3166 = vrot.slane %v3161, %v3165
        %v3168 = vadd.f32 %v3129, %v3166
        %v3169 = vadd.f32 %v3130, %v3166
        %v3170 = vadd.f32 %v3131, %v3166
        %v3171 = vadd.f32 %v3132, %v3166
        %v3172 = vadd.f32 %v3133, %v3166
        %v3173 = vadd.f32 %v3134, %v3166
        %v3174 = vadd.f32 %v3135, %v3166
        %v3175 = vadd.f32 %v3136, %v3166
        %v3176 = vadd.f32 %v3137, %v3166
        %v3177 = vadd.f32 %v3138, %v3166
        %v3178 = vadd.f32 %v3139, %v3166
        %v3179 = vadd.f32 %v3140, %v3166
        %v3180 = vadd.f32 %v3141, %v3166
        %v3181 = vadd.f32 %v3142, %v3166
        %v3182 = vadd.f32 %v3143, %v3166
        %v3183 = vadd.f32 %v3144, %v3166
        %v3184 = vadd.f32 %v3145, %v3166
        %v3185 = vadd.f32 %v3146, %v3166
        %v3186 = vadd.f32 %v3147, %v3166
        %v3187 = vadd.f32 %v3148, %v3166
        %v3188 = vadd.f32 %v3149, %v3166
        %v3189 = vadd.f32 %v3150, %v3166
        %v3190 = vadd.f32 %v3151, %v3166
        %v3191 = vadd.f32 %v3152, %v3166
        %v3192 = vadd.f32 %v3153, %v3166
        %v3193 = vadd.f32 %v3154, %v3166
        %v3194 = vadd.f32 %v3155, %v3166
        %v3195 = vadd.f32 %v3156, %v3166
        %v3196 = vadd.f32 %v3157, %v3166
        %v3197 = vadd.f32 %v3158, %v3166
        %v3198 = vadd.f32 %v3159, %v3166
        %v3199 = vadd.f32 %v3160, %v3166
        %v3200 = vmax.f32 %v3168, 0.0
        %v3201 = vmax.f32 %v3169, 0.0
        %v3202 = vmax.f32 %v3170, 0.0
        %v3203 = vmax.f32 %v3171, 0.0
        %v3204 = vmax.f32 %v3172, 0.0
        %v3205 = vmax.f32 %v3173, 0.0
        %v3206 = vmax.f32 %v3174, 0.0
        %v3207 = vmax.f32 %v3175, 0.0
        %v3208 = vmax.f32 %v3176, 0.0
        %v3209 = vmax.f32 %v3177, 0.0
        %v3210 = vmax.f32 %v3178, 0.0
        %v3211 = vmax.f32 %v3179, 0.0
        %v3212 = vmax.f32 %v3180, 0.0
        %v3213 = vmax.f32 %v3181, 0.0
        %v3214 = vmax.f32 %v3182, 0.0
        %v3215 = vmax.f32 %v3183, 0.0
        %v3216 = vmax.f32 %v3184, 0.0
        %v3217 = vmax.f32 %v3185, 0.0
        %v3218 = vmax.f32 %v3186, 0.0
        %v3219 = vmax.f32 %v3187, 0.0
        %v3220 = vmax.f32 %v3188, 0.0
        %v3221 = vmax.f32 %v3189, 0.0
        %v3222 = vmax.f32 %v3190, 0.0
        %v3223 = vmax.f32 %v3191, 0.0
        %v3224 = vmax.f32 %v3192, 0.0
        %v3225 = vmax.f32 %v3193, 0.0
        %v3226 = vmax.f32 %v3194, 0.0
        %v3227 = vmax.f32 %v3195, 0.0
        %v3228 = vmax.f32 %v3196, 0.0
        %v3229 = vmax.f32 %v3197, 0.0
        %v3230 = vmax.f32 %v3198, 0.0
        %v3231 = vmax.f32 %v3199, 0.0
        %v3232 = vmax.f32 %v3200, %v3208
        %v3233 = vmax.f32 %v3201, %v3209
        %v3234 = vmax.f32 %v3202, %v3210
        %v3235 = vmax.f32 %v3203, %v3211
        %v3236 = vmax.f32 %v3204, %v3212
        %v3237 = vmax.f32 %v3205, %v3213
        %v3238 = vmax.f32 %v3206, %v3214
        %v3239 = vmax.f32 %v3207, %v3215
        %v3240 = vmax.f32 %v3216, %v3224
        %v3241 = vmax.f32 %v3217, %v3225
        %v3242 = vmax.f32 %v3218, %v3226
        %v3243 = vmax.f32 %v3219, %v3227
        %v3244 = vmax.f32 %v3220, %v3228
        %v3245 = vmax.f32 %v3221, %v3229
        %v3246 = vmax.f32 %v3222, %v3230
        %v3247 = vmax.f32 %v3223, %v3231
        %v3248 = vmax.f32 %v3232, %v3240
        %v3249 = vmax.f32 %v3233, %v3241
        %v3250 = vmax.f32 %v3234, %v3242
        %v3251 = vmax.f32 %v3235, %v3243
        %v3252 = vmax.f32 %v3236, %v3244
        %v3253 = vmax.f32 %v3237, %v3245
        %v3254 = vmax.f32 %v3238, %v3246
        %v3255 = vmax.f32 %v3239, %v3247
        %3256 = vst [vmem:[%s496] sm:$0xff] %v3248
        %3257 = vst [vmem:[%s496 + $0x8] sm:$0xff] %v3249
        %3258 = vst [vmem:[%s496 + $0x10] sm:$0xff] %v3250
        %3259 = vst [vmem:[%s496 + $0x18] sm:$0xff] %v3251
        %3260 = vst [vmem:[%s496 + $0x20] sm:$0xff] %v3252
        %3261 = vst [vmem:[%s496 + $0x28] sm:$0xff] %v3253
        %3262 = vst [vmem:[%s496 + $0x30] sm:$0xff] %v3254
        %3263 = vst [vmem:[%s496 + $0x38] sm:$0xff] %v3255
        %s3264 = smul.u32 8, %s14
        %p3265 = scmp.lt.s32.totalorder %s3264, 15
        %s3266 = scalar_select %p3265, %s3264, 15
        %s3267 = smul.addr %s3266, 8
        %s3268 = scalar_lea.vmem %s3, %s3267
        // Predicated region
        $region74: #{modality_encoder.1} parent=68 // pred_check
          %p3269 = pneg %p100
        $region75: #{modality_encoder.1} parent=68 // pred_check_branch
          %3271 = sbr.rel (%p3269) target = $region77
        $region76: #{modality_encoder.1} parent=68 // pred_region
          %s3272 = smul.u32 8, %s14
        $region77: #{modality_encoder.1} parent=68 // pred_fallthru
          _
      $region69: #{modality_encoder.1} parent=5 // pred_fallthru
        _
      %p3273 = scmp.le.s32.totalorder 2, %s9
      // Predicated region
      $region78: #{modality_encoder.1} parent=5 // pred_check
        %p3274 = pneg %p3273
      $region79: #{modality_encoder.1} parent=5 // pred_check_branch
        %3276 = sbr.rel (%p3274) target = $region81
      $region80: #{modality_encoder.1} parent=5 // pred_region
        %s3277 = ssub.s32 %s9, 2
        // Predicated region
        $region82: #{modality_encoder.1} parent=80 // pred_check
          %p3278 = pneg %p106
        $region83: #{modality_encoder.1} parent=80 // pred_check_branch
          %3280 = sbr.rel (%p3278) target = $region85
        $region84: #{modality_encoder.1} parent=80 // pred_region
          %s3281 = smul.u32 8, %s15
          %p3282 = scmp.lt.s32.totalorder %s3281, 15
          %s3283 = scalar_select %p3282, %s3281, 15
          %s3284 = smul.addr %s3283, 8
          %s3285 = scalar_lea.vmem %s3, %s3284
        $region85: #{modality_encoder.1} parent=80 // pred_fallthru
          _
      $region81: #{modality_encoder.1} parent=5 // pred_fallthru
        _
    $region6: #{modality_encoder.1} parent=1 // loop_footer
      %s13 = sadd.s32 1, %s9
    $region7: #{modality_encoder.1} parent=1 // loop_footer_branch
      %8 = sbr.rel target = $region3
    $region8: #{modality_encoder.1} parent=1 // loop_exit
      _

</llo_original>
